<compile_context>
chip_gen: v7x
topology: tpu7x:2x2x1
jax: 0.10.0
libtpu: 0.0.40
codegen_flags: <defaults>
</compile_context>

<pallas_src>
import functools
import math

import jax
import jax.numpy as jnp
from jax import lax
from jax.experimental import pallas as pl
from jax.experimental.pallas import tpu as pltpu


# ----------------------- weight repacking (init-time) -----------------------

def _pack_conv1(w_hwio, b):
    """3x3 / stride-2 / pad-1 conv  ->  2x2 / stride-1 block conv.

    Input blocks are 4x4 pixels (space-to-depth by 4, channel order (ph,pw,ci));
    output blocks are 2x2 pixels (space-to-depth by 2, channel order (qh,qw,co)).
    Returns w_blk: (4, 16*Cin, 4*Cout)  [tap t = 2*bdy + bdx], b_blk: (4*Cout,).
    """
    kh, kw, cin, cout = w_hwio.shape
    assert (kh, kw) == (3, 3)
    w_blk = jnp.zeros((2, 2, 4, 4, cin, 2, 2, cout), w_hwio.dtype)
    for ky in range(3):
        for kx in range(3):
            for qh in range(2):
                for qw in range(2):
                    # input row = 2*(2*Oh + qh) - 1 + ky = 4*(Oh - 1 + bdy) + ph
                    th, tw = 2 * qh + ky + 3, 2 * qw + kx + 3
                    bdy, ph = th // 4, th % 4
                    bdx, pw = tw // 4, tw % 4
                    w_blk = w_blk.at[bdy, bdx, ph, pw, :, qh, qw, :].set(
                        w_hwio[ky, kx])
    w_blk = w_blk.reshape(4, 16 * cin, 4 * cout)
    b_blk = jnp.tile(b, 4)
    return w_blk, b_blk


def _pack_conv2(w_hwio):
    """3x3 / stride-2 / pad-1 conv on a space-to-depth-by-2 input (channel order
    (qh,qw,ci))  ->  2x2 / stride-1 block conv.  Returns (4, 4*Cin, Cout)."""
    kh, kw, cin, cout = w_hwio.shape
    assert (kh, kw) == (3, 3)
    w_blk = jnp.zeros((2, 2, 2, 2, cin, cout), w_hwio.dtype)
    for ky in range(3):
        for kx in range(3):
            # input row = 2*o2h - 1 + ky = 2*(o2h - 1 + bdy) + qh
            qh, bdy = (ky + 1) % 2, (ky + 1) // 2
            qw, bdx = (kx + 1) % 2, (kx + 1) // 2
            w_blk = w_blk.at[bdy, bdx, qh, qw].set(w_hwio[ky, kx])
    return w_blk.reshape(4, 4 * cin, cout)


# ----------------------- layout plumbing (wrapper side) ---------------------

def _space_to_depth(x, b):
    n, h, w, c = x.shape
    x = x.reshape(n, h // b, b, w // b, b, c)
    x = x.transpose(0, 1, 3, 2, 4, 5)
    return x.reshape(n, h // b, w // b, b * b * c)


def _depth_to_space(x, b):
    n, hb, wb, cbb = x.shape
    c = cbb // (b * b)
    x = x.reshape(n, hb, wb, b, b, c)
    x = x.transpose(0, 1, 3, 2, 4, 5)
    return x.reshape(n, hb * b, wb * b, c)


# ------------------------------ Pallas kernel --------------------------------

def _make_p6p7_kernel(hb, wb, c_in_blk, c_out):
    m = hb * wb
    c_mid_blk = 4 * c_out

    def kernel(xb_ref, w6_ref, b6_ref, w7_ref, b7_ref,
               p6s_ref, p7_ref, xpad_ref, rpad_ref):
        f32 = jnp.float32

        # ---- conv1: p6 = conv3x3/s2(x), as a 2x2 block conv on s2d(x, 4) ----
        # zero-pad one block row on top and one block column on the left
        # (zeroing the whole small scratch each step is trivial and keeps the
        #  kernel correct even when the batch grid is split across cores).
        xpad_ref[...] = jnp.zeros(xpad_ref.shape, f32)
        xpad_ref[1:hb + 1, 1:wb + 1, :] = xb_ref[0]

        acc = jnp.zeros((m, c_mid_blk), f32)
        for t in range(4):
            bdy, bdx = divmod(t, 2)
            tap = xpad_ref[bdy:bdy + hb, bdx:bdx + wb, :]      # (hb, wb, 16*Cin)
            acc = acc + jnp.dot(tap.reshape(m, c_in_blk), w6_ref[t],
                                preferred_element_type=f32)
        acc = acc + b6_ref[...]
        p6s_ref[0] = acc.reshape(hb, wb, c_mid_blk)            # p6 (s2d-by-2)

        # ---- conv2: p7 = conv3x3/s2(relu(p6)); relu(p6) stays in VMEM -------
        rpad_ref[...] = jnp.zeros(rpad_ref.shape, f32)
        rpad_ref[1:hb + 1, 1:wb + 1, :] = jnp.maximum(acc, 0.0).reshape(
            hb, wb, c_mid_blk)

        acc2 = jnp.zeros((m, c_out), f32)
        for t in range(4):
            bdy, bdx = divmod(t, 2)
            tap = rpad_ref[bdy:bdy + hb, bdx:bdx + wb, :]      # (hb, wb, 4*Cout)
            acc2 = acc2 + jnp.dot(tap.reshape(m, c_mid_blk), w7_ref[t],
                                  preferred_element_type=f32)
        acc2 = acc2 + b7_ref[...]
        p7_ref[0] = acc2.reshape(hb, wb, c_out)

    return kernel


# --------------------------------- wrapper -----------------------------------

@functools.partial(jax.jit, static_argnames=("use_p5",))
def last_level_p6p7_forward(params, c5_nhwc, p5_nhwc, *, use_p5):
    x = p5_nhwc if use_p5 else c5_nhwc
    n, h, w, cin = x.shape
    # TODO(synk): generalize to H, W not divisible by 4 (pad in the wrapper).
    assert h % 4 == 0 and w % 4 == 0
    cout = params["w7s"].shape[-1]
    hb, wb = h // 4, w // 4
    c_in_blk = 16 * cin

    xb = _space_to_depth(x, 4)                        # (N, H/4, W/4, 16*Cin)

    p6s, p7 = pl.pallas_call(
        _make_p6p7_kernel(hb, wb, c_in_blk, cout),
        out_shape=(jax.ShapeDtypeStruct((n, hb, wb, 4 * cout), jnp.float32),
                   jax.ShapeDtypeStruct((n, hb, wb, cout), jnp.float32)),
        grid=(n,),
        in_specs=[
            pl.BlockSpec((1, hb, wb, c_in_blk), lambda i: (i, 0, 0, 0)),
            pl.BlockSpec((4, c_in_blk, 4 * cout), lambda i: (0, 0, 0)),
            pl.BlockSpec((1, 4 * cout), lambda i: (0, 0)),
            pl.BlockSpec((4, 4 * cout, cout), lambda i: (0, 0, 0)),
            pl.BlockSpec((1, cout), lambda i: (0, 0)),
        ],
        out_specs=(
            pl.BlockSpec((1, hb, wb, 4 * cout), lambda i: (i, 0, 0, 0)),
            pl.BlockSpec((1, hb, wb, cout), lambda i: (i, 0, 0, 0)),
        ),
        scratch_shapes=[
            pltpu.VMEM((hb + 1, wb + 1, c_in_blk), jnp.float32),   # padded input
            pltpu.VMEM((hb + 1, wb + 1, 4 * cout), jnp.float32),   # padded relu(p6)
        ],
        compiler_params=pltpu.CompilerParams(
            dimension_semantics=("parallel",)),
    )(xb, params["w6b"], params["b6b"].reshape(1, -1),
      params["w7s"], params["b7"].reshape(1, -1))

    p6 = _depth_to_space(p6s, 2)                      # (N, H/2, W/2, Cout) NHWC
    return [p6, p7]


# ------------------------------ initialization --------------------------------

def init_last_level_p6p7(key, in_channels, out_channels):
    k6, k7 = jax.random.split(key)

    def kaiming_uniform(k, shape, fan_in):
        # nn.init.kaiming_uniform_(w, a=1): bound = sqrt(6 / ((1 + 1) * fan_in))
        bound = math.sqrt(3.0 / fan_in)
        return jax.random.uniform(k, shape, jnp.float32, -bound, bound)

    w6 = kaiming_uniform(k6, (3, 3, in_channels, out_channels), 9 * in_channels)
    b6 = jnp.zeros((out_channels,), jnp.float32)      # nn.init.constant_(bias, 0)
    w7 = kaiming_uniform(k7, (3, 3, out_channels, out_channels), 9 * out_channels)
    b7 = jnp.zeros((out_channels,), jnp.float32)

    w6b, b6b = _pack_conv1(w6, b6)
    w7s = _pack_conv2(w7)
    return dict(w6=w6, b6=b6, w7=w7, b7=b7, w6b=w6b, b6b=b6b, w7s=w7s)


# ----------------------------------- main -------------------------------------

if __name__ == "__main__":
    key = jax.random.PRNGKey(0)
    batch, in_ch, out_ch, spatial = 2, 32, 64, 32
    use_p5 = (in_ch == out_ch)                        # matches self.use_P5

    k_par, k_c5, k_p5 = jax.random.split(key, 3)
    params = init_last_level_p6p7(k_par, in_ch, out_ch)

    # Example inputs in PyTorch's NCHW, transposed to the kernel's NHWC.
    c5_nchw = jax.random.normal(k_c5, (batch, in_ch, spatial, spatial), jnp.float32)
    p5_nchw = jax.random.normal(k_p5, (batch, out_ch, spatial, spatial), jnp.float32)
    c5 = jnp.transpose(c5_nchw, (0, 2, 3, 1))
    p5 = jnp.transpose(p5_nchw, (0, 2, 3, 1))

    p6, p7 = last_level_p6p7_forward(params, c5, p5, use_p5=use_p5)
    p6, p7 = jax.block_until_ready((p6, p7))

    assert p6.shape == (batch, spatial // 2, spatial // 2, out_ch)
    assert p7.shape == (batch, spatial // 4, spatial // 4, out_ch)

    # Reference check against XLA's conv (same NHWC layout, full precision).
    def conv_ref(xx, w_hwio, b, stride):
        y = lax.conv_general_dilated(
            xx, w_hwio, window_strides=(stride, stride),
            padding=((1, 1), (1, 1)),
            dimension_numbers=("NHWC", "HWIO", "NHWC"),
            precision=lax.Precision.HIGHEST)
        return y + b[None, None, None, :]

    x_ref = p5 if use_p5 else c5
    p6_ref = conv_ref(x_ref, params["w6"], params["b6"], 2)
    p7_ref = conv_ref(jax.nn.relu(p6_ref), params["w7"], params["b7"], 2)

    err6 = float(jnp.max(jnp.abs(p6 - p6_ref)))
    err7 = float(jnp.max(jnp.abs(p7 - p7_ref)))
    # generous bound: covers MXU f32 pass-precision differences, far below any
    # algorithmic error (wrong packing would be O(1) off).
    assert err6 < 2e-2 and err7 < 2e-2, (err6, err7)
    assert bool(jnp.all(jnp.isfinite(p6))) and bool(jnp.all(jnp.isfinite(p7)))
    print("KERNEL_OK")
</pallas_src>

<mosaic_0001>
module attributes {stable_mosaic.version = 11 : i64} {
  func.func @kernel(%arg0: i32, %arg1: memref<1x8x8x512xf32, #tpu.memory_space<vmem>>, %arg2: memref<4x512x256xf32, #tpu.memory_space<vmem>>, %arg3: memref<1x256xf32, #tpu.memory_space<vmem>>, %arg4: memref<4x256x64xf32, #tpu.memory_space<vmem>>, %arg5: memref<1x64xf32, #tpu.memory_space<vmem>>, %arg6: memref<1x8x8x256xf32, #tpu.memory_space<vmem>>, %arg7: memref<1x8x8x64xf32, #tpu.memory_space<vmem>>, %arg8: memref<9x9x512xf32, #tpu.memory_space<vmem>>, %arg9: memref<9x9x256xf32, #tpu.memory_space<vmem>>) attributes {dimension_semantics = [#tpu.dimension_semantics<parallel>], iteration_bounds = array<i64: 2>, scalar_prefetch = 0 : i64, scratch_operands = 2 : i64, tpu.core_type = #tpu.core_type<tc>, window_params = [{transform_indices = @transform_0, window_bounds = array<i64: 1, 8, 8, 512>}, {pipeline_mode = #tpu.pipeline_mode<synchronous>, transform_indices = @transform_1, window_bounds = array<i64: 4, 512, 256>}, {pipeline_mode = #tpu.pipeline_mode<synchronous>, transform_indices = @transform_2, window_bounds = array<i64: 1, 256>}, {pipeline_mode = #tpu.pipeline_mode<synchronous>, transform_indices = @transform_3, window_bounds = array<i64: 4, 256, 64>}, {pipeline_mode = #tpu.pipeline_mode<synchronous>, transform_indices = @transform_4, window_bounds = array<i64: 1, 64>}, {transform_indices = @transform_5, window_bounds = array<i64: 1, 8, 8, 256>}, {transform_indices = @transform_6, window_bounds = array<i64: 1, 8, 8, 64>}]} {
    %cst = arith.constant 0.000000e+00 : f32
    %0 = vector.broadcast %cst : f32 to vector<9x9x512xf32>
    %c0 = arith.constant 0 : index
    %c0_0 = arith.constant 0 : index
    %c0_1 = arith.constant 0 : index
    %1 = vector.load %arg8[%c0, %c0_0, %c0_1] : memref<9x9x512xf32, #tpu.memory_space<vmem>>, vector<9x9x512xf32>
    tpu.vector_store %arg8[%c0, %c0_0, %c0_1], %0 {strides = array<i32>} : memref<9x9x512xf32, #tpu.memory_space<vmem>>, vector<9x9x512xf32>,
    %c0_2 = arith.constant 0 : index
    %c0_3 = arith.constant 0 : index
    %c0_4 = arith.constant 0 : index
    %c0_5 = arith.constant 0 : index
    %2 = vector.load %arg1[%c0_2, %c0_3, %c0_4, %c0_5] : memref<1x8x8x512xf32, #tpu.memory_space<vmem>>, vector<1x8x8x512xf32>
    %3 = vector.shape_cast %2 : vector<1x8x8x512xf32> to vector<8x8x512xf32>
    %c1 = arith.constant 1 : index
    %c1_6 = arith.constant 1 : index
    %c0_7 = arith.constant 0 : index
    %4 = vector.load %arg8[%c1, %c1_6, %c0_7] : memref<9x9x512xf32, #tpu.memory_space<vmem>>, vector<8x8x512xf32>
    tpu.vector_store %arg8[%c1, %c1_6, %c0_7], %3 {strides = array<i32>} : memref<9x9x512xf32, #tpu.memory_space<vmem>>, vector<8x8x512xf32>,
    %cst_8 = arith.constant 0.000000e+00 : f32
    %5 = vector.broadcast %cst_8 : f32 to vector<64x256xf32>
    %c0_9 = arith.constant 0 : index
    %c0_10 = arith.constant 0 : index
    %c0_11 = arith.constant 0 : index
    %6 = vector.load %arg8[%c0_9, %c0_10, %c0_11] : memref<9x9x512xf32, #tpu.memory_space<vmem>>, vector<8x8x512xf32>
    %7 = vector.shape_cast %6 : vector<8x8x512xf32> to vector<64x512xf32>
    %c0_12 = arith.constant 0 : index
    %c0_13 = arith.constant 0 : index
    %c0_14 = arith.constant 0 : index
    %8 = vector.load %arg2[%c0_12, %c0_13, %c0_14] : memref<4x512x256xf32, #tpu.memory_space<vmem>>, vector<1x512x256xf32>
    %9 = vector.shape_cast %8 : vector<1x512x256xf32> to vector<512x256xf32>
    %cst_15 = arith.constant dense<0.000000e+00> : vector<64x256xf32>
    %10 = tpu.matmul %7, %9, %cst_15 {dimension_numbers = #tpu.dot_dimension_numbers<[1], [0], [0], [1], [0, 0, 1, 1], [], []>} : vector<64x512xf32>, vector<512x256xf32>, vector<64x256xf32> -> vector<64x256xf32>
    %11 = arith.addf %5, %10 : vector<64x256xf32>
    %c0_16 = arith.constant 0 : index
    %c1_17 = arith.constant 1 : index
    %c0_18 = arith.constant 0 : index
    %12 = vector.load %arg8[%c0_16, %c1_17, %c0_18] : memref<9x9x512xf32, #tpu.memory_space<vmem>>, vector<8x8x512xf32>
    %13 = vector.shape_cast %12 : vector<8x8x512xf32> to vector<64x512xf32>
    %c1_19 = arith.constant 1 : index
    %c0_20 = arith.constant 0 : index
    %c0_21 = arith.constant 0 : index
    %14 = vector.load %arg2[%c1_19, %c0_20, %c0_21] : memref<4x512x256xf32, #tpu.memory_space<vmem>>, vector<1x512x256xf32>
    %15 = vector.shape_cast %14 : vector<1x512x256xf32> to vector<512x256xf32>
    %cst_22 = arith.constant dense<0.000000e+00> : vector<64x256xf32>
    %16 = tpu.matmul %13, %15, %cst_22 {dimension_numbers = #tpu.dot_dimension_numbers<[1], [0], [0], [1], [0, 0, 1, 1], [], []>} : vector<64x512xf32>, vector<512x256xf32>, vector<64x256xf32> -> vector<64x256xf32>
    %17 = arith.addf %11, %16 : vector<64x256xf32>
    %c1_23 = arith.constant 1 : index
    %c0_24 = arith.constant 0 : index
    %c0_25 = arith.constant 0 : index
    %18 = vector.load %arg8[%c1_23, %c0_24, %c0_25] : memref<9x9x512xf32, #tpu.memory_space<vmem>>, vector<8x8x512xf32>
    %19 = vector.shape_cast %18 : vector<8x8x512xf32> to vector<64x512xf32>
    %c2 = arith.constant 2 : index
    %c0_26 = arith.constant 0 : index
    %c0_27 = arith.constant 0 : index
    %20 = vector.load %arg2[%c2, %c0_26, %c0_27] : memref<4x512x256xf32, #tpu.memory_space<vmem>>, vector<1x512x256xf32>
    %21 = vector.shape_cast %20 : vector<1x512x256xf32> to vector<512x256xf32>
    %cst_28 = arith.constant dense<0.000000e+00> : vector<64x256xf32>
    %22 = tpu.matmul %19, %21, %cst_28 {dimension_numbers = #tpu.dot_dimension_numbers<[1], [0], [0], [1], [0, 0, 1, 1], [], []>} : vector<64x512xf32>, vector<512x256xf32>, vector<64x256xf32> -> vector<64x256xf32>
    %23 = arith.addf %17, %22 : vector<64x256xf32>
    %c1_29 = arith.constant 1 : index
    %c1_30 = arith.constant 1 : index
    %c0_31 = arith.constant 0 : index
    %24 = vector.load %arg8[%c1_29, %c1_30, %c0_31] : memref<9x9x512xf32, #tpu.memory_space<vmem>>, vector<8x8x512xf32>
    %25 = vector.shape_cast %24 : vector<8x8x512xf32> to vector<64x512xf32>
    %c3 = arith.constant 3 : index
    %c0_32 = arith.constant 0 : index
    %c0_33 = arith.constant 0 : index
    %26 = vector.load %arg2[%c3, %c0_32, %c0_33] : memref<4x512x256xf32, #tpu.memory_space<vmem>>, vector<1x512x256xf32>
    %27 = vector.shape_cast %26 : vector<1x512x256xf32> to vector<512x256xf32>
    %cst_34 = arith.constant dense<0.000000e+00> : vector<64x256xf32>
    %28 = tpu.matmul %25, %27, %cst_34 {dimension_numbers = #tpu.dot_dimension_numbers<[1], [0], [0], [1], [0, 0, 1, 1], [], []>} : vector<64x512xf32>, vector<512x256xf32>, vector<64x256xf32> -> vector<64x256xf32>
    %29 = arith.addf %23, %28 : vector<64x256xf32>
    %c0_35 = arith.constant 0 : index
    %c0_36 = arith.constant 0 : index
    %30 = vector.load %arg3[%c0_35, %c0_36] : memref<1x256xf32, #tpu.memory_space<vmem>>, vector<1x256xf32>
    %31 = vector.broadcast %30 : vector<1x256xf32> to vector<64x256xf32>
    %32 = arith.addf %29, %31 : vector<64x256xf32>
    %33 = vector.shape_cast %32 : vector<64x256xf32> to vector<8x8x256xf32>
    %c0_37 = arith.constant 0 : index
    %c0_38 = arith.constant 0 : index
    %c0_39 = arith.constant 0 : index
    %c0_40 = arith.constant 0 : index
    %34 = vector.load %arg6[%c0_37, %c0_38, %c0_39, %c0_40] : memref<1x8x8x256xf32, #tpu.memory_space<vmem>>, vector<1x8x8x256xf32>
    %35 = vector.shape_cast %34 : vector<1x8x8x256xf32> to vector<8x8x256xf32>
    %36 = vector.shape_cast %33 : vector<8x8x256xf32> to vector<1x8x8x256xf32>
    tpu.vector_store %arg6[%c0_37, %c0_38, %c0_39, %c0_40], %36 {strides = array<i32>} : memref<1x8x8x256xf32, #tpu.memory_space<vmem>>, vector<1x8x8x256xf32>,
    %cst_41 = arith.constant 0.000000e+00 : f32
    %37 = vector.broadcast %cst_41 : f32 to vector<9x9x256xf32>
    %c0_42 = arith.constant 0 : index
    %c0_43 = arith.constant 0 : index
    %c0_44 = arith.constant 0 : index
    %38 = vector.load %arg9[%c0_42, %c0_43, %c0_44] : memref<9x9x256xf32, #tpu.memory_space<vmem>>, vector<9x9x256xf32>
    tpu.vector_store %arg9[%c0_42, %c0_43, %c0_44], %37 {strides = array<i32>} : memref<9x9x256xf32, #tpu.memory_space<vmem>>, vector<9x9x256xf32>,
    %cst_45 = arith.constant 0.000000e+00 : f32
    %39 = vector.broadcast %cst_45 : f32 to vector<64x256xf32>
    %40 = arith.maximumf %32, %39 : vector<64x256xf32>
    %41 = vector.shape_cast %40 : vector<64x256xf32> to vector<8x8x256xf32>
    %c1_46 = arith.constant 1 : index
    %c1_47 = arith.constant 1 : index
    %c0_48 = arith.constant 0 : index
    %42 = vector.load %arg9[%c1_46, %c1_47, %c0_48] : memref<9x9x256xf32, #tpu.memory_space<vmem>>, vector<8x8x256xf32>
    tpu.vector_store %arg9[%c1_46, %c1_47, %c0_48], %41 {strides = array<i32>} : memref<9x9x256xf32, #tpu.memory_space<vmem>>, vector<8x8x256xf32>,
    %cst_49 = arith.constant 0.000000e+00 : f32
    %43 = vector.broadcast %cst_49 : f32 to vector<64x64xf32>
    %c0_50 = arith.constant 0 : index
    %c0_51 = arith.constant 0 : index
    %c0_52 = arith.constant 0 : index
    %44 = vector.load %arg9[%c0_50, %c0_51, %c0_52] : memref<9x9x256xf32, #tpu.memory_space<vmem>>, vector<8x8x256xf32>
    %45 = vector.shape_cast %44 : vector<8x8x256xf32> to vector<64x256xf32>
    %c0_53 = arith.constant 0 : index
    %c0_54 = arith.constant 0 : index
    %c0_55 = arith.constant 0 : index
    %46 = vector.load %arg4[%c0_53, %c0_54, %c0_55] : memref<4x256x64xf32, #tpu.memory_space<vmem>>, vector<1x256x64xf32>
    %47 = vector.shape_cast %46 : vector<1x256x64xf32> to vector<256x64xf32>
    %cst_56 = arith.constant dense<0.000000e+00> : vector<64x64xf32>
    %48 = tpu.matmul %45, %47, %cst_56 {dimension_numbers = #tpu.dot_dimension_numbers<[1], [0], [0], [1], [0, 0, 1, 1], [], []>} : vector<64x256xf32>, vector<256x64xf32>, vector<64x64xf32> -> vector<64x64xf32>
    %49 = arith.addf %43, %48 : vector<64x64xf32>
    %c0_57 = arith.constant 0 : index
    %c1_58 = arith.constant 1 : index
    %c0_59 = arith.constant 0 : index
    %50 = vector.load %arg9[%c0_57, %c1_58, %c0_59] : memref<9x9x256xf32, #tpu.memory_space<vmem>>, vector<8x8x256xf32>
    %51 = vector.shape_cast %50 : vector<8x8x256xf32> to vector<64x256xf32>
    %c1_60 = arith.constant 1 : index
    %c0_61 = arith.constant 0 : index
    %c0_62 = arith.constant 0 : index
    %52 = vector.load %arg4[%c1_60, %c0_61, %c0_62] : memref<4x256x64xf32, #tpu.memory_space<vmem>>, vector<1x256x64xf32>
    %53 = vector.shape_cast %52 : vector<1x256x64xf32> to vector<256x64xf32>
    %cst_63 = arith.constant dense<0.000000e+00> : vector<64x64xf32>
    %54 = tpu.matmul %51, %53, %cst_63 {dimension_numbers = #tpu.dot_dimension_numbers<[1], [0], [0], [1], [0, 0, 1, 1], [], []>} : vector<64x256xf32>, vector<256x64xf32>, vector<64x64xf32> -> vector<64x64xf32>
    %55 = arith.addf %49, %54 : vector<64x64xf32>
    %c1_64 = arith.constant 1 : index
    %c0_65 = arith.constant 0 : index
    %c0_66 = arith.constant 0 : index
    %56 = vector.load %arg9[%c1_64, %c0_65, %c0_66] : memref<9x9x256xf32, #tpu.memory_space<vmem>>, vector<8x8x256xf32>
    %57 = vector.shape_cast %56 : vector<8x8x256xf32> to vector<64x256xf32>
    %c2_67 = arith.constant 2 : index
    %c0_68 = arith.constant 0 : index
    %c0_69 = arith.constant 0 : index
    %58 = vector.load %arg4[%c2_67, %c0_68, %c0_69] : memref<4x256x64xf32, #tpu.memory_space<vmem>>, vector<1x256x64xf32>
    %59 = vector.shape_cast %58 : vector<1x256x64xf32> to vector<256x64xf32>
    %cst_70 = arith.constant dense<0.000000e+00> : vector<64x64xf32>
    %60 = tpu.matmul %57, %59, %cst_70 {dimension_numbers = #tpu.dot_dimension_numbers<[1], [0], [0], [1], [0, 0, 1, 1], [], []>} : vector<64x256xf32>, vector<256x64xf32>, vector<64x64xf32> -> vector<64x64xf32>
    %61 = arith.addf %55, %60 : vector<64x64xf32>
    %c1_71 = arith.constant 1 : index
    %c1_72 = arith.constant 1 : index
    %c0_73 = arith.constant 0 : index
    %62 = vector.load %arg9[%c1_71, %c1_72, %c0_73] : memref<9x9x256xf32, #tpu.memory_space<vmem>>, vector<8x8x256xf32>
    %63 = vector.shape_cast %62 : vector<8x8x256xf32> to vector<64x256xf32>
    %c3_74 = arith.constant 3 : index
    %c0_75 = arith.constant 0 : index
    %c0_76 = arith.constant 0 : index
    %64 = vector.load %arg4[%c3_74, %c0_75, %c0_76] : memref<4x256x64xf32, #tpu.memory_space<vmem>>, vector<1x256x64xf32>
    %65 = vector.shape_cast %64 : vector<1x256x64xf32> to vector<256x64xf32>
    %cst_77 = arith.constant dense<0.000000e+00> : vector<64x64xf32>
    %66 = tpu.matmul %63, %65, %cst_77 {dimension_numbers = #tpu.dot_dimension_numbers<[1], [0], [0], [1], [0, 0, 1, 1], [], []>} : vector<64x256xf32>, vector<256x64xf32>, vector<64x64xf32> -> vector<64x64xf32>
    %67 = arith.addf %61, %66 : vector<64x64xf32>
    %c0_78 = arith.constant 0 : index
    %c0_79 = arith.constant 0 : index
    %68 = vector.load %arg5[%c0_78, %c0_79] : memref<1x64xf32, #tpu.memory_space<vmem>>, vector<1x64xf32>
    %69 = vector.broadcast %68 : vector<1x64xf32> to vector<64x64xf32>
    %70 = arith.addf %67, %69 : vector<64x64xf32>
    %71 = vector.shape_cast %70 : vector<64x64xf32> to vector<8x8x64xf32>
    %c0_80 = arith.constant 0 : index
    %c0_81 = arith.constant 0 : index
    %c0_82 = arith.constant 0 : index
    %c0_83 = arith.constant 0 : index
    %72 = vector.load %arg7[%c0_80, %c0_81, %c0_82, %c0_83] : memref<1x8x8x64xf32, #tpu.memory_space<vmem>>, vector<1x8x8x64xf32>
    %73 = vector.shape_cast %72 : vector<1x8x8x64xf32> to vector<8x8x64xf32>
    %74 = vector.shape_cast %71 : vector<8x8x64xf32> to vector<1x8x8x64xf32>
    tpu.vector_store %arg7[%c0_80, %c0_81, %c0_82, %c0_83], %74 {strides = array<i32>} : memref<1x8x8x64xf32, #tpu.memory_space<vmem>>, vector<1x8x8x64xf32>,
    return
  }
  func.func @transform_0(%arg0: i32) -> (i32, i32, i32, i32) {
    %c0_i32 = arith.constant 0 : i32
    %c0_i32_0 = arith.constant 0 : i32
    %c0_i32_1 = arith.constant 0 : i32
    %c0_i32_2 = arith.constant 0 : i32
    return %arg0, %c0_i32, %c0_i32_0, %c0_i32_1 : i32, i32, i32, i32
  }
  func.func @transform_1(%arg0: i32) -> (i32, i32, i32) {
    %c0_i32 = arith.constant 0 : i32
    %c0_i32_0 = arith.constant 0 : i32
    %c0_i32_1 = arith.constant 0 : i32
    %c0_i32_2 = arith.constant 0 : i32
    return %c0_i32, %c0_i32_0, %c0_i32_1 : i32, i32, i32
  }
  func.func @transform_2(%arg0: i32) -> (i32, i32) {
    %c0_i32 = arith.constant 0 : i32
    %c0_i32_0 = arith.constant 0 : i32
    %c0_i32_1 = arith.constant 0 : i32
    return %c0_i32, %c0_i32_0 : i32, i32
  }
  func.func @transform_3(%arg0: i32) -> (i32, i32, i32) {
    %c0_i32 = arith.constant 0 : i32
    %c0_i32_0 = arith.constant 0 : i32
    %c0_i32_1 = arith.constant 0 : i32
    %c0_i32_2 = arith.constant 0 : i32
    return %c0_i32, %c0_i32_0, %c0_i32_1 : i32, i32, i32
  }
  func.func @transform_4(%arg0: i32) -> (i32, i32) {
    %c0_i32 = arith.constant 0 : i32
    %c0_i32_0 = arith.constant 0 : i32
    %c0_i32_1 = arith.constant 0 : i32
    return %c0_i32, %c0_i32_0 : i32, i32
  }
  func.func @transform_5(%arg0: i32) -> (i32, i32, i32, i32) {
    %c0_i32 = arith.constant 0 : i32
    %c0_i32_0 = arith.constant 0 : i32
    %c0_i32_1 = arith.constant 0 : i32
    %c0_i32_2 = arith.constant 0 : i32
    return %arg0, %c0_i32, %c0_i32_0, %c0_i32_1 : i32, i32, i32, i32
  }
  func.func @transform_6(%arg0: i32) -> (i32, i32, i32, i32) {
    %c0_i32 = arith.constant 0 : i32
    %c0_i32_0 = arith.constant 0 : i32
    %c0_i32_1 = arith.constant 0 : i32
    %c0_i32_2 = arith.constant 0 : i32
    return %arg0, %c0_i32, %c0_i32_0, %c0_i32_1 : i32, i32, i32, i32
  }
}

</mosaic_0001>

<llo_original>
// kernel: last_level_p6p7_forward.1
$region0: #{last_level_p6p7_forward.1}
  #allocation0 [shape = 'u32[]', space=smem, size = 0x4, offset = 0x4, fixed_abs, tag = 'smem constant byte address 0x4 - core index']
  #allocation1 [shape = 'u32[144,128]{1,0:T(1,128)}', space=vmem, size = 0x12000, scoped, tag = 'internal scratch']
  #allocation2 [shape = 'f32[9,9,512]{2,1,0:T(8,128)}', space=vmem, size = 0x48000, scoped, tag = 'scratch operand']
  #allocation3 [shape = 'f32[9,9,256]{2,1,0:T(8,128)}', space=vmem, size = 0x24000, scoped, tag = 'scratch operand']
  %s0 = inlined_call_operand.vmem [shape: f32[2,8,8,512], index: 0, kind: input, shape index: {}]
  %s1 = inlined_call_operand.vmem [shape: f32[4,512,256], index: 1, kind: input, shape index: {}]
  %s2 = inlined_call_operand.vmem [shape: f32[1,256], index: 2, kind: input, shape index: {}]
  %s3 = inlined_call_operand.vmem [shape: f32[4,256,64], index: 3, kind: input, shape index: {}]
  %s4 = inlined_call_operand.vmem [shape: f32[1,64], index: 4, kind: input, shape index: {}]
  %s5 = inlined_call_operand.vmem [shape: f32[2,8,8,256], index: 5, kind: output, shape index: {0}]
  %s6 = inlined_call_operand.hbm [shape: f32[2,8,8,64], index: 6, kind: output, shape index: {1}]
  %7 = xla_tuple %s5, %s6
  %s8 = sld [smem:[#allocation0]]
  $region61: #{last_level_p6p7_forward.1} parent=0
    _
  %s10 = ssub.s32 1, %s8
  %s11 = scalar_select 0, %s10, %s8
  $region1: #{last_level_p6p7_forward.1} parent=0
    #allocation4 [shape = 'u8[65536]{0}', space=vmem, size = 0x10000, scoped, tag = 'output window, operand 1']
    #allocation5 [shape = 's32[2]{0}', space=sflag, size = 0x8, scoped, tag = 'scoped memory for last_level_p6p7_forward.1']
    %12 = vsyncpa [#allocation5], 0
    %s13 = scalar_lea.sflag [#allocation5], 1
    %14 = vsyncpa %s13, 0
    loop: start=0, step=1, limit=4
    $region2: #{last_level_p6p7_forward.1} parent=1 // loop_pre_header
      _
    $region3: #{last_level_p6p7_forward.1} parent=1 // loop_header
      %s16 = sphi 0, %s20
      %p17 = scmp.ge.s32.totalorder %s16, 4
      %s26 = sphi 0, %s28
      %s29 = sphi 0, %s26
      %s30 = sphi 0, %s29
      %s46 = sphi 0, %s30
      %s50 = sphi 0, %s50
      %s52 = sphi 0, %s50
      %s53 = sphi 0, %s52
      %s67 = sphi 0, %s53
      %s71 = sphi 0, %s71
      %s73 = sphi 0, %s71
      %s74 = sphi 0, %s73
      %s88 = sphi 0, %s74
      %s92 = sphi 0, %s92
      %s94 = sphi 0, %s92
      %s95 = sphi 0, %s94
      %s109 = sphi 0, %s95
      %s113 = sphi 0, %s113
      %s115 = sphi 0, %s113
      %s116 = sphi 0, %s115
      %s130 = sphi 0, %s116
      %s136 = sphi 0, %s138
      %s139 = sphi 0, %s136
      %s140 = sphi 0, %s139
      %s156 = sphi 0, %s140
      %s162 = sphi 0, %s164
      %s165 = sphi 0, %s162
      %s166 = sphi 0, %s165
      %s182 = sphi 0, %s166
    $region4: #{last_level_p6p7_forward.1} parent=1 // loop_header_branch
      %19 = sbr.rel (%p17) target = $region8
    $region5: #{last_level_p6p7_forward.1} parent=1 // loop_body
      %s21 = ssub.s32 %s16, 1
      %s22 = ssub.s32 %s16, 2
      %s23 = sadd.s32 %s16, 1
      %s24 = ssub.s32 %s16, %s23
      %p25 = scmp.eq.s32.totalorder %s24, 0
      %s27 = sadd.s32 %s26, 1
      %s28 = scalar_select %p25, %s26, %s27
      %p31 = pneg %p25
      %p32 = scmp.eq.s32.totalorder %s16, 1
      %p33 = por %p31, %p32
      %p34 = scmp.ne.s32.totalorder %s26, %s29
      %p35 = scmp.eq.s32.totalorder %s16, 0
      %p36 = por %p34, %p35
      %p37 = scmp.ne.s32.totalorder %s26, %s29
      %p38 = scmp.eq.s32.totalorder %s21, 1
      %p39 = por %p37, %p38
      %p40 = scmp.ne.s32.totalorder %s29, %s30
      %p41 = scmp.eq.s32.totalorder %s21, 0
      %p42 = por %p40, %p41
      %p43 = scmp.ne.s32.totalorder %s29, %s30
      %p44 = scmp.eq.s32.totalorder %s22, 1
      %p45 = por %p43, %p44
      %p47 = scmp.ne.s32.totalorder %s30, %s46
      %p48 = scmp.eq.s32.totalorder %s22, 0
      %p49 = por %p47, %p48
      %s51 = sadd.s32 %s50, 1
      %p54 = scmp.eq.s32.totalorder %s16, 1
      %p55 = scmp.ne.s32.totalorder %s50, %s52
      %p56 = scmp.eq.s32.totalorder %s16, 0
      %p57 = por %p55, %p56
      %p58 = scmp.ne.s32.totalorder %s50, %s52
      %p59 = scmp.eq.s32.totalorder %s21, 1
      %p60 = por %p58, %p59
      %p61 = scmp.ne.s32.totalorder %s52, %s53
      %p62 = scmp.eq.s32.totalorder %s21, 0
      %p63 = por %p61, %p62
      %p64 = scmp.ne.s32.totalorder %s52, %s53
      %p65 = scmp.eq.s32.totalorder %s22, 1
      %p66 = por %p64, %p65
      %p68 = scmp.ne.s32.totalorder %s53, %s67
      %p69 = scmp.eq.s32.totalorder %s22, 0
      %p70 = por %p68, %p69
      %s72 = sadd.s32 %s71, 1
      %p75 = scmp.eq.s32.totalorder %s16, 1
      %p76 = scmp.ne.s32.totalorder %s71, %s73
      %p77 = scmp.eq.s32.totalorder %s16, 0
      %p78 = por %p76, %p77
      %p79 = scmp.ne.s32.totalorder %s71, %s73
      %p80 = scmp.eq.s32.totalorder %s21, 1
      %p81 = por %p79, %p80
      %p82 = scmp.ne.s32.totalorder %s73, %s74
      %p83 = scmp.eq.s32.totalorder %s21, 0
      %p84 = por %p82, %p83
      %p85 = scmp.ne.s32.totalorder %s73, %s74
      %p86 = scmp.eq.s32.totalorder %s22, 1
      %p87 = por %p85, %p86
      %p89 = scmp.ne.s32.totalorder %s74, %s88
      %p90 = scmp.eq.s32.totalorder %s22, 0
      %p91 = por %p89, %p90
      %s93 = sadd.s32 %s92, 1
      %p96 = scmp.eq.s32.totalorder %s16, 1
      %p97 = scmp.ne.s32.totalorder %s92, %s94
      %p98 = scmp.eq.s32.totalorder %s16, 0
      %p99 = por %p97, %p98
      %p100 = scmp.ne.s32.totalorder %s92, %s94
      %p101 = scmp.eq.s32.totalorder %s21, 1
      %p102 = por %p100, %p101
      %p103 = scmp.ne.s32.totalorder %s94, %s95
      %p104 = scmp.eq.s32.totalorder %s21, 0
      %p105 = por %p103, %p104
      %p106 = scmp.ne.s32.totalorder %s94, %s95
      %p107 = scmp.eq.s32.totalorder %s22, 1
      %p108 = por %p106, %p107
      %p110 = scmp.ne.s32.totalorder %s95, %s109
      %p111 = scmp.eq.s32.totalorder %s22, 0
      %p112 = por %p110, %p111
      %s114 = sadd.s32 %s113, 1
      %p117 = scmp.eq.s32.totalorder %s16, 1
      %p118 = scmp.ne.s32.totalorder %s113, %s115
      %p119 = scmp.eq.s32.totalorder %s16, 0
      %p120 = por %p118, %p119
      %p121 = scmp.ne.s32.totalorder %s113, %s115
      %p122 = scmp.eq.s32.totalorder %s21, 1
      %p123 = por %p121, %p122
      %p124 = scmp.ne.s32.totalorder %s115, %s116
      %p125 = scmp.eq.s32.totalorder %s21, 0
      %p126 = por %p124, %p125
      %p127 = scmp.ne.s32.totalorder %s115, %s116
      %p128 = scmp.eq.s32.totalorder %s22, 1
      %p129 = por %p127, %p128
      %p131 = scmp.ne.s32.totalorder %s116, %s130
      %p132 = scmp.eq.s32.totalorder %s22, 0
      %p133 = por %p131, %p132
      %s134 = ssub.s32 %s16, %s23
      %p135 = scmp.eq.s32.totalorder %s134, 0
      %s137 = sadd.s32 %s136, 1
      %s138 = scalar_select %p135, %s136, %s137
      %p141 = pneg %p135
      %p142 = scmp.eq.s32.totalorder %s16, 1
      %p143 = por %p141, %p142
      %p144 = scmp.ne.s32.totalorder %s136, %s139
      %p145 = scmp.eq.s32.totalorder %s16, 0
      %p146 = por %p144, %p145
      %p147 = scmp.ne.s32.totalorder %s136, %s139
      %p148 = scmp.eq.s32.totalorder %s21, 1
      %p149 = por %p147, %p148
      %p150 = scmp.ne.s32.totalorder %s139, %s140
      %p151 = scmp.eq.s32.totalorder %s21, 0
      %p152 = por %p150, %p151
      %p153 = scmp.ne.s32.totalorder %s139, %s140
      %p154 = scmp.eq.s32.totalorder %s22, 1
      %p155 = por %p153, %p154
      %p157 = scmp.ne.s32.totalorder %s140, %s156
      %p158 = scmp.eq.s32.totalorder %s22, 0
      %p159 = por %p157, %p158
      %s160 = ssub.s32 %s16, %s23
      %p161 = scmp.eq.s32.totalorder %s160, 0
      %s163 = sadd.s32 %s162, 1
      %s164 = scalar_select %p161, %s162, %s163
      %p167 = pneg %p161
      %p168 = scmp.eq.s32.totalorder %s16, 1
      %p169 = por %p167, %p168
      %p170 = scmp.ne.s32.totalorder %s162, %s165
      %p171 = scmp.eq.s32.totalorder %s16, 0
      %p172 = por %p170, %p171
      %p173 = scmp.ne.s32.totalorder %s162, %s165
      %p174 = scmp.eq.s32.totalorder %s21, 1
      %p175 = por %p173, %p174
      %p176 = scmp.ne.s32.totalorder %s165, %s166
      %p177 = scmp.eq.s32.totalorder %s21, 0
      %p178 = por %p176, %p177
      %p179 = scmp.ne.s32.totalorder %s165, %s166
      %p180 = scmp.eq.s32.totalorder %s22, 1
      %p181 = por %p179, %p180
      %p183 = scmp.ne.s32.totalorder %s166, %s182
      %p184 = scmp.eq.s32.totalorder %s22, 0
      %p185 = por %p183, %p184
      %p186 = scmp.le.s32.totalorder 1, %s16
      %p187 = scmp.lt.s32.totalorder %s16, 3
      %p188 = pnand %p186, %p187
      %p189 = pneg %p188
      // Predicated region
      $region9: #{last_level_p6p7_forward.1} parent=5 // pred_check
        _
      $region10: #{last_level_p6p7_forward.1} parent=5 // pred_check_branch
        %191 = sbr.rel (%p188) target = $region12
      $region11: #{last_level_p6p7_forward.1} parent=5 // pred_region
        %s192 = ssub.s32 %s16, 1
        // Predicated region
        $region13: #{last_level_p6p7_forward.1} parent=11 // pred_check
          %p193 = pneg %p63
        $region14: #{last_level_p6p7_forward.1} parent=11 // pred_check_branch
          %195 = sbr.rel (%p193) target = $region16
        $region15: #{last_level_p6p7_forward.1} parent=11 // pred_region
          _
        $region16: #{last_level_p6p7_forward.1} parent=11 // pred_fallthru
          _
        // Predicated region
        $region17: #{last_level_p6p7_forward.1} parent=11 // pred_check
          %p196 = pneg %p84
        $region18: #{last_level_p6p7_forward.1} parent=11 // pred_check_branch
          %198 = sbr.rel (%p196) target = $region20
        $region19: #{last_level_p6p7_forward.1} parent=11 // pred_region
          _
        $region20: #{last_level_p6p7_forward.1} parent=11 // pred_fallthru
          _
        // Predicated region
        $region21: #{last_level_p6p7_forward.1} parent=11 // pred_check
          %p199 = pneg %p105
        $region22: #{last_level_p6p7_forward.1} parent=11 // pred_check_branch
          %201 = sbr.rel (%p199) target = $region24
        $region23: #{last_level_p6p7_forward.1} parent=11 // pred_region
          _
        $region24: #{last_level_p6p7_forward.1} parent=11 // pred_fallthru
          _
        // Predicated region
        $region25: #{last_level_p6p7_forward.1} parent=11 // pred_check
          %p202 = pneg %p126
        $region26: #{last_level_p6p7_forward.1} parent=11 // pred_check_branch
          %204 = sbr.rel (%p202) target = $region28
        $region27: #{last_level_p6p7_forward.1} parent=11 // pred_region
          _
        $region28: #{last_level_p6p7_forward.1} parent=11 // pred_fallthru
          _
      $region12: #{last_level_p6p7_forward.1} parent=5 // pred_fallthru
        _
      %p205 = scmp.lt.s32.totalorder %s16, 2
      // Predicated region
      $region29: #{last_level_p6p7_forward.1} parent=5 // pred_check
        %p206 = pneg %p205
      $region30: #{last_level_p6p7_forward.1} parent=5 // pred_check_branch
        %208 = sbr.rel (%p206) target = $region32
      $region31: #{last_level_p6p7_forward.1} parent=5 // pred_region
        // Predicated region
        $region33: #{last_level_p6p7_forward.1} parent=31 // pred_check
          %p209 = pneg %p36
        $region34: #{last_level_p6p7_forward.1} parent=31 // pred_check_branch
          %211 = sbr.rel (%p209) target = $region36
        $region35: #{last_level_p6p7_forward.1} parent=31 // pred_region
          %p212 = scmp.lt.s32.totalorder %s16, 1
          %s213 = scalar_select %p212, %s16, 1
          %s214 = smul.addr %s213, 32
          %s215 = smul.addr %s214, 8
          %s216 = scalar_lea.vmem %s0, %s215
        $region36: #{last_level_p6p7_forward.1} parent=31 // pred_fallthru
          _
      $region32: #{last_level_p6p7_forward.1} parent=5 // pred_fallthru
        _
      %p217 = scmp.le.s32.totalorder 1, %s16
      %p218 = scmp.lt.s32.totalorder %s16, 3
      %p219 = pnand %p217, %p218
      %p220 = pneg %p219
      // Predicated region
      $region37: #{last_level_p6p7_forward.1} parent=5 // pred_check
        _
      $region38: #{last_level_p6p7_forward.1} parent=5 // pred_check_branch
        %222 = sbr.rel (%p219) target = $region40
      $region39: #{last_level_p6p7_forward.1} parent=5 // pred_region
        %s223 = ssub.s32 %s16, 1
        %p224 = scmp.lt.s32.totalorder %s21, 1
        %s225 = scalar_select %p224, %s21, 1
        %s226 = smul.addr %s225, 32
        %s227 = smul.addr %s226, 8
        %s228 = scalar_lea.vmem %s0, %s227
        %p229 = pneg %p42
        %p230 = pneg %p39
        %p231 = pneg %p63
        %p232 = pneg %p60
        %p233 = pneg %p84
        %p234 = pneg %p81
        %p235 = pneg %p105
        %p236 = pneg %p102
        %p237 = pneg %p126
        %p238 = pneg %p123
        %p239 = pneg %p152
        %p240 = pneg %p149
        %p241 = scmp.lt.s32.totalorder %s21, 1
        %s242 = scalar_select %p241, %s21, 1
        %s243 = smul.addr %s242, 16
        %s244 = smul.addr %s243, 8
        %s245 = scalar_lea.vmem %s5, %s244
        %p246 = pneg %p178
        %p247 = pneg %p175
        %s248 = sand.u32 %s165, 1
        %s249 = scalar_lea.sflag [#allocation5], %s248
        %s250 = sand.u32 %s165, 1
        %s251 = smul.addr %s250, 64
        %s252 = scalar_lea.vmem [#allocation4], %s251
        %p253 = scmp.lt.s32.totalorder %s21, 1
        %s254 = scalar_select %p253, %s21, 1
        %s255 = smul.addr %s254, 32
        %s256 = smul.addr %s255, 8
        %s257 = scalar_lea.vmem %s0, %s256
        %p258 = scmp.lt.s32.totalorder %s21, 1
        %s259 = scalar_select %p258, %s21, 1
        %s260 = smul.addr %s259, 16
        %s261 = smul.addr %s260, 8
        %s262 = scalar_lea.vmem %s5, %s261
        %263 = vst [vmem:[#allocation2] sm:$0xff] 0.0
        %264 = vst [vmem:[#allocation2 + $0x8] sm:$0xff] 0.0
        %265 = vst [vmem:[#allocation2 + $0x10] sm:$0xff] 0.0
        %266 = vst [vmem:[#allocation2 + $0x18] sm:$0xff] 0.0
        %267 = vst [vmem:[#allocation2 + $0x20] sm:$0x1] 0.0
        %268 = vst [vmem:[#allocation2 + $0x28] sm:$0x1] 0.0
        %269 = vst [vmem:[#allocation2 + $0x30] sm:$0x1] 0.0
        %270 = vst [vmem:[#allocation2 + $0x38] sm:$0x1] 0.0
        %271 = vst [vmem:[#allocation2 + $0x40] sm:$0xff] 0.0
        %272 = vst [vmem:[#allocation2 + $0x48] sm:$0xff] 0.0
        %273 = vst [vmem:[#allocation2 + $0x50] sm:$0xff] 0.0
        %274 = vst [vmem:[#allocation2 + $0x58] sm:$0xff] 0.0
        %275 = vst [vmem:[#allocation2 + $0x60] sm:$0x1] 0.0
        %276 = vst [vmem:[#allocation2 + $0x68] sm:$0x1] 0.0
        %277 = vst [vmem:[#allocation2 + $0x70] sm:$0x1] 0.0
        %278 = vst [vmem:[#allocation2 + $0x78] sm:$0x1] 0.0
        %279 = vst [vmem:[#allocation2 + $0x80] sm:$0xff] 0.0
        %280 = vst [vmem:[#allocation2 + $0x88] sm:$0xff] 0.0
        %281 = vst [vmem:[#allocation2 + $0x90] sm:$0xff] 0.0
        %282 = vst [vmem:[#allocation2 + $0x98] sm:$0xff] 0.0
        %283 = vst [vmem:[#allocation2 + $0xa0] sm:$0x1] 0.0
        %284 = vst [vmem:[#allocation2 + $0xa8] sm:$0x1] 0.0
        %285 = vst [vmem:[#allocation2 + $0xb0] sm:$0x1] 0.0
        %286 = vst [vmem:[#allocation2 + $0xb8] sm:$0x1] 0.0
        %287 = vst [vmem:[#allocation2 + $0xc0] sm:$0xff] 0.0
        %288 = vst [vmem:[#allocation2 + $0xc8] sm:$0xff] 0.0
        %289 = vst [vmem:[#allocation2 + $0xd0] sm:$0xff] 0.0
        %290 = vst [vmem:[#allocation2 + $0xd8] sm:$0xff] 0.0
        %291 = vst [vmem:[#allocation2 + $0xe0] sm:$0x1] 0.0
        %292 = vst [vmem:[#allocation2 + $0xe8] sm:$0x1] 0.0
        %293 = vst [vmem:[#allocation2 + $0xf0] sm:$0x1] 0.0
        %294 = vst [vmem:[#allocation2 + $0xf8] sm:$0x1] 0.0
        %295 = vst [vmem:[#allocation2 + $0x100] sm:$0xff] 0.0
        %296 = vst [vmem:[#allocation2 + $0x108] sm:$0xff] 0.0
        %297 = vst [vmem:[#allocation2 + $0x110] sm:$0xff] 0.0
        %298 = vst [vmem:[#allocation2 + $0x118] sm:$0xff] 0.0
        %299 = vst [vmem:[#allocation2 + $0x120] sm:$0x1] 0.0
        %300 = vst [vmem:[#allocation2 + $0x128] sm:$0x1] 0.0
        %301 = vst [vmem:[#allocation2 + $0x130] sm:$0x1] 0.0
        %302 = vst [vmem:[#allocation2 + $0x138] sm:$0x1] 0.0
        %303 = vst [vmem:[#allocation2 + $0x140] sm:$0xff] 0.0
        %304 = vst [vmem:[#allocation2 + $0x148] sm:$0xff] 0.0
        %305 = vst [vmem:[#allocation2 + $0x150] sm:$0xff] 0.0
        %306 = vst [vmem:[#allocation2 + $0x158] sm:$0xff] 0.0
        %307 = vst [vmem:[#allocation2 + $0x160] sm:$0x1] 0.0
        %308 = vst [vmem:[#allocation2 + $0x168] sm:$0x1] 0.0
        %309 = vst [vmem:[#allocation2 + $0x170] sm:$0x1] 0.0
        %310 = vst [vmem:[#allocation2 + $0x178] sm:$0x1] 0.0
        %311 = vst [vmem:[#allocation2 + $0x180] sm:$0xff] 0.0
        %312 = vst [vmem:[#allocation2 + $0x188] sm:$0xff] 0.0
        %313 = vst [vmem:[#allocation2 + $0x190] sm:$0xff] 0.0
        %314 = vst [vmem:[#allocation2 + $0x198] sm:$0xff] 0.0
        %315 = vst [vmem:[#allocation2 + $0x1a0] sm:$0x1] 0.0
        %316 = vst [vmem:[#allocation2 + $0x1a8] sm:$0x1] 0.0
        %317 = vst [vmem:[#allocation2 + $0x1b0] sm:$0x1] 0.0
        %318 = vst [vmem:[#allocation2 + $0x1b8] sm:$0x1] 0.0
        %319 = vst [vmem:[#allocation2 + $0x1c0] sm:$0xff] 0.0
        %320 = vst [vmem:[#allocation2 + $0x1c8] sm:$0xff] 0.0
        %321 = vst [vmem:[#allocation2 + $0x1d0] sm:$0xff] 0.0
        %322 = vst [vmem:[#allocation2 + $0x1d8] sm:$0xff] 0.0
        %323 = vst [vmem:[#allocation2 + $0x1e0] sm:$0x1] 0.0
        %324 = vst [vmem:[#allocation2 + $0x1e8] sm:$0x1] 0.0
        %325 = vst [vmem:[#allocation2 + $0x1f0] sm:$0x1] 0.0
        %326 = vst [vmem:[#allocation2 + $0x1f8] sm:$0x1] 0.0
        %327 = vst [vmem:[#allocation2 + $0x200] sm:$0xff] 0.0
        %328 = vst [vmem:[#allocation2 + $0x208] sm:$0xff] 0.0
        %329 = vst [vmem:[#allocation2 + $0x210] sm:$0xff] 0.0
        %330 = vst [vmem:[#allocation2 + $0x218] sm:$0xff] 0.0
        %331 = vst [vmem:[#allocation2 + $0x220] sm:$0x1] 0.0
        %332 = vst [vmem:[#allocation2 + $0x228] sm:$0x1] 0.0
        %333 = vst [vmem:[#allocation2 + $0x230] sm:$0x1] 0.0
        %334 = vst [vmem:[#allocation2 + $0x238] sm:$0x1] 0.0
        %v335 = vld [vmem:[%s257] sm:$0xff]
        %v336 = vld [vmem:[%s257 + $0x8] sm:$0xff]
        %v337 = vld [vmem:[%s257 + $0x10] sm:$0xff]
        %v338 = vld [vmem:[%s257 + $0x18] sm:$0xff]
        %v339 = vld [vmem:[%s257 + $0x20] sm:$0xff]
        %v340 = vld [vmem:[%s257 + $0x28] sm:$0xff]
        %v341 = vld [vmem:[%s257 + $0x30] sm:$0xff]
        %v342 = vld [vmem:[%s257 + $0x38] sm:$0xff]
        %v343 = vld [vmem:[%s257 + $0x40] sm:$0xff]
        %v344 = vld [vmem:[%s257 + $0x48] sm:$0xff]
        %v345 = vld [vmem:[%s257 + $0x50] sm:$0xff]
        %v346 = vld [vmem:[%s257 + $0x58] sm:$0xff]
        %v347 = vld [vmem:[%s257 + $0x60] sm:$0xff]
        %v348 = vld [vmem:[%s257 + $0x68] sm:$0xff]
        %v349 = vld [vmem:[%s257 + $0x70] sm:$0xff]
        %v350 = vld [vmem:[%s257 + $0x78] sm:$0xff]
        %v351 = vld [vmem:[%s257 + $0x80] sm:$0xff]
        %v352 = vld [vmem:[%s257 + $0x88] sm:$0xff]
        %v353 = vld [vmem:[%s257 + $0x90] sm:$0xff]
        %v354 = vld [vmem:[%s257 + $0x98] sm:$0xff]
        %v355 = vld [vmem:[%s257 + $0xa0] sm:$0xff]
        %v356 = vld [vmem:[%s257 + $0xa8] sm:$0xff]
        %v357 = vld [vmem:[%s257 + $0xb0] sm:$0xff]
        %v358 = vld [vmem:[%s257 + $0xb8] sm:$0xff]
        %v359 = vld [vmem:[%s257 + $0xc0] sm:$0xff]
        %v360 = vld [vmem:[%s257 + $0xc8] sm:$0xff]
        %v361 = vld [vmem:[%s257 + $0xd0] sm:$0xff]
        %v362 = vld [vmem:[%s257 + $0xd8] sm:$0xff]
        %v363 = vld [vmem:[%s257 + $0xe0] sm:$0xff]
        %v364 = vld [vmem:[%s257 + $0xe8] sm:$0xff]
        %v365 = vld [vmem:[%s257 + $0xf0] sm:$0xff]
        %v366 = vld [vmem:[%s257 + $0xf8] sm:$0xff]
        %v399 = vrot.slane %v335, 7
        %v400 = vrot.slane %v336, 7
        %v401 = vrot.slane %v337, 7
        %v402 = vrot.slane %v338, 7
        %v403 = vrot.slane %v339, 7
        %v404 = vrot.slane %v340, 7
        %v405 = vrot.slane %v341, 7
        %v406 = vrot.slane %v342, 7
        %v407 = vrot.slane %v343, 7
        %v408 = vrot.slane %v344, 7
        %v409 = vrot.slane %v345, 7
        %v410 = vrot.slane %v346, 7
        %v411 = vrot.slane %v347, 7
        %v412 = vrot.slane %v348, 7
        %v413 = vrot.slane %v349, 7
        %v414 = vrot.slane %v350, 7
        %v415 = vrot.slane %v351, 7
        %v416 = vrot.slane %v352, 7
        %v417 = vrot.slane %v353, 7
        %v418 = vrot.slane %v354, 7
        %v419 = vrot.slane %v355, 7
        %v420 = vrot.slane %v356, 7
        %v421 = vrot.slane %v357, 7
        %v422 = vrot.slane %v358, 7
        %v423 = vrot.slane %v359, 7
        %v424 = vrot.slane %v360, 7
        %v425 = vrot.slane %v361, 7
        %v426 = vrot.slane %v362, 7
        %v427 = vrot.slane %v363, 7
        %v428 = vrot.slane %v364, 7
        %v429 = vrot.slane %v365, 7
        %v430 = vrot.slane %v366, 7
        %s463 = scalar_lea.vmem [#allocation2], 64
        %464 = vst [vmem:[%s463] sm:$0xfe] %v399
        %465 = vst [vmem:[%s463 + $0x8] sm:$0xfe] %v400
        %466 = vst [vmem:[%s463 + $0x10] sm:$0xfe] %v401
        %467 = vst [vmem:[%s463 + $0x18] sm:$0xfe] %v402
        %468 = vst [vmem:[%s463 + $0x20] sm:$0x1] %v399
        %469 = vst [vmem:[%s463 + $0x28] sm:$0x1] %v400
        %470 = vst [vmem:[%s463 + $0x30] sm:$0x1] %v401
        %471 = vst [vmem:[%s463 + $0x38] sm:$0x1] %v402
        %472 = vst [vmem:[%s463 + $0x40] sm:$0xfe] %v403
        %473 = vst [vmem:[%s463 + $0x48] sm:$0xfe] %v404
        %474 = vst [vmem:[%s463 + $0x50] sm:$0xfe] %v405
        %475 = vst [vmem:[%s463 + $0x58] sm:$0xfe] %v406
        %476 = vst [vmem:[%s463 + $0x60] sm:$0x1] %v403
        %477 = vst [vmem:[%s463 + $0x68] sm:$0x1] %v404
        %478 = vst [vmem:[%s463 + $0x70] sm:$0x1] %v405
        %479 = vst [vmem:[%s463 + $0x78] sm:$0x1] %v406
        %480 = vst [vmem:[%s463 + $0x80] sm:$0xfe] %v407
        %481 = vst [vmem:[%s463 + $0x88] sm:$0xfe] %v408
        %482 = vst [vmem:[%s463 + $0x90] sm:$0xfe] %v409
        %483 = vst [vmem:[%s463 + $0x98] sm:$0xfe] %v410
        %484 = vst [vmem:[%s463 + $0xa0] sm:$0x1] %v407
        %485 = vst [vmem:[%s463 + $0xa8] sm:$0x1] %v408
        %486 = vst [vmem:[%s463 + $0xb0] sm:$0x1] %v409
        %487 = vst [vmem:[%s463 + $0xb8] sm:$0x1] %v410
        %488 = vst [vmem:[%s463 + $0xc0] sm:$0xfe] %v411
        %489 = vst [vmem:[%s463 + $0xc8] sm:$0xfe] %v412
        %490 = vst [vmem:[%s463 + $0xd0] sm:$0xfe] %v413
        %491 = vst [vmem:[%s463 + $0xd8] sm:$0xfe] %v414
        %492 = vst [vmem:[%s463 + $0xe0] sm:$0x1] %v411
        %493 = vst [vmem:[%s463 + $0xe8] sm:$0x1] %v412
        %494 = vst [vmem:[%s463 + $0xf0] sm:$0x1] %v413
        %495 = vst [vmem:[%s463 + $0xf8] sm:$0x1] %v414
        %496 = vst [vmem:[%s463 + $0x100] sm:$0xfe] %v415
        %497 = vst [vmem:[%s463 + $0x108] sm:$0xfe] %v416
        %498 = vst [vmem:[%s463 + $0x110] sm:$0xfe] %v417
        %499 = vst [vmem:[%s463 + $0x118] sm:$0xfe] %v418
        %500 = vst [vmem:[%s463 + $0x120] sm:$0x1] %v415
        %501 = vst [vmem:[%s463 + $0x128] sm:$0x1] %v416
        %502 = vst [vmem:[%s463 + $0x130] sm:$0x1] %v417
        %503 = vst [vmem:[%s463 + $0x138] sm:$0x1] %v418
        %504 = vst [vmem:[%s463 + $0x140] sm:$0xfe] %v419
        %505 = vst [vmem:[%s463 + $0x148] sm:$0xfe] %v420
        %506 = vst [vmem:[%s463 + $0x150] sm:$0xfe] %v421
        %507 = vst [vmem:[%s463 + $0x158] sm:$0xfe] %v422
        %508 = vst [vmem:[%s463 + $0x160] sm:$0x1] %v419
        %509 = vst [vmem:[%s463 + $0x168] sm:$0x1] %v420
        %510 = vst [vmem:[%s463 + $0x170] sm:$0x1] %v421
        %511 = vst [vmem:[%s463 + $0x178] sm:$0x1] %v422
        %512 = vst [vmem:[%s463 + $0x180] sm:$0xfe] %v423
        %513 = vst [vmem:[%s463 + $0x188] sm:$0xfe] %v424
        %514 = vst [vmem:[%s463 + $0x190] sm:$0xfe] %v425
        %515 = vst [vmem:[%s463 + $0x198] sm:$0xfe] %v426
        %516 = vst [vmem:[%s463 + $0x1a0] sm:$0x1] %v423
        %517 = vst [vmem:[%s463 + $0x1a8] sm:$0x1] %v424
        %518 = vst [vmem:[%s463 + $0x1b0] sm:$0x1] %v425
        %519 = vst [vmem:[%s463 + $0x1b8] sm:$0x1] %v426
        %520 = vst [vmem:[%s463 + $0x1c0] sm:$0xfe] %v427
        %521 = vst [vmem:[%s463 + $0x1c8] sm:$0xfe] %v428
        %522 = vst [vmem:[%s463 + $0x1d0] sm:$0xfe] %v429
        %523 = vst [vmem:[%s463 + $0x1d8] sm:$0xfe] %v430
        %524 = vst [vmem:[%s463 + $0x1e0] sm:$0x1] %v427
        %525 = vst [vmem:[%s463 + $0x1e8] sm:$0x1] %v428
        %526 = vst [vmem:[%s463 + $0x1f0] sm:$0x1] %v429
        %527 = vst [vmem:[%s463 + $0x1f8] sm:$0x1] %v430
        %v528 = vld [vmem:[#allocation2] sm:$0xff]
        %v529 = vld [vmem:[#allocation2 + $0x8] sm:$0xff]
        %v530 = vld [vmem:[#allocation2 + $0x10] sm:$0xff]
        %v531 = vld [vmem:[#allocation2 + $0x18] sm:$0xff]
        %v532 = vld [vmem:[#allocation2 + $0x40] sm:$0xff]
        %v533 = vld [vmem:[#allocation2 + $0x48] sm:$0xff]
        %v534 = vld [vmem:[#allocation2 + $0x50] sm:$0xff]
        %v535 = vld [vmem:[#allocation2 + $0x58] sm:$0xff]
        %v536 = vld [vmem:[#allocation2 + $0x80] sm:$0xff]
        %v537 = vld [vmem:[#allocation2 + $0x88] sm:$0xff]
        %v538 = vld [vmem:[#allocation2 + $0x90] sm:$0xff]
        %v539 = vld [vmem:[#allocation2 + $0x98] sm:$0xff]
        %v540 = vld [vmem:[#allocation2 + $0xc0] sm:$0xff]
        %v541 = vld [vmem:[#allocation2 + $0xc8] sm:$0xff]
        %v542 = vld [vmem:[#allocation2 + $0xd0] sm:$0xff]
        %v543 = vld [vmem:[#allocation2 + $0xd8] sm:$0xff]
        %v544 = vld [vmem:[#allocation2 + $0x100] sm:$0xff]
        %v545 = vld [vmem:[#allocation2 + $0x108] sm:$0xff]
        %v546 = vld [vmem:[#allocation2 + $0x110] sm:$0xff]
        %v547 = vld [vmem:[#allocation2 + $0x118] sm:$0xff]
        %v548 = vld [vmem:[#allocation2 + $0x140] sm:$0xff]
        %v549 = vld [vmem:[#allocation2 + $0x148] sm:$0xff]
        %v550 = vld [vmem:[#allocation2 + $0x150] sm:$0xff]
        %v551 = vld [vmem:[#allocation2 + $0x158] sm:$0xff]
        %v552 = vld [vmem:[#allocation2 + $0x180] sm:$0xff]
        %v553 = vld [vmem:[#allocation2 + $0x188] sm:$0xff]
        %v554 = vld [vmem:[#allocation2 + $0x190] sm:$0xff]
        %v555 = vld [vmem:[#allocation2 + $0x198] sm:$0xff]
        %v556 = vld [vmem:[#allocation2 + $0x1c0] sm:$0xff]
        %v557 = vld [vmem:[#allocation2 + $0x1c8] sm:$0xff]
        %v558 = vld [vmem:[#allocation2 + $0x1d0] sm:$0xff]
        %v559 = vld [vmem:[#allocation2 + $0x1d8] sm:$0xff]
        %v560 = vld [vmem:[%s1] sm:$0xff]
        %v561 = vld [vmem:[%s1 + $0x8] sm:$0xff]
        %v562 = vld [vmem:[%s1 + $0x10] sm:$0xff]
        %v563 = vld [vmem:[%s1 + $0x18] sm:$0xff]
        %v564 = vld [vmem:[%s1 + $0x20] sm:$0xff]
        %v565 = vld [vmem:[%s1 + $0x28] sm:$0xff]
        %v566 = vld [vmem:[%s1 + $0x30] sm:$0xff]
        %v567 = vld [vmem:[%s1 + $0x38] sm:$0xff]
        %v568 = vld [vmem:[%s1 + $0x40] sm:$0xff]
        %v569 = vld [vmem:[%s1 + $0x48] sm:$0xff]
        %v570 = vld [vmem:[%s1 + $0x50] sm:$0xff]
        %v571 = vld [vmem:[%s1 + $0x58] sm:$0xff]
        %v572 = vld [vmem:[%s1 + $0x60] sm:$0xff]
        %v573 = vld [vmem:[%s1 + $0x68] sm:$0xff]
        %v574 = vld [vmem:[%s1 + $0x70] sm:$0xff]
        %v575 = vld [vmem:[%s1 + $0x78] sm:$0xff]
        %v576 = vld [vmem:[%s1 + $0x80] sm:$0xff]
        %v577 = vld [vmem:[%s1 + $0x88] sm:$0xff]
        %v578 = vld [vmem:[%s1 + $0x90] sm:$0xff]
        %v579 = vld [vmem:[%s1 + $0x98] sm:$0xff]
        %v580 = vld [vmem:[%s1 + $0xa0] sm:$0xff]
        %v581 = vld [vmem:[%s1 + $0xa8] sm:$0xff]
        %v582 = vld [vmem:[%s1 + $0xb0] sm:$0xff]
        %v583 = vld [vmem:[%s1 + $0xb8] sm:$0xff]
        %v584 = vld [vmem:[%s1 + $0xc0] sm:$0xff]
        %v585 = vld [vmem:[%s1 + $0xc8] sm:$0xff]
        %v586 = vld [vmem:[%s1 + $0xd0] sm:$0xff]
        %v587 = vld [vmem:[%s1 + $0xd8] sm:$0xff]
        %v588 = vld [vmem:[%s1 + $0xe0] sm:$0xff]
        %v589 = vld [vmem:[%s1 + $0xe8] sm:$0xff]
        %v590 = vld [vmem:[%s1 + $0xf0] sm:$0xff]
        %v591 = vld [vmem:[%s1 + $0xf8] sm:$0xff]
        %v592 = vld [vmem:[%s1 + $0x100] sm:$0xff]
        %v593 = vld [vmem:[%s1 + $0x108] sm:$0xff]
        %v594 = vld [vmem:[%s1 + $0x110] sm:$0xff]
        %v595 = vld [vmem:[%s1 + $0x118] sm:$0xff]
        %v596 = vld [vmem:[%s1 + $0x120] sm:$0xff]
        %v597 = vld [vmem:[%s1 + $0x128] sm:$0xff]
        %v598 = vld [vmem:[%s1 + $0x130] sm:$0xff]
        %v599 = vld [vmem:[%s1 + $0x138] sm:$0xff]
        %v600 = vld [vmem:[%s1 + $0x140] sm:$0xff]
        %v601 = vld [vmem:[%s1 + $0x148] sm:$0xff]
        %v602 = vld [vmem:[%s1 + $0x150] sm:$0xff]
        %v603 = vld [vmem:[%s1 + $0x158] sm:$0xff]
        %v604 = vld [vmem:[%s1 + $0x160] sm:$0xff]
        %v605 = vld [vmem:[%s1 + $0x168] sm:$0xff]
        %v606 = vld [vmem:[%s1 + $0x170] sm:$0xff]
        %v607 = vld [vmem:[%s1 + $0x178] sm:$0xff]
        %v608 = vld [vmem:[%s1 + $0x180] sm:$0xff]
        %v609 = vld [vmem:[%s1 + $0x188] sm:$0xff]
        %v610 = vld [vmem:[%s1 + $0x190] sm:$0xff]
        %v611 = vld [vmem:[%s1 + $0x198] sm:$0xff]
        %v612 = vld [vmem:[%s1 + $0x1a0] sm:$0xff]
        %v613 = vld [vmem:[%s1 + $0x1a8] sm:$0xff]
        %v614 = vld [vmem:[%s1 + $0x1b0] sm:$0xff]
        %v615 = vld [vmem:[%s1 + $0x1b8] sm:$0xff]
        %v616 = vld [vmem:[%s1 + $0x1c0] sm:$0xff]
        %v617 = vld [vmem:[%s1 + $0x1c8] sm:$0xff]
        %v618 = vld [vmem:[%s1 + $0x1d0] sm:$0xff]
        %v619 = vld [vmem:[%s1 + $0x1d8] sm:$0xff]
        %v620 = vld [vmem:[%s1 + $0x1e0] sm:$0xff]
        %v621 = vld [vmem:[%s1 + $0x1e8] sm:$0xff]
        %v622 = vld [vmem:[%s1 + $0x1f0] sm:$0xff]
        %v623 = vld [vmem:[%s1 + $0x1f8] sm:$0xff]
        %v624 = vld [vmem:[%s1 + $0x200] sm:$0xff]
        %v625 = vld [vmem:[%s1 + $0x208] sm:$0xff]
        %v626 = vld [vmem:[%s1 + $0x210] sm:$0xff]
        %v627 = vld [vmem:[%s1 + $0x218] sm:$0xff]
        %v628 = vld [vmem:[%s1 + $0x220] sm:$0xff]
        %v629 = vld [vmem:[%s1 + $0x228] sm:$0xff]
        %v630 = vld [vmem:[%s1 + $0x230] sm:$0xff]
        %v631 = vld [vmem:[%s1 + $0x238] sm:$0xff]
        %v632 = vld [vmem:[%s1 + $0x240] sm:$0xff]
        %v633 = vld [vmem:[%s1 + $0x248] sm:$0xff]
        %v634 = vld [vmem:[%s1 + $0x250] sm:$0xff]
        %v635 = vld [vmem:[%s1 + $0x258] sm:$0xff]
        %v636 = vld [vmem:[%s1 + $0x260] sm:$0xff]
        %v637 = vld [vmem:[%s1 + $0x268] sm:$0xff]
        %v638 = vld [vmem:[%s1 + $0x270] sm:$0xff]
        %v639 = vld [vmem:[%s1 + $0x278] sm:$0xff]
        %v640 = vld [vmem:[%s1 + $0x280] sm:$0xff]
        %v641 = vld [vmem:[%s1 + $0x288] sm:$0xff]
        %v642 = vld [vmem:[%s1 + $0x290] sm:$0xff]
        %v643 = vld [vmem:[%s1 + $0x298] sm:$0xff]
        %v644 = vld [vmem:[%s1 + $0x2a0] sm:$0xff]
        %v645 = vld [vmem:[%s1 + $0x2a8] sm:$0xff]
        %v646 = vld [vmem:[%s1 + $0x2b0] sm:$0xff]
        %v647 = vld [vmem:[%s1 + $0x2b8] sm:$0xff]
        %v648 = vld [vmem:[%s1 + $0x2c0] sm:$0xff]
        %v649 = vld [vmem:[%s1 + $0x2c8] sm:$0xff]
        %v650 = vld [vmem:[%s1 + $0x2d0] sm:$0xff]
        %v651 = vld [vmem:[%s1 + $0x2d8] sm:$0xff]
        %v652 = vld [vmem:[%s1 + $0x2e0] sm:$0xff]
        %v653 = vld [vmem:[%s1 + $0x2e8] sm:$0xff]
        %v654 = vld [vmem:[%s1 + $0x2f0] sm:$0xff]
        %v655 = vld [vmem:[%s1 + $0x2f8] sm:$0xff]
        %v656 = vld [vmem:[%s1 + $0x300] sm:$0xff]
        %v657 = vld [vmem:[%s1 + $0x308] sm:$0xff]
        %v658 = vld [vmem:[%s1 + $0x310] sm:$0xff]
        %v659 = vld [vmem:[%s1 + $0x318] sm:$0xff]
        %v660 = vld [vmem:[%s1 + $0x320] sm:$0xff]
        %v661 = vld [vmem:[%s1 + $0x328] sm:$0xff]
        %v662 = vld [vmem:[%s1 + $0x330] sm:$0xff]
        %v663 = vld [vmem:[%s1 + $0x338] sm:$0xff]
        %v664 = vld [vmem:[%s1 + $0x340] sm:$0xff]
        %v665 = vld [vmem:[%s1 + $0x348] sm:$0xff]
        %v666 = vld [vmem:[%s1 + $0x350] sm:$0xff]
        %v667 = vld [vmem:[%s1 + $0x358] sm:$0xff]
        %v668 = vld [vmem:[%s1 + $0x360] sm:$0xff]
        %v669 = vld [vmem:[%s1 + $0x368] sm:$0xff]
        %v670 = vld [vmem:[%s1 + $0x370] sm:$0xff]
        %v671 = vld [vmem:[%s1 + $0x378] sm:$0xff]
        %v672 = vld [vmem:[%s1 + $0x380] sm:$0xff]
        %v673 = vld [vmem:[%s1 + $0x388] sm:$0xff]
        %v674 = vld [vmem:[%s1 + $0x390] sm:$0xff]
        %v675 = vld [vmem:[%s1 + $0x398] sm:$0xff]
        %v676 = vld [vmem:[%s1 + $0x3a0] sm:$0xff]
        %v677 = vld [vmem:[%s1 + $0x3a8] sm:$0xff]
        %v678 = vld [vmem:[%s1 + $0x3b0] sm:$0xff]
        %v679 = vld [vmem:[%s1 + $0x3b8] sm:$0xff]
        %v680 = vld [vmem:[%s1 + $0x3c0] sm:$0xff]
        %v681 = vld [vmem:[%s1 + $0x3c8] sm:$0xff]
        %v682 = vld [vmem:[%s1 + $0x3d0] sm:$0xff]
        %v683 = vld [vmem:[%s1 + $0x3d8] sm:$0xff]
        %v684 = vld [vmem:[%s1 + $0x3e0] sm:$0xff]
        %v685 = vld [vmem:[%s1 + $0x3e8] sm:$0xff]
        %v686 = vld [vmem:[%s1 + $0x3f0] sm:$0xff]
        %v687 = vld [vmem:[%s1 + $0x3f8] sm:$0xff]
        %v688 = vld [vmem:[#allocation2] sm:$0xfe]
        %v689 = vld [vmem:[#allocation2 + $0x8] sm:$0xfe]
        %v690 = vld [vmem:[#allocation2 + $0x10] sm:$0xfe]
        %v691 = vld [vmem:[#allocation2 + $0x18] sm:$0xfe]
        %v692 = vld [vmem:[#allocation2 + $0x20] sm:$0x1]
        %v693 = vld [vmem:[#allocation2 + $0x28] sm:$0x1]
        %v694 = vld [vmem:[#allocation2 + $0x30] sm:$0x1]
        %v695 = vld [vmem:[#allocation2 + $0x38] sm:$0x1]
        %v696 = vld [vmem:[#allocation2 + $0x40] sm:$0xfe]
        %v697 = vld [vmem:[#allocation2 + $0x48] sm:$0xfe]
        %v698 = vld [vmem:[#allocation2 + $0x50] sm:$0xfe]
        %v699 = vld [vmem:[#allocation2 + $0x58] sm:$0xfe]
        %v700 = vld [vmem:[#allocation2 + $0x60] sm:$0x1]
        %v701 = vld [vmem:[#allocation2 + $0x68] sm:$0x1]
        %v702 = vld [vmem:[#allocation2 + $0x70] sm:$0x1]
        %v703 = vld [vmem:[#allocation2 + $0x78] sm:$0x1]
        %v704 = vld [vmem:[#allocation2 + $0x80] sm:$0xfe]
        %v705 = vld [vmem:[#allocation2 + $0x88] sm:$0xfe]
        %v706 = vld [vmem:[#allocation2 + $0x90] sm:$0xfe]
        %v707 = vld [vmem:[#allocation2 + $0x98] sm:$0xfe]
        %v708 = vld [vmem:[#allocation2 + $0xa0] sm:$0x1]
        %v709 = vld [vmem:[#allocation2 + $0xa8] sm:$0x1]
        %v710 = vld [vmem:[#allocation2 + $0xb0] sm:$0x1]
        %v711 = vld [vmem:[#allocation2 + $0xb8] sm:$0x1]
        %v712 = vld [vmem:[#allocation2 + $0xc0] sm:$0xfe]
        %v713 = vld [vmem:[#allocation2 + $0xc8] sm:$0xfe]
        %v714 = vld [vmem:[#allocation2 + $0xd0] sm:$0xfe]
        %v715 = vld [vmem:[#allocation2 + $0xd8] sm:$0xfe]
        %v716 = vld [vmem:[#allocation2 + $0xe0] sm:$0x1]
        %v717 = vld [vmem:[#allocation2 + $0xe8] sm:$0x1]
        %v718 = vld [vmem:[#allocation2 + $0xf0] sm:$0x1]
        %v719 = vld [vmem:[#allocation2 + $0xf8] sm:$0x1]
        %v720 = vld [vmem:[#allocation2 + $0x100] sm:$0xfe]
        %v721 = vld [vmem:[#allocation2 + $0x108] sm:$0xfe]
        %v722 = vld [vmem:[#allocation2 + $0x110] sm:$0xfe]
        %v723 = vld [vmem:[#allocation2 + $0x118] sm:$0xfe]
        %v724 = vld [vmem:[#allocation2 + $0x120] sm:$0x1]
        %v725 = vld [vmem:[#allocation2 + $0x128] sm:$0x1]
        %v726 = vld [vmem:[#allocation2 + $0x130] sm:$0x1]
        %v727 = vld [vmem:[#allocation2 + $0x138] sm:$0x1]
        %v728 = vld [vmem:[#allocation2 + $0x140] sm:$0xfe]
        %v729 = vld [vmem:[#allocation2 + $0x148] sm:$0xfe]
        %v730 = vld [vmem:[#allocation2 + $0x150] sm:$0xfe]
        %v731 = vld [vmem:[#allocation2 + $0x158] sm:$0xfe]
        %v732 = vld [vmem:[#allocation2 + $0x160] sm:$0x1]
        %v733 = vld [vmem:[#allocation2 + $0x168] sm:$0x1]
        %v734 = vld [vmem:[#allocation2 + $0x170] sm:$0x1]
        %v735 = vld [vmem:[#allocation2 + $0x178] sm:$0x1]
        %v736 = vld [vmem:[#allocation2 + $0x180] sm:$0xfe]
        %v737 = vld [vmem:[#allocation2 + $0x188] sm:$0xfe]
        %v738 = vld [vmem:[#allocation2 + $0x190] sm:$0xfe]
        %v739 = vld [vmem:[#allocation2 + $0x198] sm:$0xfe]
        %v740 = vld [vmem:[#allocation2 + $0x1a0] sm:$0x1]
        %v741 = vld [vmem:[#allocation2 + $0x1a8] sm:$0x1]
        %v742 = vld [vmem:[#allocation2 + $0x1b0] sm:$0x1]
        %v743 = vld [vmem:[#allocation2 + $0x1b8] sm:$0x1]
        %v744 = vld [vmem:[#allocation2 + $0x1c0] sm:$0xfe]
        %v745 = vld [vmem:[#allocation2 + $0x1c8] sm:$0xfe]
        %v746 = vld [vmem:[#allocation2 + $0x1d0] sm:$0xfe]
        %v747 = vld [vmem:[#allocation2 + $0x1d8] sm:$0xfe]
        %v748 = vld [vmem:[#allocation2 + $0x1e0] sm:$0x1]
        %v749 = vld [vmem:[#allocation2 + $0x1e8] sm:$0x1]
        %v750 = vld [vmem:[#allocation2 + $0x1f0] sm:$0x1]
        %v751 = vld [vmem:[#allocation2 + $0x1f8] sm:$0x1]
        %vm816 = vcmask 1046528
        %v817 = vrot.slane %v688, 1
        %v818 = vrot.slane %v692, 1
        %v819 = vsel %vm816, %v817, %v818
        %v820 = vrot.slane %v689, 1
        %v821 = vrot.slane %v693, 1
        %v822 = vsel %vm816, %v820, %v821
        %v823 = vrot.slane %v690, 1
        %v824 = vrot.slane %v694, 1
        %v825 = vsel %vm816, %v823, %v824
        %v826 = vrot.slane %v691, 1
        %v827 = vrot.slane %v695, 1
        %v828 = vsel %vm816, %v826, %v827
        %v829 = vrot.slane %v696, 1
        %v830 = vrot.slane %v700, 1
        %v831 = vsel %vm816, %v829, %v830
        %v832 = vrot.slane %v697, 1
        %v833 = vrot.slane %v701, 1
        %v834 = vsel %vm816, %v832, %v833
        %v835 = vrot.slane %v698, 1
        %v836 = vrot.slane %v702, 1
        %v837 = vsel %vm816, %v835, %v836
        %v838 = vrot.slane %v699, 1
        %v839 = vrot.slane %v703, 1
        %v840 = vsel %vm816, %v838, %v839
        %v841 = vrot.slane %v704, 1
        %v842 = vrot.slane %v708, 1
        %v843 = vsel %vm816, %v841, %v842
        %v844 = vrot.slane %v705, 1
        %v845 = vrot.slane %v709, 1
        %v846 = vsel %vm816, %v844, %v845
        %v847 = vrot.slane %v706, 1
        %v848 = vrot.slane %v710, 1
        %v849 = vsel %vm816, %v847, %v848
        %v850 = vrot.slane %v707, 1
        %v851 = vrot.slane %v711, 1
        %v852 = vsel %vm816, %v850, %v851
        %v853 = vrot.slane %v712, 1
        %v854 = vrot.slane %v716, 1
        %v855 = vsel %vm816, %v853, %v854
        %v856 = vrot.slane %v713, 1
        %v857 = vrot.slane %v717, 1
        %v858 = vsel %vm816, %v856, %v857
        %v859 = vrot.slane %v714, 1
        %v860 = vrot.slane %v718, 1
        %v861 = vsel %vm816, %v859, %v860
        %v862 = vrot.slane %v715, 1
        %v863 = vrot.slane %v719, 1
        %v864 = vsel %vm816, %v862, %v863
        %v865 = vrot.slane %v720, 1
        %v866 = vrot.slane %v724, 1
        %v867 = vsel %vm816, %v865, %v866
        %v868 = vrot.slane %v721, 1
        %v869 = vrot.slane %v725, 1
        %v870 = vsel %vm816, %v868, %v869
        %v871 = vrot.slane %v722, 1
        %v872 = vrot.slane %v726, 1
        %v873 = vsel %vm816, %v871, %v872
        %v874 = vrot.slane %v723, 1
        %v875 = vrot.slane %v727, 1
        %v876 = vsel %vm816, %v874, %v875
        %v877 = vrot.slane %v728, 1
        %v878 = vrot.slane %v732, 1
        %v879 = vsel %vm816, %v877, %v878
        %v880 = vrot.slane %v729, 1
        %v881 = vrot.slane %v733, 1
        %v882 = vsel %vm816, %v880, %v881
        %v883 = vrot.slane %v730, 1
        %v884 = vrot.slane %v734, 1
        %v885 = vsel %vm816, %v883, %v884
        %v886 = vrot.slane %v731, 1
        %v887 = vrot.slane %v735, 1
        %v888 = vsel %vm816, %v886, %v887
        %v889 = vrot.slane %v736, 1
        %v890 = vrot.slane %v740, 1
        %v891 = vsel %vm816, %v889, %v890
        %v892 = vrot.slane %v737, 1
        %v893 = vrot.slane %v741, 1
        %v894 = vsel %vm816, %v892, %v893
        %v895 = vrot.slane %v738, 1
        %v896 = vrot.slane %v742, 1
        %v897 = vsel %vm816, %v895, %v896
        %v898 = vrot.slane %v739, 1
        %v899 = vrot.slane %v743, 1
        %v900 = vsel %vm816, %v898, %v899
        %v901 = vrot.slane %v744, 1
        %v902 = vrot.slane %v748, 1
        %v903 = vsel %vm816, %v901, %v902
        %v904 = vrot.slane %v745, 1
        %v905 = vrot.slane %v749, 1
        %v906 = vsel %vm816, %v904, %v905
        %v907 = vrot.slane %v746, 1
        %v908 = vrot.slane %v750, 1
        %v909 = vsel %vm816, %v907, %v908
        %v910 = vrot.slane %v747, 1
        %v911 = vrot.slane %v751, 1
        %v912 = vsel %vm816, %v910, %v911
        %s945 = scalar_lea.vmem %s1, 1024
        %v946 = vld [vmem:[%s945] sm:$0xff]
        %v947 = vld [vmem:[%s945 + $0x8] sm:$0xff]
        %v948 = vld [vmem:[%s945 + $0x10] sm:$0xff]
        %v949 = vld [vmem:[%s945 + $0x18] sm:$0xff]
        %v950 = vld [vmem:[%s945 + $0x20] sm:$0xff]
        %v951 = vld [vmem:[%s945 + $0x28] sm:$0xff]
        %v952 = vld [vmem:[%s945 + $0x30] sm:$0xff]
        %v953 = vld [vmem:[%s945 + $0x38] sm:$0xff]
        %v954 = vld [vmem:[%s945 + $0x40] sm:$0xff]
        %v955 = vld [vmem:[%s945 + $0x48] sm:$0xff]
        %v956 = vld [vmem:[%s945 + $0x50] sm:$0xff]
        %v957 = vld [vmem:[%s945 + $0x58] sm:$0xff]
        %v958 = vld [vmem:[%s945 + $0x60] sm:$0xff]
        %v959 = vld [vmem:[%s945 + $0x68] sm:$0xff]
        %v960 = vld [vmem:[%s945 + $0x70] sm:$0xff]
        %v961 = vld [vmem:[%s945 + $0x78] sm:$0xff]
        %v962 = vld [vmem:[%s945 + $0x80] sm:$0xff]
        %v963 = vld [vmem:[%s945 + $0x88] sm:$0xff]
        %v964 = vld [vmem:[%s945 + $0x90] sm:$0xff]
        %v965 = vld [vmem:[%s945 + $0x98] sm:$0xff]
        %v966 = vld [vmem:[%s945 + $0xa0] sm:$0xff]
        %v967 = vld [vmem:[%s945 + $0xa8] sm:$0xff]
        %v968 = vld [vmem:[%s945 + $0xb0] sm:$0xff]
        %v969 = vld [vmem:[%s945 + $0xb8] sm:$0xff]
        %v970 = vld [vmem:[%s945 + $0xc0] sm:$0xff]
        %v971 = vld [vmem:[%s945 + $0xc8] sm:$0xff]
        %v972 = vld [vmem:[%s945 + $0xd0] sm:$0xff]
        %v973 = vld [vmem:[%s945 + $0xd8] sm:$0xff]
        %v974 = vld [vmem:[%s945 + $0xe0] sm:$0xff]
        %v975 = vld [vmem:[%s945 + $0xe8] sm:$0xff]
        %v976 = vld [vmem:[%s945 + $0xf0] sm:$0xff]
        %v977 = vld [vmem:[%s945 + $0xf8] sm:$0xff]
        %v978 = vld [vmem:[%s945 + $0x100] sm:$0xff]
        %v979 = vld [vmem:[%s945 + $0x108] sm:$0xff]
        %v980 = vld [vmem:[%s945 + $0x110] sm:$0xff]
        %v981 = vld [vmem:[%s945 + $0x118] sm:$0xff]
        %v982 = vld [vmem:[%s945 + $0x120] sm:$0xff]
        %v983 = vld [vmem:[%s945 + $0x128] sm:$0xff]
        %v984 = vld [vmem:[%s945 + $0x130] sm:$0xff]
        %v985 = vld [vmem:[%s945 + $0x138] sm:$0xff]
        %v986 = vld [vmem:[%s945 + $0x140] sm:$0xff]
        %v987 = vld [vmem:[%s945 + $0x148] sm:$0xff]
        %v988 = vld [vmem:[%s945 + $0x150] sm:$0xff]
        %v989 = vld [vmem:[%s945 + $0x158] sm:$0xff]
        %v990 = vld [vmem:[%s945 + $0x160] sm:$0xff]
        %v991 = vld [vmem:[%s945 + $0x168] sm:$0xff]
        %v992 = vld [vmem:[%s945 + $0x170] sm:$0xff]
        %v993 = vld [vmem:[%s945 + $0x178] sm:$0xff]
        %v994 = vld [vmem:[%s945 + $0x180] sm:$0xff]
        %v995 = vld [vmem:[%s945 + $0x188] sm:$0xff]
        %v996 = vld [vmem:[%s945 + $0x190] sm:$0xff]
        %v997 = vld [vmem:[%s945 + $0x198] sm:$0xff]
        %v998 = vld [vmem:[%s945 + $0x1a0] sm:$0xff]
        %v999 = vld [vmem:[%s945 + $0x1a8] sm:$0xff]
        %v1000 = vld [vmem:[%s945 + $0x1b0] sm:$0xff]
        %v1001 = vld [vmem:[%s945 + $0x1b8] sm:$0xff]
        %v1002 = vld [vmem:[%s945 + $0x1c0] sm:$0xff]
        %v1003 = vld [vmem:[%s945 + $0x1c8] sm:$0xff]
        %v1004 = vld [vmem:[%s945 + $0x1d0] sm:$0xff]
        %v1005 = vld [vmem:[%s945 + $0x1d8] sm:$0xff]
        %v1006 = vld [vmem:[%s945 + $0x1e0] sm:$0xff]
        %v1007 = vld [vmem:[%s945 + $0x1e8] sm:$0xff]
        %v1008 = vld [vmem:[%s945 + $0x1f0] sm:$0xff]
        %v1009 = vld [vmem:[%s945 + $0x1f8] sm:$0xff]
        %v1010 = vld [vmem:[%s945 + $0x200] sm:$0xff]
        %v1011 = vld [vmem:[%s945 + $0x208] sm:$0xff]
        %v1012 = vld [vmem:[%s945 + $0x210] sm:$0xff]
        %v1013 = vld [vmem:[%s945 + $0x218] sm:$0xff]
        %v1014 = vld [vmem:[%s945 + $0x220] sm:$0xff]
        %v1015 = vld [vmem:[%s945 + $0x228] sm:$0xff]
        %v1016 = vld [vmem:[%s945 + $0x230] sm:$0xff]
        %v1017 = vld [vmem:[%s945 + $0x238] sm:$0xff]
        %v1018 = vld [vmem:[%s945 + $0x240] sm:$0xff]
        %v1019 = vld [vmem:[%s945 + $0x248] sm:$0xff]
        %v1020 = vld [vmem:[%s945 + $0x250] sm:$0xff]
        %v1021 = vld [vmem:[%s945 + $0x258] sm:$0xff]
        %v1022 = vld [vmem:[%s945 + $0x260] sm:$0xff]
        %v1023 = vld [vmem:[%s945 + $0x268] sm:$0xff]
        %v1024 = vld [vmem:[%s945 + $0x270] sm:$0xff]
        %v1025 = vld [vmem:[%s945 + $0x278] sm:$0xff]
        %v1026 = vld [vmem:[%s945 + $0x280] sm:$0xff]
        %v1027 = vld [vmem:[%s945 + $0x288] sm:$0xff]
        %v1028 = vld [vmem:[%s945 + $0x290] sm:$0xff]
        %v1029 = vld [vmem:[%s945 + $0x298] sm:$0xff]
        %v1030 = vld [vmem:[%s945 + $0x2a0] sm:$0xff]
        %v1031 = vld [vmem:[%s945 + $0x2a8] sm:$0xff]
        %v1032 = vld [vmem:[%s945 + $0x2b0] sm:$0xff]
        %v1033 = vld [vmem:[%s945 + $0x2b8] sm:$0xff]
        %v1034 = vld [vmem:[%s945 + $0x2c0] sm:$0xff]
        %v1035 = vld [vmem:[%s945 + $0x2c8] sm:$0xff]
        %v1036 = vld [vmem:[%s945 + $0x2d0] sm:$0xff]
        %v1037 = vld [vmem:[%s945 + $0x2d8] sm:$0xff]
        %v1038 = vld [vmem:[%s945 + $0x2e0] sm:$0xff]
        %v1039 = vld [vmem:[%s945 + $0x2e8] sm:$0xff]
        %v1040 = vld [vmem:[%s945 + $0x2f0] sm:$0xff]
        %v1041 = vld [vmem:[%s945 + $0x2f8] sm:$0xff]
        %v1042 = vld [vmem:[%s945 + $0x300] sm:$0xff]
        %v1043 = vld [vmem:[%s945 + $0x308] sm:$0xff]
        %v1044 = vld [vmem:[%s945 + $0x310] sm:$0xff]
        %v1045 = vld [vmem:[%s945 + $0x318] sm:$0xff]
        %v1046 = vld [vmem:[%s945 + $0x320] sm:$0xff]
        %v1047 = vld [vmem:[%s945 + $0x328] sm:$0xff]
        %v1048 = vld [vmem:[%s945 + $0x330] sm:$0xff]
        %v1049 = vld [vmem:[%s945 + $0x338] sm:$0xff]
        %v1050 = vld [vmem:[%s945 + $0x340] sm:$0xff]
        %v1051 = vld [vmem:[%s945 + $0x348] sm:$0xff]
        %v1052 = vld [vmem:[%s945 + $0x350] sm:$0xff]
        %v1053 = vld [vmem:[%s945 + $0x358] sm:$0xff]
        %v1054 = vld [vmem:[%s945 + $0x360] sm:$0xff]
        %v1055 = vld [vmem:[%s945 + $0x368] sm:$0xff]
        %v1056 = vld [vmem:[%s945 + $0x370] sm:$0xff]
        %v1057 = vld [vmem:[%s945 + $0x378] sm:$0xff]
        %v1058 = vld [vmem:[%s945 + $0x380] sm:$0xff]
        %v1059 = vld [vmem:[%s945 + $0x388] sm:$0xff]
        %v1060 = vld [vmem:[%s945 + $0x390] sm:$0xff]
        %v1061 = vld [vmem:[%s945 + $0x398] sm:$0xff]
        %v1062 = vld [vmem:[%s945 + $0x3a0] sm:$0xff]
        %v1063 = vld [vmem:[%s945 + $0x3a8] sm:$0xff]
        %v1064 = vld [vmem:[%s945 + $0x3b0] sm:$0xff]
        %v1065 = vld [vmem:[%s945 + $0x3b8] sm:$0xff]
        %v1066 = vld [vmem:[%s945 + $0x3c0] sm:$0xff]
        %v1067 = vld [vmem:[%s945 + $0x3c8] sm:$0xff]
        %v1068 = vld [vmem:[%s945 + $0x3d0] sm:$0xff]
        %v1069 = vld [vmem:[%s945 + $0x3d8] sm:$0xff]
        %v1070 = vld [vmem:[%s945 + $0x3e0] sm:$0xff]
        %v1071 = vld [vmem:[%s945 + $0x3e8] sm:$0xff]
        %v1072 = vld [vmem:[%s945 + $0x3f0] sm:$0xff]
        %v1073 = vld [vmem:[%s945 + $0x3f8] sm:$0xff]
        %1074 = vmatprep.subr.mxu0 %v947
        %1075 = vmatpush1.msra.mxu0 %v946
        %1076 = vmatprep.subr.mxu0 %v949
        %1077 = vmatpush1.msra.mxu0 %v948
        %1078 = vmatprep.subr.mxu0 %v951
        %1079 = vmatpush1.msra.mxu0 %v950
        %1080 = vmatprep.subr.mxu0 %v953
        %1081 = vmatpush1.msra.mxu0 %v952
        %1082 = vmatprep.subr.mxu0 %v955
        %1083 = vmatpush1.msra.mxu0 %v954
        %1084 = vmatprep.subr.mxu0 %v957
        %1085 = vmatpush1.msra.mxu0 %v956
        %1086 = vmatprep.subr.mxu0 %v959
        %1087 = vmatpush1.msra.mxu0 %v958
        %1088 = vmatprep.subr.mxu0 %v961
        %1089 = vmatpush1.msra.mxu0 %v960
        %1090 = vmatprep.subr.mxu0 %v963
        %1091 = vmatpush1.msra.mxu0 %v962
        %1092 = vmatprep.subr.mxu0 %v965
        %1093 = vmatpush1.msra.mxu0 %v964
        %1094 = vmatprep.subr.mxu0 %v967
        %1095 = vmatpush1.msra.mxu0 %v966
        %1096 = vmatprep.subr.mxu0 %v969
        %1097 = vmatpush1.msra.mxu0 %v968
        %1098 = vmatprep.subr.mxu0 %v971
        %1099 = vmatpush1.msra.mxu0 %v970
        %1100 = vmatprep.subr.mxu0 %v973
        %1101 = vmatpush1.msra.mxu0 %v972
        %1102 = vmatprep.subr.mxu0 %v975
        %1103 = vmatpush1.msra.mxu0 %v974
        %1104 = vmatprep.subr.mxu0 %v977
        %1105 = vmatpush1.msra.mxu0 %v976
        %1106 = vmatprep.subr.mxu0 %v979
        %1107 = vmatpush1.msra.mxu0 %v978
        %1108 = vmatprep.subr.mxu0 %v981
        %1109 = vmatpush1.msra.mxu0 %v980
        %1110 = vmatprep.subr.mxu0 %v983
        %1111 = vmatpush1.msra.mxu0 %v982
        %1112 = vmatprep.subr.mxu0 %v985
        %1113 = vmatpush1.msra.mxu0 %v984
        %1114 = vmatprep.subr.mxu0 %v987
        %1115 = vmatpush1.msra.mxu0 %v986
        %1116 = vmatprep.subr.mxu0 %v989
        %1117 = vmatpush1.msra.mxu0 %v988
        %1118 = vmatprep.subr.mxu0 %v991
        %1119 = vmatpush1.msra.mxu0 %v990
        %1120 = vmatprep.subr.mxu0 %v993
        %1121 = vmatpush1.msra.mxu0 %v992
        %1122 = vmatprep.subr.mxu0 %v995
        %1123 = vmatpush1.msra.mxu0 %v994
        %1124 = vmatprep.subr.mxu0 %v997
        %1125 = vmatpush1.msra.mxu0 %v996
        %1126 = vmatprep.subr.mxu0 %v999
        %1127 = vmatpush1.msra.mxu0 %v998
        %1128 = vmatprep.subr.mxu0 %v1001
        %1129 = vmatpush1.msra.mxu0 %v1000
        %1130 = vmatprep.subr.mxu0 %v1003
        %1131 = vmatpush1.msra.mxu0 %v1002
        %1132 = vmatprep.subr.mxu0 %v1005
        %1133 = vmatpush1.msra.mxu0 %v1004
        %1134 = vmatprep.subr.mxu0 %v1007
        %1135 = vmatpush1.msra.mxu0 %v1006
        %1136 = vmatprep.subr.mxu0 %v1009
        %1137 = vmatpush1.msra.mxu0 %v1008
        %1138 = vmatprep.mubr.f32.mxu0 %v822
        %1139 = vmatmul.mubr.f32.gmra.mrb[0].mxu0 %v819
        %v1140 = vpop.f32.mrb[0].mxu0
        %v1141 = vadd.f32 0.0, %v1140
        %v1142 = vpop.f32.mrb[0].mxu0
        %v1143 = vadd.f32 0.0, %v1142
        %1144 = vmatprep.mubr.f32.mxu0 %v834
        %1145 = vmatmul.mubr.f32.gmra.mrb[0].mxu0 %v831
        %v1146 = vpop.f32.mrb[0].mxu0
        %v1147 = vadd.f32 0.0, %v1146
        %v1148 = vpop.f32.mrb[0].mxu0
        %v1149 = vadd.f32 0.0, %v1148
        %1150 = vmatprep.mubr.f32.mxu0 %v846
        %1151 = vmatmul.mubr.f32.gmra.mrb[0].mxu0 %v843
        %v1152 = vpop.f32.mrb[0].mxu0
        %v1153 = vadd.f32 0.0, %v1152
        %v1154 = vpop.f32.mrb[0].mxu0
        %v1155 = vadd.f32 0.0, %v1154
        %1156 = vmatprep.mubr.f32.mxu0 %v858
        %1157 = vmatmul.mubr.f32.gmra.mrb[0].mxu0 %v855
        %v1158 = vpop.f32.mrb[0].mxu0
        %v1159 = vadd.f32 0.0, %v1158
        %v1160 = vpop.f32.mrb[0].mxu0
        %v1161 = vadd.f32 0.0, %v1160
        %1162 = vmatprep.mubr.f32.mxu0 %v870
        %1163 = vmatmul.mubr.f32.gmra.mrb[0].mxu0 %v867
        %v1164 = vpop.f32.mrb[0].mxu0
        %v1165 = vadd.f32 0.0, %v1164
        %v1166 = vpop.f32.mrb[0].mxu0
        %v1167 = vadd.f32 0.0, %v1166
        %1168 = vmatprep.mubr.f32.mxu0 %v882
        %1169 = vmatmul.mubr.f32.gmra.mrb[0].mxu0 %v879
        %v1170 = vpop.f32.mrb[0].mxu0
        %v1171 = vadd.f32 0.0, %v1170
        %v1172 = vpop.f32.mrb[0].mxu0
        %v1173 = vadd.f32 0.0, %v1172
        %1174 = vmatprep.mubr.f32.mxu0 %v894
        %1175 = vmatmul.mubr.f32.gmra.mrb[0].mxu0 %v891
        %v1176 = vpop.f32.mrb[0].mxu0
        %v1177 = vadd.f32 0.0, %v1176
        %v1178 = vpop.f32.mrb[0].mxu0
        %v1179 = vadd.f32 0.0, %v1178
        %1180 = vmatprep.mubr.f32.mxu0 %v906
        %1181 = vmatmul.mubr.f32.gmra.mrb[0].mxu0 %v903
        %v1182 = vpop.f32.mrb[0].mxu0
        %v1183 = vadd.f32 0.0, %v1182
        %v1184 = vpop.f32.mrb[0].mxu0
        %v1185 = vadd.f32 0.0, %v1184
        %1186 = vdwg.mxu0
        %1187 = vmatprep.subr.mxu0 %v1011
        %1188 = vmatpush1.msra.mxu0 %v1010
        %1189 = vmatprep.subr.mxu0 %v1013
        %1190 = vmatpush1.msra.mxu0 %v1012
        %1191 = vmatprep.subr.mxu0 %v1015
        %1192 = vmatpush1.msra.mxu0 %v1014
        %1193 = vmatprep.subr.mxu0 %v1017
        %1194 = vmatpush1.msra.mxu0 %v1016
        %1195 = vmatprep.subr.mxu0 %v1019
        %1196 = vmatpush1.msra.mxu0 %v1018
        %1197 = vmatprep.subr.mxu0 %v1021
        %1198 = vmatpush1.msra.mxu0 %v1020
        %1199 = vmatprep.subr.mxu0 %v1023
        %1200 = vmatpush1.msra.mxu0 %v1022
        %1201 = vmatprep.subr.mxu0 %v1025
        %1202 = vmatpush1.msra.mxu0 %v1024
        %1203 = vmatprep.subr.mxu0 %v1027
        %1204 = vmatpush1.msra.mxu0 %v1026
        %1205 = vmatprep.subr.mxu0 %v1029
        %1206 = vmatpush1.msra.mxu0 %v1028
        %1207 = vmatprep.subr.mxu0 %v1031
        %1208 = vmatpush1.msra.mxu0 %v1030
        %1209 = vmatprep.subr.mxu0 %v1033
        %1210 = vmatpush1.msra.mxu0 %v1032
        %1211 = vmatprep.subr.mxu0 %v1035
        %1212 = vmatpush1.msra.mxu0 %v1034
        %1213 = vmatprep.subr.mxu0 %v1037
        %1214 = vmatpush1.msra.mxu0 %v1036
        %1215 = vmatprep.subr.mxu0 %v1039
        %1216 = vmatpush1.msra.mxu0 %v1038
        %1217 = vmatprep.subr.mxu0 %v1041
        %1218 = vmatpush1.msra.mxu0 %v1040
        %1219 = vmatprep.subr.mxu0 %v1043
        %1220 = vmatpush1.msra.mxu0 %v1042
        %1221 = vmatprep.subr.mxu0 %v1045
        %1222 = vmatpush1.msra.mxu0 %v1044
        %1223 = vmatprep.subr.mxu0 %v1047
        %1224 = vmatpush1.msra.mxu0 %v1046
        %1225 = vmatprep.subr.mxu0 %v1049
        %1226 = vmatpush1.msra.mxu0 %v1048
        %1227 = vmatprep.subr.mxu0 %v1051
        %1228 = vmatpush1.msra.mxu0 %v1050
        %1229 = vmatprep.subr.mxu0 %v1053
        %1230 = vmatpush1.msra.mxu0 %v1052
        %1231 = vmatprep.subr.mxu0 %v1055
        %1232 = vmatpush1.msra.mxu0 %v1054
        %1233 = vmatprep.subr.mxu0 %v1057
        %1234 = vmatpush1.msra.mxu0 %v1056
        %1235 = vmatprep.subr.mxu0 %v1059
        %1236 = vmatpush1.msra.mxu0 %v1058
        %1237 = vmatprep.subr.mxu0 %v1061
        %1238 = vmatpush1.msra.mxu0 %v1060
        %1239 = vmatprep.subr.mxu0 %v1063
        %1240 = vmatpush1.msra.mxu0 %v1062
        %1241 = vmatprep.subr.mxu0 %v1065
        %1242 = vmatpush1.msra.mxu0 %v1064
        %1243 = vmatprep.subr.mxu0 %v1067
        %1244 = vmatpush1.msra.mxu0 %v1066
        %1245 = vmatprep.subr.mxu0 %v1069
        %1246 = vmatpush1.msra.mxu0 %v1068
        %1247 = vmatprep.subr.mxu0 %v1071
        %1248 = vmatpush1.msra.mxu0 %v1070
        %1249 = vmatprep.subr.mxu0 %v1073
        %1250 = vmatpush1.msra.mxu0 %v1072
        %1251 = vmatprep.mubr.f32.mxu0 %v828
        %1252 = vmatmul.mubr.f32.gmra.mrb[0].mxu0 %v825
        %v1253 = vpop.f32.mrb[0].mxu0
        %v1254 = vadd.f32 %v1141, %v1253
        %v1255 = vpop.f32.mrb[0].mxu0
        %v1256 = vadd.f32 %v1143, %v1255
        %1257 = vmatprep.mubr.f32.mxu0 %v840
        %1258 = vmatmul.mubr.f32.gmra.mrb[0].mxu0 %v837
        %v1259 = vpop.f32.mrb[0].mxu0
        %v1260 = vadd.f32 %v1147, %v1259
        %v1261 = vpop.f32.mrb[0].mxu0
        %v1262 = vadd.f32 %v1149, %v1261
        %1263 = vmatprep.mubr.f32.mxu0 %v852
        %1264 = vmatmul.mubr.f32.gmra.mrb[0].mxu0 %v849
        %v1265 = vpop.f32.mrb[0].mxu0
        %v1266 = vadd.f32 %v1153, %v1265
        %v1267 = vpop.f32.mrb[0].mxu0
        %v1268 = vadd.f32 %v1155, %v1267
        %1269 = vmatprep.mubr.f32.mxu0 %v864
        %1270 = vmatmul.mubr.f32.gmra.mrb[0].mxu0 %v861
        %v1271 = vpop.f32.mrb[0].mxu0
        %v1272 = vadd.f32 %v1159, %v1271
        %v1273 = vpop.f32.mrb[0].mxu0
        %v1274 = vadd.f32 %v1161, %v1273
        %1275 = vmatprep.mubr.f32.mxu0 %v876
        %1276 = vmatmul.mubr.f32.gmra.mrb[0].mxu0 %v873
        %v1277 = vpop.f32.mrb[0].mxu0
        %v1278 = vadd.f32 %v1165, %v1277
        %v1279 = vpop.f32.mrb[0].mxu0
        %v1280 = vadd.f32 %v1167, %v1279
        %1281 = vmatprep.mubr.f32.mxu0 %v888
        %1282 = vmatmul.mubr.f32.gmra.mrb[0].mxu0 %v885
        %v1283 = vpop.f32.mrb[0].mxu0
        %v1284 = vadd.f32 %v1171, %v1283
        %v1285 = vpop.f32.mrb[0].mxu0
        %v1286 = vadd.f32 %v1173, %v1285
        %1287 = vmatprep.mubr.f32.mxu0 %v900
        %1288 = vmatmul.mubr.f32.gmra.mrb[0].mxu0 %v897
        %v1289 = vpop.f32.mrb[0].mxu0
        %v1290 = vadd.f32 %v1177, %v1289
        %v1291 = vpop.f32.mrb[0].mxu0
        %v1292 = vadd.f32 %v1179, %v1291
        %1293 = vmatprep.mubr.f32.mxu0 %v912
        %1294 = vmatmul.mubr.f32.gmra.mrb[0].mxu0 %v909
        %v1295 = vpop.f32.mrb[0].mxu0
        %v1296 = vadd.f32 %v1183, %v1295
        %v1297 = vpop.f32.mrb[0].mxu0
        %v1298 = vadd.f32 %v1185, %v1297
        %1299 = vdwg.mxu0
        %1300 = vmatprep.subr.mxu0 %v561
        %1301 = vmatpush1.msra.mxu0 %v560
        %1302 = vmatprep.subr.mxu0 %v563
        %1303 = vmatpush1.msra.mxu0 %v562
        %1304 = vmatprep.subr.mxu0 %v565
        %1305 = vmatpush1.msra.mxu0 %v564
        %1306 = vmatprep.subr.mxu0 %v567
        %1307 = vmatpush1.msra.mxu0 %v566
        %1308 = vmatprep.subr.mxu0 %v569
        %1309 = vmatpush1.msra.mxu0 %v568
        %1310 = vmatprep.subr.mxu0 %v571
        %1311 = vmatpush1.msra.mxu0 %v570
        %1312 = vmatprep.subr.mxu0 %v573
        %1313 = vmatpush1.msra.mxu0 %v572
        %1314 = vmatprep.subr.mxu0 %v575
        %1315 = vmatpush1.msra.mxu0 %v574
        %1316 = vmatprep.subr.mxu0 %v577
        %1317 = vmatpush1.msra.mxu0 %v576
        %1318 = vmatprep.subr.mxu0 %v579
        %1319 = vmatpush1.msra.mxu0 %v578
        %1320 = vmatprep.subr.mxu0 %v581
        %1321 = vmatpush1.msra.mxu0 %v580
        %1322 = vmatprep.subr.mxu0 %v583
        %1323 = vmatpush1.msra.mxu0 %v582
        %1324 = vmatprep.subr.mxu0 %v585
        %1325 = vmatpush1.msra.mxu0 %v584
        %1326 = vmatprep.subr.mxu0 %v587
        %1327 = vmatpush1.msra.mxu0 %v586
        %1328 = vmatprep.subr.mxu0 %v589
        %1329 = vmatpush1.msra.mxu0 %v588
        %1330 = vmatprep.subr.mxu0 %v591
        %1331 = vmatpush1.msra.mxu0 %v590
        %1332 = vmatprep.subr.mxu0 %v593
        %1333 = vmatpush1.msra.mxu0 %v592
        %1334 = vmatprep.subr.mxu0 %v595
        %1335 = vmatpush1.msra.mxu0 %v594
        %1336 = vmatprep.subr.mxu0 %v597
        %1337 = vmatpush1.msra.mxu0 %v596
        %1338 = vmatprep.subr.mxu0 %v599
        %1339 = vmatpush1.msra.mxu0 %v598
        %1340 = vmatprep.subr.mxu0 %v601
        %1341 = vmatpush1.msra.mxu0 %v600
        %1342 = vmatprep.subr.mxu0 %v603
        %1343 = vmatpush1.msra.mxu0 %v602
        %1344 = vmatprep.subr.mxu0 %v605
        %1345 = vmatpush1.msra.mxu0 %v604
        %1346 = vmatprep.subr.mxu0 %v607
        %1347 = vmatpush1.msra.mxu0 %v606
        %1348 = vmatprep.subr.mxu0 %v609
        %1349 = vmatpush1.msra.mxu0 %v608
        %1350 = vmatprep.subr.mxu0 %v611
        %1351 = vmatpush1.msra.mxu0 %v610
        %1352 = vmatprep.subr.mxu0 %v613
        %1353 = vmatpush1.msra.mxu0 %v612
        %1354 = vmatprep.subr.mxu0 %v615
        %1355 = vmatpush1.msra.mxu0 %v614
        %1356 = vmatprep.subr.mxu0 %v617
        %1357 = vmatpush1.msra.mxu0 %v616
        %1358 = vmatprep.subr.mxu0 %v619
        %1359 = vmatpush1.msra.mxu0 %v618
        %1360 = vmatprep.subr.mxu0 %v621
        %1361 = vmatpush1.msra.mxu0 %v620
        %1362 = vmatprep.subr.mxu0 %v623
        %1363 = vmatpush1.msra.mxu0 %v622
        %1364 = vmatprep.mubr.f32.mxu0 %v529
        %1365 = vmatmul.mubr.f32.gmra.mrb[0].mxu0 %v528
        %v1366 = vpop.f32.mrb[0].mxu0
        %v1367 = vadd.f32 %v1254, %v1366
        %v1368 = vpop.f32.mrb[0].mxu0
        %v1369 = vadd.f32 %v1256, %v1368
        %1370 = vmatprep.mubr.f32.mxu0 %v533
        %1371 = vmatmul.mubr.f32.gmra.mrb[0].mxu0 %v532
        %v1372 = vpop.f32.mrb[0].mxu0
        %v1373 = vadd.f32 %v1260, %v1372
        %v1374 = vpop.f32.mrb[0].mxu0
        %v1375 = vadd.f32 %v1262, %v1374
        %1376 = vmatprep.mubr.f32.mxu0 %v537
        %1377 = vmatmul.mubr.f32.gmra.mrb[0].mxu0 %v536
        %v1378 = vpop.f32.mrb[0].mxu0
        %v1379 = vadd.f32 %v1266, %v1378
        %v1380 = vpop.f32.mrb[0].mxu0
        %v1381 = vadd.f32 %v1268, %v1380
        %1382 = vmatprep.mubr.f32.mxu0 %v541
        %1383 = vmatmul.mubr.f32.gmra.mrb[0].mxu0 %v540
        %v1384 = vpop.f32.mrb[0].mxu0
        %v1385 = vadd.f32 %v1272, %v1384
        %v1386 = vpop.f32.mrb[0].mxu0
        %v1387 = vadd.f32 %v1274, %v1386
        %1388 = vmatprep.mubr.f32.mxu0 %v545
        %1389 = vmatmul.mubr.f32.gmra.mrb[0].mxu0 %v544
        %v1390 = vpop.f32.mrb[0].mxu0
        %v1391 = vadd.f32 %v1278, %v1390
        %v1392 = vpop.f32.mrb[0].mxu0
        %v1393 = vadd.f32 %v1280, %v1392
        %1394 = vmatprep.mubr.f32.mxu0 %v549
        %1395 = vmatmul.mubr.f32.gmra.mrb[0].mxu0 %v548
        %v1396 = vpop.f32.mrb[0].mxu0
        %v1397 = vadd.f32 %v1284, %v1396
        %v1398 = vpop.f32.mrb[0].mxu0
        %v1399 = vadd.f32 %v1286, %v1398
        %1400 = vmatprep.mubr.f32.mxu0 %v553
        %1401 = vmatmul.mubr.f32.gmra.mrb[0].mxu0 %v552
        %v1402 = vpop.f32.mrb[0].mxu0
        %v1403 = vadd.f32 %v1290, %v1402
        %v1404 = vpop.f32.mrb[0].mxu0
        %v1405 = vadd.f32 %v1292, %v1404
        %1406 = vmatprep.mubr.f32.mxu0 %v557
        %1407 = vmatmul.mubr.f32.gmra.mrb[0].mxu0 %v556
        %v1408 = vpop.f32.mrb[0].mxu0
        %v1409 = vadd.f32 %v1296, %v1408
        %v1410 = vpop.f32.mrb[0].mxu0
        %v1411 = vadd.f32 %v1298, %v1410
        %1412 = vdwg.mxu0
        %1413 = vmatprep.subr.mxu0 %v625
        %1414 = vmatpush1.msra.mxu0 %v624
        %1415 = vmatprep.subr.mxu0 %v627
        %1416 = vmatpush1.msra.mxu0 %v626
        %1417 = vmatprep.subr.mxu0 %v629
        %1418 = vmatpush1.msra.mxu0 %v628
        %1419 = vmatprep.subr.mxu0 %v631
        %1420 = vmatpush1.msra.mxu0 %v630
        %1421 = vmatprep.subr.mxu0 %v633
        %1422 = vmatpush1.msra.mxu0 %v632
        %1423 = vmatprep.subr.mxu0 %v635
        %1424 = vmatpush1.msra.mxu0 %v634
        %1425 = vmatprep.subr.mxu0 %v637
        %1426 = vmatpush1.msra.mxu0 %v636
        %1427 = vmatprep.subr.mxu0 %v639
        %1428 = vmatpush1.msra.mxu0 %v638
        %1429 = vmatprep.subr.mxu0 %v641
        %1430 = vmatpush1.msra.mxu0 %v640
        %1431 = vmatprep.subr.mxu0 %v643
        %1432 = vmatpush1.msra.mxu0 %v642
        %1433 = vmatprep.subr.mxu0 %v645
        %1434 = vmatpush1.msra.mxu0 %v644
        %1435 = vmatprep.subr.mxu0 %v647
        %1436 = vmatpush1.msra.mxu0 %v646
        %1437 = vmatprep.subr.mxu0 %v649
        %1438 = vmatpush1.msra.mxu0 %v648
        %1439 = vmatprep.subr.mxu0 %v651
        %1440 = vmatpush1.msra.mxu0 %v650
        %1441 = vmatprep.subr.mxu0 %v653
        %1442 = vmatpush1.msra.mxu0 %v652
        %1443 = vmatprep.subr.mxu0 %v655
        %1444 = vmatpush1.msra.mxu0 %v654
        %1445 = vmatprep.subr.mxu0 %v657
        %1446 = vmatpush1.msra.mxu0 %v656
        %1447 = vmatprep.subr.mxu0 %v659
        %1448 = vmatpush1.msra.mxu0 %v658
        %1449 = vmatprep.subr.mxu0 %v661
        %1450 = vmatpush1.msra.mxu0 %v660
        %1451 = vmatprep.subr.mxu0 %v663
        %1452 = vmatpush1.msra.mxu0 %v662
        %1453 = vmatprep.subr.mxu0 %v665
        %1454 = vmatpush1.msra.mxu0 %v664
        %1455 = vmatprep.subr.mxu0 %v667
        %1456 = vmatpush1.msra.mxu0 %v666
        %1457 = vmatprep.subr.mxu0 %v669
        %1458 = vmatpush1.msra.mxu0 %v668
        %1459 = vmatprep.subr.mxu0 %v671
        %1460 = vmatpush1.msra.mxu0 %v670
        %1461 = vmatprep.subr.mxu0 %v673
        %1462 = vmatpush1.msra.mxu0 %v672
        %1463 = vmatprep.subr.mxu0 %v675
        %1464 = vmatpush1.msra.mxu0 %v674
        %1465 = vmatprep.subr.mxu0 %v677
        %1466 = vmatpush1.msra.mxu0 %v676
        %1467 = vmatprep.subr.mxu0 %v679
        %1468 = vmatpush1.msra.mxu0 %v678
        %1469 = vmatprep.subr.mxu0 %v681
        %1470 = vmatpush1.msra.mxu0 %v680
        %1471 = vmatprep.subr.mxu0 %v683
        %1472 = vmatpush1.msra.mxu0 %v682
        %1473 = vmatprep.subr.mxu0 %v685
        %1474 = vmatpush1.msra.mxu0 %v684
        %1475 = vmatprep.subr.mxu0 %v687
        %1476 = vmatpush1.msra.mxu0 %v686
        %1477 = vmatprep.mubr.f32.mxu0 %v531
        %1478 = vmatmul.mubr.f32.gmra.mrb[0].mxu0 %v530
        %v1479 = vpop.f32.mrb[0].mxu0
        %v1480 = vadd.f32 %v1367, %v1479
        %v1481 = vpop.f32.mrb[0].mxu0
        %v1482 = vadd.f32 %v1369, %v1481
        %1483 = vmatprep.mubr.f32.mxu0 %v535
        %1484 = vmatmul.mubr.f32.gmra.mrb[0].mxu0 %v534
        %v1485 = vpop.f32.mrb[0].mxu0
        %v1486 = vadd.f32 %v1373, %v1485
        %v1487 = vpop.f32.mrb[0].mxu0
        %v1488 = vadd.f32 %v1375, %v1487
        %1489 = vmatprep.mubr.f32.mxu0 %v539
        %1490 = vmatmul.mubr.f32.gmra.mrb[0].mxu0 %v538
        %v1491 = vpop.f32.mrb[0].mxu0
        %v1492 = vadd.f32 %v1379, %v1491
        %v1493 = vpop.f32.mrb[0].mxu0
        %v1494 = vadd.f32 %v1381, %v1493
        %1495 = vmatprep.mubr.f32.mxu0 %v543
        %1496 = vmatmul.mubr.f32.gmra.mrb[0].mxu0 %v542
        %v1497 = vpop.f32.mrb[0].mxu0
        %v1498 = vadd.f32 %v1385, %v1497
        %v1499 = vpop.f32.mrb[0].mxu0
        %v1500 = vadd.f32 %v1387, %v1499
        %1501 = vmatprep.mubr.f32.mxu0 %v547
        %1502 = vmatmul.mubr.f32.gmra.mrb[0].mxu0 %v546
        %v1503 = vpop.f32.mrb[0].mxu0
        %v1504 = vadd.f32 %v1391, %v1503
        %v1505 = vpop.f32.mrb[0].mxu0
        %v1506 = vadd.f32 %v1393, %v1505
        %1507 = vmatprep.mubr.f32.mxu0 %v551
        %1508 = vmatmul.mubr.f32.gmra.mrb[0].mxu0 %v550
        %v1509 = vpop.f32.mrb[0].mxu0
        %v1510 = vadd.f32 %v1397, %v1509
        %v1511 = vpop.f32.mrb[0].mxu0
        %v1512 = vadd.f32 %v1399, %v1511
        %1513 = vmatprep.mubr.f32.mxu0 %v555
        %1514 = vmatmul.mubr.f32.gmra.mrb[0].mxu0 %v554
        %v1515 = vpop.f32.mrb[0].mxu0
        %v1516 = vadd.f32 %v1403, %v1515
        %v1517 = vpop.f32.mrb[0].mxu0
        %v1518 = vadd.f32 %v1405, %v1517
        %1519 = vmatprep.mubr.f32.mxu0 %v559
        %1520 = vmatmul.mubr.f32.gmra.mrb[0].mxu0 %v558
        %v1521 = vpop.f32.mrb[0].mxu0
        %v1522 = vadd.f32 %v1409, %v1521
        %v1523 = vpop.f32.mrb[0].mxu0
        %v1524 = vadd.f32 %v1411, %v1523
        %1525 = vdwg.mxu0
        %v1526 = vld [vmem:[%s463] sm:$0xff]
        %v1527 = vld [vmem:[%s463 + $0x8] sm:$0xff]
        %v1528 = vld [vmem:[%s463 + $0x10] sm:$0xff]
        %v1529 = vld [vmem:[%s463 + $0x18] sm:$0xff]
        %v1530 = vld [vmem:[%s463 + $0x40] sm:$0xff]
        %v1531 = vld [vmem:[%s463 + $0x48] sm:$0xff]
        %v1532 = vld [vmem:[%s463 + $0x50] sm:$0xff]
        %v1533 = vld [vmem:[%s463 + $0x58] sm:$0xff]
        %v1534 = vld [vmem:[%s463 + $0x80] sm:$0xff]
        %v1535 = vld [vmem:[%s463 + $0x88] sm:$0xff]
        %v1536 = vld [vmem:[%s463 + $0x90] sm:$0xff]
        %v1537 = vld [vmem:[%s463 + $0x98] sm:$0xff]
        %v1538 = vld [vmem:[%s463 + $0xc0] sm:$0xff]
        %v1539 = vld [vmem:[%s463 + $0xc8] sm:$0xff]
        %v1540 = vld [vmem:[%s463 + $0xd0] sm:$0xff]
        %v1541 = vld [vmem:[%s463 + $0xd8] sm:$0xff]
        %v1542 = vld [vmem:[%s463 + $0x100] sm:$0xff]
        %v1543 = vld [vmem:[%s463 + $0x108] sm:$0xff]
        %v1544 = vld [vmem:[%s463 + $0x110] sm:$0xff]
        %v1545 = vld [vmem:[%s463 + $0x118] sm:$0xff]
        %v1546 = vld [vmem:[%s463 + $0x140] sm:$0xff]
        %v1547 = vld [vmem:[%s463 + $0x148] sm:$0xff]
        %v1548 = vld [vmem:[%s463 + $0x150] sm:$0xff]
        %v1549 = vld [vmem:[%s463 + $0x158] sm:$0xff]
        %v1550 = vld [vmem:[%s463 + $0x180] sm:$0xff]
        %v1551 = vld [vmem:[%s463 + $0x188] sm:$0xff]
        %v1552 = vld [vmem:[%s463 + $0x190] sm:$0xff]
        %v1553 = vld [vmem:[%s463 + $0x198] sm:$0xff]
        %v1554 = vld [vmem:[%s463 + $0x1c0] sm:$0xff]
        %v1555 = vld [vmem:[%s463 + $0x1c8] sm:$0xff]
        %v1556 = vld [vmem:[%s463 + $0x1d0] sm:$0xff]
        %v1557 = vld [vmem:[%s463 + $0x1d8] sm:$0xff]
        %s1558 = scalar_lea.vmem %s1, 2048
        %v1559 = vld [vmem:[%s1558] sm:$0xff]
        %v1560 = vld [vmem:[%s1558 + $0x8] sm:$0xff]
        %v1561 = vld [vmem:[%s1558 + $0x10] sm:$0xff]
        %v1562 = vld [vmem:[%s1558 + $0x18] sm:$0xff]
        %v1563 = vld [vmem:[%s1558 + $0x20] sm:$0xff]
        %v1564 = vld [vmem:[%s1558 + $0x28] sm:$0xff]
        %v1565 = vld [vmem:[%s1558 + $0x30] sm:$0xff]
        %v1566 = vld [vmem:[%s1558 + $0x38] sm:$0xff]
        %v1567 = vld [vmem:[%s1558 + $0x40] sm:$0xff]
        %v1568 = vld [vmem:[%s1558 + $0x48] sm:$0xff]
        %v1569 = vld [vmem:[%s1558 + $0x50] sm:$0xff]
        %v1570 = vld [vmem:[%s1558 + $0x58] sm:$0xff]
        %v1571 = vld [vmem:[%s1558 + $0x60] sm:$0xff]
        %v1572 = vld [vmem:[%s1558 + $0x68] sm:$0xff]
        %v1573 = vld [vmem:[%s1558 + $0x70] sm:$0xff]
        %v1574 = vld [vmem:[%s1558 + $0x78] sm:$0xff]
        %v1575 = vld [vmem:[%s1558 + $0x80] sm:$0xff]
        %v1576 = vld [vmem:[%s1558 + $0x88] sm:$0xff]
        %v1577 = vld [vmem:[%s1558 + $0x90] sm:$0xff]
        %v1578 = vld [vmem:[%s1558 + $0x98] sm:$0xff]
        %v1579 = vld [vmem:[%s1558 + $0xa0] sm:$0xff]
        %v1580 = vld [vmem:[%s1558 + $0xa8] sm:$0xff]
        %v1581 = vld [vmem:[%s1558 + $0xb0] sm:$0xff]
        %v1582 = vld [vmem:[%s1558 + $0xb8] sm:$0xff]
        %v1583 = vld [vmem:[%s1558 + $0xc0] sm:$0xff]
        %v1584 = vld [vmem:[%s1558 + $0xc8] sm:$0xff]
        %v1585 = vld [vmem:[%s1558 + $0xd0] sm:$0xff]
        %v1586 = vld [vmem:[%s1558 + $0xd8] sm:$0xff]
        %v1587 = vld [vmem:[%s1558 + $0xe0] sm:$0xff]
        %v1588 = vld [vmem:[%s1558 + $0xe8] sm:$0xff]
        %v1589 = vld [vmem:[%s1558 + $0xf0] sm:$0xff]
        %v1590 = vld [vmem:[%s1558 + $0xf8] sm:$0xff]
        %v1591 = vld [vmem:[%s1558 + $0x100] sm:$0xff]
        %v1592 = vld [vmem:[%s1558 + $0x108] sm:$0xff]
        %v1593 = vld [vmem:[%s1558 + $0x110] sm:$0xff]
        %v1594 = vld [vmem:[%s1558 + $0x118] sm:$0xff]
        %v1595 = vld [vmem:[%s1558 + $0x120] sm:$0xff]
        %v1596 = vld [vmem:[%s1558 + $0x128] sm:$0xff]
        %v1597 = vld [vmem:[%s1558 + $0x130] sm:$0xff]
        %v1598 = vld [vmem:[%s1558 + $0x138] sm:$0xff]
        %v1599 = vld [vmem:[%s1558 + $0x140] sm:$0xff]
        %v1600 = vld [vmem:[%s1558 + $0x148] sm:$0xff]
        %v1601 = vld [vmem:[%s1558 + $0x150] sm:$0xff]
        %v1602 = vld [vmem:[%s1558 + $0x158] sm:$0xff]
        %v1603 = vld [vmem:[%s1558 + $0x160] sm:$0xff]
        %v1604 = vld [vmem:[%s1558 + $0x168] sm:$0xff]
        %v1605 = vld [vmem:[%s1558 + $0x170] sm:$0xff]
        %v1606 = vld [vmem:[%s1558 + $0x178] sm:$0xff]
        %v1607 = vld [vmem:[%s1558 + $0x180] sm:$0xff]
        %v1608 = vld [vmem:[%s1558 + $0x188] sm:$0xff]
        %v1609 = vld [vmem:[%s1558 + $0x190] sm:$0xff]
        %v1610 = vld [vmem:[%s1558 + $0x198] sm:$0xff]
        %v1611 = vld [vmem:[%s1558 + $0x1a0] sm:$0xff]
        %v1612 = vld [vmem:[%s1558 + $0x1a8] sm:$0xff]
        %v1613 = vld [vmem:[%s1558 + $0x1b0] sm:$0xff]
        %v1614 = vld [vmem:[%s1558 + $0x1b8] sm:$0xff]
        %v1615 = vld [vmem:[%s1558 + $0x1c0] sm:$0xff]
        %v1616 = vld [vmem:[%s1558 + $0x1c8] sm:$0xff]
        %v1617 = vld [vmem:[%s1558 + $0x1d0] sm:$0xff]
        %v1618 = vld [vmem:[%s1558 + $0x1d8] sm:$0xff]
        %v1619 = vld [vmem:[%s1558 + $0x1e0] sm:$0xff]
        %v1620 = vld [vmem:[%s1558 + $0x1e8] sm:$0xff]
        %v1621 = vld [vmem:[%s1558 + $0x1f0] sm:$0xff]
        %v1622 = vld [vmem:[%s1558 + $0x1f8] sm:$0xff]
        %v1623 = vld [vmem:[%s1558 + $0x200] sm:$0xff]
        %v1624 = vld [vmem:[%s1558 + $0x208] sm:$0xff]
        %v1625 = vld [vmem:[%s1558 + $0x210] sm:$0xff]
        %v1626 = vld [vmem:[%s1558 + $0x218] sm:$0xff]
        %v1627 = vld [vmem:[%s1558 + $0x220] sm:$0xff]
        %v1628 = vld [vmem:[%s1558 + $0x228] sm:$0xff]
        %v1629 = vld [vmem:[%s1558 + $0x230] sm:$0xff]
        %v1630 = vld [vmem:[%s1558 + $0x238] sm:$0xff]
        %v1631 = vld [vmem:[%s1558 + $0x240] sm:$0xff]
        %v1632 = vld [vmem:[%s1558 + $0x248] sm:$0xff]
        %v1633 = vld [vmem:[%s1558 + $0x250] sm:$0xff]
        %v1634 = vld [vmem:[%s1558 + $0x258] sm:$0xff]
        %v1635 = vld [vmem:[%s1558 + $0x260] sm:$0xff]
        %v1636 = vld [vmem:[%s1558 + $0x268] sm:$0xff]
        %v1637 = vld [vmem:[%s1558 + $0x270] sm:$0xff]
        %v1638 = vld [vmem:[%s1558 + $0x278] sm:$0xff]
        %v1639 = vld [vmem:[%s1558 + $0x280] sm:$0xff]
        %v1640 = vld [vmem:[%s1558 + $0x288] sm:$0xff]
        %v1641 = vld [vmem:[%s1558 + $0x290] sm:$0xff]
        %v1642 = vld [vmem:[%s1558 + $0x298] sm:$0xff]
        %v1643 = vld [vmem:[%s1558 + $0x2a0] sm:$0xff]
        %v1644 = vld [vmem:[%s1558 + $0x2a8] sm:$0xff]
        %v1645 = vld [vmem:[%s1558 + $0x2b0] sm:$0xff]
        %v1646 = vld [vmem:[%s1558 + $0x2b8] sm:$0xff]
        %v1647 = vld [vmem:[%s1558 + $0x2c0] sm:$0xff]
        %v1648 = vld [vmem:[%s1558 + $0x2c8] sm:$0xff]
        %v1649 = vld [vmem:[%s1558 + $0x2d0] sm:$0xff]
        %v1650 = vld [vmem:[%s1558 + $0x2d8] sm:$0xff]
        %v1651 = vld [vmem:[%s1558 + $0x2e0] sm:$0xff]
        %v1652 = vld [vmem:[%s1558 + $0x2e8] sm:$0xff]
        %v1653 = vld [vmem:[%s1558 + $0x2f0] sm:$0xff]
        %v1654 = vld [vmem:[%s1558 + $0x2f8] sm:$0xff]
        %v1655 = vld [vmem:[%s1558 + $0x300] sm:$0xff]
        %v1656 = vld [vmem:[%s1558 + $0x308] sm:$0xff]
        %v1657 = vld [vmem:[%s1558 + $0x310] sm:$0xff]
        %v1658 = vld [vmem:[%s1558 + $0x318] sm:$0xff]
        %v1659 = vld [vmem:[%s1558 + $0x320] sm:$0xff]
        %v1660 = vld [vmem:[%s1558 + $0x328] sm:$0xff]
        %v1661 = vld [vmem:[%s1558 + $0x330] sm:$0xff]
        %v1662 = vld [vmem:[%s1558 + $0x338] sm:$0xff]
        %v1663 = vld [vmem:[%s1558 + $0x340] sm:$0xff]
        %v1664 = vld [vmem:[%s1558 + $0x348] sm:$0xff]
        %v1665 = vld [vmem:[%s1558 + $0x350] sm:$0xff]
        %v1666 = vld [vmem:[%s1558 + $0x358] sm:$0xff]
        %v1667 = vld [vmem:[%s1558 + $0x360] sm:$0xff]
        %v1668 = vld [vmem:[%s1558 + $0x368] sm:$0xff]
        %v1669 = vld [vmem:[%s1558 + $0x370] sm:$0xff]
        %v1670 = vld [vmem:[%s1558 + $0x378] sm:$0xff]
        %v1671 = vld [vmem:[%s1558 + $0x380] sm:$0xff]
        %v1672 = vld [vmem:[%s1558 + $0x388] sm:$0xff]
        %v1673 = vld [vmem:[%s1558 + $0x390] sm:$0xff]
        %v1674 = vld [vmem:[%s1558 + $0x398] sm:$0xff]
        %v1675 = vld [vmem:[%s1558 + $0x3a0] sm:$0xff]
        %v1676 = vld [vmem:[%s1558 + $0x3a8] sm:$0xff]
        %v1677 = vld [vmem:[%s1558 + $0x3b0] sm:$0xff]
        %v1678 = vld [vmem:[%s1558 + $0x3b8] sm:$0xff]
        %v1679 = vld [vmem:[%s1558 + $0x3c0] sm:$0xff]
        %v1680 = vld [vmem:[%s1558 + $0x3c8] sm:$0xff]
        %v1681 = vld [vmem:[%s1558 + $0x3d0] sm:$0xff]
        %v1682 = vld [vmem:[%s1558 + $0x3d8] sm:$0xff]
        %v1683 = vld [vmem:[%s1558 + $0x3e0] sm:$0xff]
        %v1684 = vld [vmem:[%s1558 + $0x3e8] sm:$0xff]
        %v1685 = vld [vmem:[%s1558 + $0x3f0] sm:$0xff]
        %v1686 = vld [vmem:[%s1558 + $0x3f8] sm:$0xff]
        %1687 = vmatprep.subr.mxu0 %v1560
        %1688 = vmatpush1.msra.mxu0 %v1559
        %1689 = vmatprep.subr.mxu0 %v1562
        %1690 = vmatpush1.msra.mxu0 %v1561
        %1691 = vmatprep.subr.mxu0 %v1564
        %1692 = vmatpush1.msra.mxu0 %v1563
        %1693 = vmatprep.subr.mxu0 %v1566
        %1694 = vmatpush1.msra.mxu0 %v1565
        %1695 = vmatprep.subr.mxu0 %v1568
        %1696 = vmatpush1.msra.mxu0 %v1567
        %1697 = vmatprep.subr.mxu0 %v1570
        %1698 = vmatpush1.msra.mxu0 %v1569
        %1699 = vmatprep.subr.mxu0 %v1572
        %1700 = vmatpush1.msra.mxu0 %v1571
        %1701 = vmatprep.subr.mxu0 %v1574
        %1702 = vmatpush1.msra.mxu0 %v1573
        %1703 = vmatprep.subr.mxu0 %v1576
        %1704 = vmatpush1.msra.mxu0 %v1575
        %1705 = vmatprep.subr.mxu0 %v1578
        %1706 = vmatpush1.msra.mxu0 %v1577
        %1707 = vmatprep.subr.mxu0 %v1580
        %1708 = vmatpush1.msra.mxu0 %v1579
        %1709 = vmatprep.subr.mxu0 %v1582
        %1710 = vmatpush1.msra.mxu0 %v1581
        %1711 = vmatprep.subr.mxu0 %v1584
        %1712 = vmatpush1.msra.mxu0 %v1583
        %1713 = vmatprep.subr.mxu0 %v1586
        %1714 = vmatpush1.msra.mxu0 %v1585
        %1715 = vmatprep.subr.mxu0 %v1588
        %1716 = vmatpush1.msra.mxu0 %v1587
        %1717 = vmatprep.subr.mxu0 %v1590
        %1718 = vmatpush1.msra.mxu0 %v1589
        %1719 = vmatprep.subr.mxu0 %v1592
        %1720 = vmatpush1.msra.mxu0 %v1591
        %1721 = vmatprep.subr.mxu0 %v1594
        %1722 = vmatpush1.msra.mxu0 %v1593
        %1723 = vmatprep.subr.mxu0 %v1596
        %1724 = vmatpush1.msra.mxu0 %v1595
        %1725 = vmatprep.subr.mxu0 %v1598
        %1726 = vmatpush1.msra.mxu0 %v1597
        %1727 = vmatprep.subr.mxu0 %v1600
        %1728 = vmatpush1.msra.mxu0 %v1599
        %1729 = vmatprep.subr.mxu0 %v1602
        %1730 = vmatpush1.msra.mxu0 %v1601
        %1731 = vmatprep.subr.mxu0 %v1604
        %1732 = vmatpush1.msra.mxu0 %v1603
        %1733 = vmatprep.subr.mxu0 %v1606
        %1734 = vmatpush1.msra.mxu0 %v1605
        %1735 = vmatprep.subr.mxu0 %v1608
        %1736 = vmatpush1.msra.mxu0 %v1607
        %1737 = vmatprep.subr.mxu0 %v1610
        %1738 = vmatpush1.msra.mxu0 %v1609
        %1739 = vmatprep.subr.mxu0 %v1612
        %1740 = vmatpush1.msra.mxu0 %v1611
        %1741 = vmatprep.subr.mxu0 %v1614
        %1742 = vmatpush1.msra.mxu0 %v1613
        %1743 = vmatprep.subr.mxu0 %v1616
        %1744 = vmatpush1.msra.mxu0 %v1615
        %1745 = vmatprep.subr.mxu0 %v1618
        %1746 = vmatpush1.msra.mxu0 %v1617
        %1747 = vmatprep.subr.mxu0 %v1620
        %1748 = vmatpush1.msra.mxu0 %v1619
        %1749 = vmatprep.subr.mxu0 %v1622
        %1750 = vmatpush1.msra.mxu0 %v1621
        %1751 = vmatprep.mubr.f32.mxu0 %v1527
        %1752 = vmatmul.mubr.f32.gmra.mrb[0].mxu0 %v1526
        %v1753 = vpop.f32.mrb[0].mxu0
        %v1754 = vadd.f32 0.0, %v1753
        %v1755 = vpop.f32.mrb[0].mxu0
        %v1756 = vadd.f32 0.0, %v1755
        %1757 = vmatprep.mubr.f32.mxu0 %v1531
        %1758 = vmatmul.mubr.f32.gmra.mrb[0].mxu0 %v1530
        %v1759 = vpop.f32.mrb[0].mxu0
        %v1760 = vadd.f32 0.0, %v1759
        %v1761 = vpop.f32.mrb[0].mxu0
        %v1762 = vadd.f32 0.0, %v1761
        %1763 = vmatprep.mubr.f32.mxu0 %v1535
        %1764 = vmatmul.mubr.f32.gmra.mrb[0].mxu0 %v1534
        %v1765 = vpop.f32.mrb[0].mxu0
        %v1766 = vadd.f32 0.0, %v1765
        %v1767 = vpop.f32.mrb[0].mxu0
        %v1768 = vadd.f32 0.0, %v1767
        %1769 = vmatprep.mubr.f32.mxu0 %v1539
        %1770 = vmatmul.mubr.f32.gmra.mrb[0].mxu0 %v1538
        %v1771 = vpop.f32.mrb[0].mxu0
        %v1772 = vadd.f32 0.0, %v1771
        %v1773 = vpop.f32.mrb[0].mxu0
        %v1774 = vadd.f32 0.0, %v1773
        %1775 = vmatprep.mubr.f32.mxu0 %v1543
        %1776 = vmatmul.mubr.f32.gmra.mrb[0].mxu0 %v1542
        %v1777 = vpop.f32.mrb[0].mxu0
        %v1778 = vadd.f32 0.0, %v1777
        %v1779 = vpop.f32.mrb[0].mxu0
        %v1780 = vadd.f32 0.0, %v1779
        %1781 = vmatprep.mubr.f32.mxu0 %v1547
        %1782 = vmatmul.mubr.f32.gmra.mrb[0].mxu0 %v1546
        %v1783 = vpop.f32.mrb[0].mxu0
        %v1784 = vadd.f32 0.0, %v1783
        %v1785 = vpop.f32.mrb[0].mxu0
        %v1786 = vadd.f32 0.0, %v1785
        %1787 = vmatprep.mubr.f32.mxu0 %v1551
        %1788 = vmatmul.mubr.f32.gmra.mrb[0].mxu0 %v1550
        %v1789 = vpop.f32.mrb[0].mxu0
        %v1790 = vadd.f32 0.0, %v1789
        %v1791 = vpop.f32.mrb[0].mxu0
        %v1792 = vadd.f32 0.0, %v1791
        %1793 = vmatprep.mubr.f32.mxu0 %v1555
        %1794 = vmatmul.mubr.f32.gmra.mrb[0].mxu0 %v1554
        %v1795 = vpop.f32.mrb[0].mxu0
        %v1796 = vadd.f32 0.0, %v1795
        %v1797 = vpop.f32.mrb[0].mxu0
        %v1798 = vadd.f32 0.0, %v1797
        %1799 = vdwg.mxu0
        %1800 = vmatprep.subr.mxu0 %v1624
        %1801 = vmatpush1.msra.mxu0 %v1623
        %1802 = vmatprep.subr.mxu0 %v1626
        %1803 = vmatpush1.msra.mxu0 %v1625
        %1804 = vmatprep.subr.mxu0 %v1628
        %1805 = vmatpush1.msra.mxu0 %v1627
        %1806 = vmatprep.subr.mxu0 %v1630
        %1807 = vmatpush1.msra.mxu0 %v1629
        %1808 = vmatprep.subr.mxu0 %v1632
        %1809 = vmatpush1.msra.mxu0 %v1631
        %1810 = vmatprep.subr.mxu0 %v1634
        %1811 = vmatpush1.msra.mxu0 %v1633
        %1812 = vmatprep.subr.mxu0 %v1636
        %1813 = vmatpush1.msra.mxu0 %v1635
        %1814 = vmatprep.subr.mxu0 %v1638
        %1815 = vmatpush1.msra.mxu0 %v1637
        %1816 = vmatprep.subr.mxu0 %v1640
        %1817 = vmatpush1.msra.mxu0 %v1639
        %1818 = vmatprep.subr.mxu0 %v1642
        %1819 = vmatpush1.msra.mxu0 %v1641
        %1820 = vmatprep.subr.mxu0 %v1644
        %1821 = vmatpush1.msra.mxu0 %v1643
        %1822 = vmatprep.subr.mxu0 %v1646
        %1823 = vmatpush1.msra.mxu0 %v1645
        %1824 = vmatprep.subr.mxu0 %v1648
        %1825 = vmatpush1.msra.mxu0 %v1647
        %1826 = vmatprep.subr.mxu0 %v1650
        %1827 = vmatpush1.msra.mxu0 %v1649
        %1828 = vmatprep.subr.mxu0 %v1652
        %1829 = vmatpush1.msra.mxu0 %v1651
        %1830 = vmatprep.subr.mxu0 %v1654
        %1831 = vmatpush1.msra.mxu0 %v1653
        %1832 = vmatprep.subr.mxu0 %v1656
        %1833 = vmatpush1.msra.mxu0 %v1655
        %1834 = vmatprep.subr.mxu0 %v1658
        %1835 = vmatpush1.msra.mxu0 %v1657
        %1836 = vmatprep.subr.mxu0 %v1660
        %1837 = vmatpush1.msra.mxu0 %v1659
        %1838 = vmatprep.subr.mxu0 %v1662
        %1839 = vmatpush1.msra.mxu0 %v1661
        %1840 = vmatprep.subr.mxu0 %v1664
        %1841 = vmatpush1.msra.mxu0 %v1663
        %1842 = vmatprep.subr.mxu0 %v1666
        %1843 = vmatpush1.msra.mxu0 %v1665
        %1844 = vmatprep.subr.mxu0 %v1668
        %1845 = vmatpush1.msra.mxu0 %v1667
        %1846 = vmatprep.subr.mxu0 %v1670
        %1847 = vmatpush1.msra.mxu0 %v1669
        %1848 = vmatprep.subr.mxu0 %v1672
        %1849 = vmatpush1.msra.mxu0 %v1671
        %1850 = vmatprep.subr.mxu0 %v1674
        %1851 = vmatpush1.msra.mxu0 %v1673
        %1852 = vmatprep.subr.mxu0 %v1676
        %1853 = vmatpush1.msra.mxu0 %v1675
        %1854 = vmatprep.subr.mxu0 %v1678
        %1855 = vmatpush1.msra.mxu0 %v1677
        %1856 = vmatprep.subr.mxu0 %v1680
        %1857 = vmatpush1.msra.mxu0 %v1679
        %1858 = vmatprep.subr.mxu0 %v1682
        %1859 = vmatpush1.msra.mxu0 %v1681
        %1860 = vmatprep.subr.mxu0 %v1684
        %1861 = vmatpush1.msra.mxu0 %v1683
        %1862 = vmatprep.subr.mxu0 %v1686
        %1863 = vmatpush1.msra.mxu0 %v1685
        %1864 = vmatprep.mubr.f32.mxu0 %v1529
        %1865 = vmatmul.mubr.f32.gmra.mrb[0].mxu0 %v1528
        %v1866 = vpop.f32.mrb[0].mxu0
        %v1867 = vadd.f32 %v1754, %v1866
        %v1868 = vpop.f32.mrb[0].mxu0
        %v1869 = vadd.f32 %v1756, %v1868
        %1870 = vmatprep.mubr.f32.mxu0 %v1533
        %1871 = vmatmul.mubr.f32.gmra.mrb[0].mxu0 %v1532
        %v1872 = vpop.f32.mrb[0].mxu0
        %v1873 = vadd.f32 %v1760, %v1872
        %v1874 = vpop.f32.mrb[0].mxu0
        %v1875 = vadd.f32 %v1762, %v1874
        %1876 = vmatprep.mubr.f32.mxu0 %v1537
        %1877 = vmatmul.mubr.f32.gmra.mrb[0].mxu0 %v1536
        %v1878 = vpop.f32.mrb[0].mxu0
        %v1879 = vadd.f32 %v1766, %v1878
        %v1880 = vpop.f32.mrb[0].mxu0
        %v1881 = vadd.f32 %v1768, %v1880
        %1882 = vmatprep.mubr.f32.mxu0 %v1541
        %1883 = vmatmul.mubr.f32.gmra.mrb[0].mxu0 %v1540
        %v1884 = vpop.f32.mrb[0].mxu0
        %v1885 = vadd.f32 %v1772, %v1884
        %v1886 = vpop.f32.mrb[0].mxu0
        %v1887 = vadd.f32 %v1774, %v1886
        %1888 = vmatprep.mubr.f32.mxu0 %v1545
        %1889 = vmatmul.mubr.f32.gmra.mrb[0].mxu0 %v1544
        %v1890 = vpop.f32.mrb[0].mxu0
        %v1891 = vadd.f32 %v1778, %v1890
        %v1892 = vpop.f32.mrb[0].mxu0
        %v1893 = vadd.f32 %v1780, %v1892
        %1894 = vmatprep.mubr.f32.mxu0 %v1549
        %1895 = vmatmul.mubr.f32.gmra.mrb[0].mxu0 %v1548
        %v1896 = vpop.f32.mrb[0].mxu0
        %v1897 = vadd.f32 %v1784, %v1896
        %v1898 = vpop.f32.mrb[0].mxu0
        %v1899 = vadd.f32 %v1786, %v1898
        %1900 = vmatprep.mubr.f32.mxu0 %v1553
        %1901 = vmatmul.mubr.f32.gmra.mrb[0].mxu0 %v1552
        %v1902 = vpop.f32.mrb[0].mxu0
        %v1903 = vadd.f32 %v1790, %v1902
        %v1904 = vpop.f32.mrb[0].mxu0
        %v1905 = vadd.f32 %v1792, %v1904
        %1906 = vmatprep.mubr.f32.mxu0 %v1557
        %1907 = vmatmul.mubr.f32.gmra.mrb[0].mxu0 %v1556
        %v1908 = vpop.f32.mrb[0].mxu0
        %v1909 = vadd.f32 %v1796, %v1908
        %v1910 = vpop.f32.mrb[0].mxu0
        %v1911 = vadd.f32 %v1798, %v1910
        %1912 = vdwg.mxu0
        %v1913 = vadd.f32 %v1480, %v1867
        %v1914 = vadd.f32 %v1482, %v1869
        %v1915 = vadd.f32 %v1486, %v1873
        %v1916 = vadd.f32 %v1488, %v1875
        %v1917 = vadd.f32 %v1492, %v1879
        %v1918 = vadd.f32 %v1494, %v1881
        %v1919 = vadd.f32 %v1498, %v1885
        %v1920 = vadd.f32 %v1500, %v1887
        %v1921 = vadd.f32 %v1504, %v1891
        %v1922 = vadd.f32 %v1506, %v1893
        %v1923 = vadd.f32 %v1510, %v1897
        %v1924 = vadd.f32 %v1512, %v1899
        %v1925 = vadd.f32 %v1516, %v1903
        %v1926 = vadd.f32 %v1518, %v1905
        %v1927 = vadd.f32 %v1522, %v1909
        %v1928 = vadd.f32 %v1524, %v1911
        %v1929 = vld [vmem:[%s463] sm:$0xfe]
        %v1930 = vld [vmem:[%s463 + $0x8] sm:$0xfe]
        %v1931 = vld [vmem:[%s463 + $0x10] sm:$0xfe]
        %v1932 = vld [vmem:[%s463 + $0x18] sm:$0xfe]
        %v1933 = vld [vmem:[%s463 + $0x20] sm:$0x1]
        %v1934 = vld [vmem:[%s463 + $0x28] sm:$0x1]
        %v1935 = vld [vmem:[%s463 + $0x30] sm:$0x1]
        %v1936 = vld [vmem:[%s463 + $0x38] sm:$0x1]
        %v1937 = vld [vmem:[%s463 + $0x40] sm:$0xfe]
        %v1938 = vld [vmem:[%s463 + $0x48] sm:$0xfe]
        %v1939 = vld [vmem:[%s463 + $0x50] sm:$0xfe]
        %v1940 = vld [vmem:[%s463 + $0x58] sm:$0xfe]
        %v1941 = vld [vmem:[%s463 + $0x60] sm:$0x1]
        %v1942 = vld [vmem:[%s463 + $0x68] sm:$0x1]
        %v1943 = vld [vmem:[%s463 + $0x70] sm:$0x1]
        %v1944 = vld [vmem:[%s463 + $0x78] sm:$0x1]
        %v1945 = vld [vmem:[%s463 + $0x80] sm:$0xfe]
        %v1946 = vld [vmem:[%s463 + $0x88] sm:$0xfe]
        %v1947 = vld [vmem:[%s463 + $0x90] sm:$0xfe]
        %v1948 = vld [vmem:[%s463 + $0x98] sm:$0xfe]
        %v1949 = vld [vmem:[%s463 + $0xa0] sm:$0x1]
        %v1950 = vld [vmem:[%s463 + $0xa8] sm:$0x1]
        %v1951 = vld [vmem:[%s463 + $0xb0] sm:$0x1]
        %v1952 = vld [vmem:[%s463 + $0xb8] sm:$0x1]
        %v1953 = vld [vmem:[%s463 + $0xc0] sm:$0xfe]
        %v1954 = vld [vmem:[%s463 + $0xc8] sm:$0xfe]
        %v1955 = vld [vmem:[%s463 + $0xd0] sm:$0xfe]
        %v1956 = vld [vmem:[%s463 + $0xd8] sm:$0xfe]
        %v1957 = vld [vmem:[%s463 + $0xe0] sm:$0x1]
        %v1958 = vld [vmem:[%s463 + $0xe8] sm:$0x1]
        %v1959 = vld [vmem:[%s463 + $0xf0] sm:$0x1]
        %v1960 = vld [vmem:[%s463 + $0xf8] sm:$0x1]
        %v1961 = vld [vmem:[%s463 + $0x100] sm:$0xfe]
        %v1962 = vld [vmem:[%s463 + $0x108] sm:$0xfe]
        %v1963 = vld [vmem:[%s463 + $0x110] sm:$0xfe]
        %v1964 = vld [vmem:[%s463 + $0x118] sm:$0xfe]
        %v1965 = vld [vmem:[%s463 + $0x120] sm:$0x1]
        %v1966 = vld [vmem:[%s463 + $0x128] sm:$0x1]
        %v1967 = vld [vmem:[%s463 + $0x130] sm:$0x1]
        %v1968 = vld [vmem:[%s463 + $0x138] sm:$0x1]
        %v1969 = vld [vmem:[%s463 + $0x140] sm:$0xfe]
        %v1970 = vld [vmem:[%s463 + $0x148] sm:$0xfe]
        %v1971 = vld [vmem:[%s463 + $0x150] sm:$0xfe]
        %v1972 = vld [vmem:[%s463 + $0x158] sm:$0xfe]
        %v1973 = vld [vmem:[%s463 + $0x160] sm:$0x1]
        %v1974 = vld [vmem:[%s463 + $0x168] sm:$0x1]
        %v1975 = vld [vmem:[%s463 + $0x170] sm:$0x1]
        %v1976 = vld [vmem:[%s463 + $0x178] sm:$0x1]
        %v1977 = vld [vmem:[%s463 + $0x180] sm:$0xfe]
        %v1978 = vld [vmem:[%s463 + $0x188] sm:$0xfe]
        %v1979 = vld [vmem:[%s463 + $0x190] sm:$0xfe]
        %v1980 = vld [vmem:[%s463 + $0x198] sm:$0xfe]
        %v1981 = vld [vmem:[%s463 + $0x1a0] sm:$0x1]
        %v1982 = vld [vmem:[%s463 + $0x1a8] sm:$0x1]
        %v1983 = vld [vmem:[%s463 + $0x1b0] sm:$0x1]
        %v1984 = vld [vmem:[%s463 + $0x1b8] sm:$0x1]
        %v1985 = vld [vmem:[%s463 + $0x1c0] sm:$0xfe]
        %v1986 = vld [vmem:[%s463 + $0x1c8] sm:$0xfe]
        %v1987 = vld [vmem:[%s463 + $0x1d0] sm:$0xfe]
        %v1988 = vld [vmem:[%s463 + $0x1d8] sm:$0xfe]
        %v1989 = vld [vmem:[%s463 + $0x1e0] sm:$0x1]
        %v1990 = vld [vmem:[%s463 + $0x1e8] sm:$0x1]
        %v1991 = vld [vmem:[%s463 + $0x1f0] sm:$0x1]
        %v1992 = vld [vmem:[%s463 + $0x1f8] sm:$0x1]
        %v2057 = vrot.slane %v1929, 1
        %v2058 = vrot.slane %v1933, 1
        %v2059 = vsel %vm816, %v2057, %v2058
        %v2060 = vrot.slane %v1930, 1
        %v2061 = vrot.slane %v1934, 1
        %v2062 = vsel %vm816, %v2060, %v2061
        %v2063 = vrot.slane %v1931, 1
        %v2064 = vrot.slane %v1935, 1
        %v2065 = vsel %vm816, %v2063, %v2064
        %v2066 = vrot.slane %v1932, 1
        %v2067 = vrot.slane %v1936, 1
        %v2068 = vsel %vm816, %v2066, %v2067
        %v2069 = vrot.slane %v1937, 1
        %v2070 = vrot.slane %v1941, 1
        %v2071 = vsel %vm816, %v2069, %v2070
        %v2072 = vrot.slane %v1938, 1
        %v2073 = vrot.slane %v1942, 1
        %v2074 = vsel %vm816, %v2072, %v2073
        %v2075 = vrot.slane %v1939, 1
        %v2076 = vrot.slane %v1943, 1
        %v2077 = vsel %vm816, %v2075, %v2076
        %v2078 = vrot.slane %v1940, 1
        %v2079 = vrot.slane %v1944, 1
        %v2080 = vsel %vm816, %v2078, %v2079
        %v2081 = vrot.slane %v1945, 1
        %v2082 = vrot.slane %v1949, 1
        %v2083 = vsel %vm816, %v2081, %v2082
        %v2084 = vrot.slane %v1946, 1
        %v2085 = vrot.slane %v1950, 1
        %v2086 = vsel %vm816, %v2084, %v2085
        %v2087 = vrot.slane %v1947, 1
        %v2088 = vrot.slane %v1951, 1
        %v2089 = vsel %vm816, %v2087, %v2088
        %v2090 = vrot.slane %v1948, 1
        %v2091 = vrot.slane %v1952, 1
        %v2092 = vsel %vm816, %v2090, %v2091
        %v2093 = vrot.slane %v1953, 1
        %v2094 = vrot.slane %v1957, 1
        %v2095 = vsel %vm816, %v2093, %v2094
        %v2096 = vrot.slane %v1954, 1
        %v2097 = vrot.slane %v1958, 1
        %v2098 = vsel %vm816, %v2096, %v2097
        %v2099 = vrot.slane %v1955, 1
        %v2100 = vrot.slane %v1959, 1
        %v2101 = vsel %vm816, %v2099, %v2100
        %v2102 = vrot.slane %v1956, 1
        %v2103 = vrot.slane %v1960, 1
        %v2104 = vsel %vm816, %v2102, %v2103
        %v2105 = vrot.slane %v1961, 1
        %v2106 = vrot.slane %v1965, 1
        %v2107 = vsel %vm816, %v2105, %v2106
        %v2108 = vrot.slane %v1962, 1
        %v2109 = vrot.slane %v1966, 1
        %v2110 = vsel %vm816, %v2108, %v2109
        %v2111 = vrot.slane %v1963, 1
        %v2112 = vrot.slane %v1967, 1
        %v2113 = vsel %vm816, %v2111, %v2112
        %v2114 = vrot.slane %v1964, 1
        %v2115 = vrot.slane %v1968, 1
        %v2116 = vsel %vm816, %v2114, %v2115
        %v2117 = vrot.slane %v1969, 1
        %v2118 = vrot.slane %v1973, 1
        %v2119 = vsel %vm816, %v2117, %v2118
        %v2120 = vrot.slane %v1970, 1
        %v2121 = vrot.slane %v1974, 1
        %v2122 = vsel %vm816, %v2120, %v2121
        %v2123 = vrot.slane %v1971, 1
        %v2124 = vrot.slane %v1975, 1
        %v2125 = vsel %vm816, %v2123, %v2124
        %v2126 = vrot.slane %v1972, 1
        %v2127 = vrot.slane %v1976, 1
        %v2128 = vsel %vm816, %v2126, %v2127
        %v2129 = vrot.slane %v1977, 1
        %v2130 = vrot.slane %v1981, 1
        %v2131 = vsel %vm816, %v2129, %v2130
        %v2132 = vrot.slane %v1978, 1
        %v2133 = vrot.slane %v1982, 1
        %v2134 = vsel %vm816, %v2132, %v2133
        %v2135 = vrot.slane %v1979, 1
        %v2136 = vrot.slane %v1983, 1
        %v2137 = vsel %vm816, %v2135, %v2136
        %v2138 = vrot.slane %v1980, 1
        %v2139 = vrot.slane %v1984, 1
        %v2140 = vsel %vm816, %v2138, %v2139
        %v2141 = vrot.slane %v1985, 1
        %v2142 = vrot.slane %v1989, 1
        %v2143 = vsel %vm816, %v2141, %v2142
        %v2144 = vrot.slane %v1986, 1
        %v2145 = vrot.slane %v1990, 1
        %v2146 = vsel %vm816, %v2144, %v2145
        %v2147 = vrot.slane %v1987, 1
        %v2148 = vrot.slane %v1991, 1
        %v2149 = vsel %vm816, %v2147, %v2148
        %v2150 = vrot.slane %v1988, 1
        %v2151 = vrot.slane %v1992, 1
        %v2152 = vsel %vm816, %v2150, %v2151
        %s2185 = scalar_lea.vmem %s1, 3072
        %v2186 = vld [vmem:[%s2185] sm:$0xff]
        %v2187 = vld [vmem:[%s2185 + $0x8] sm:$0xff]
        %v2188 = vld [vmem:[%s2185 + $0x10] sm:$0xff]
        %v2189 = vld [vmem:[%s2185 + $0x18] sm:$0xff]
        %v2190 = vld [vmem:[%s2185 + $0x20] sm:$0xff]
        %v2191 = vld [vmem:[%s2185 + $0x28] sm:$0xff]
        %v2192 = vld [vmem:[%s2185 + $0x30] sm:$0xff]
        %v2193 = vld [vmem:[%s2185 + $0x38] sm:$0xff]
        %v2194 = vld [vmem:[%s2185 + $0x40] sm:$0xff]
        %v2195 = vld [vmem:[%s2185 + $0x48] sm:$0xff]
        %v2196 = vld [vmem:[%s2185 + $0x50] sm:$0xff]
        %v2197 = vld [vmem:[%s2185 + $0x58] sm:$0xff]
        %v2198 = vld [vmem:[%s2185 + $0x60] sm:$0xff]
        %v2199 = vld [vmem:[%s2185 + $0x68] sm:$0xff]
        %v2200 = vld [vmem:[%s2185 + $0x70] sm:$0xff]
        %v2201 = vld [vmem:[%s2185 + $0x78] sm:$0xff]
        %v2202 = vld [vmem:[%s2185 + $0x80] sm:$0xff]
        %v2203 = vld [vmem:[%s2185 + $0x88] sm:$0xff]
        %v2204 = vld [vmem:[%s2185 + $0x90] sm:$0xff]
        %v2205 = vld [vmem:[%s2185 + $0x98] sm:$0xff]
        %v2206 = vld [vmem:[%s2185 + $0xa0] sm:$0xff]
        %v2207 = vld [vmem:[%s2185 + $0xa8] sm:$0xff]
        %v2208 = vld [vmem:[%s2185 + $0xb0] sm:$0xff]
        %v2209 = vld [vmem:[%s2185 + $0xb8] sm:$0xff]
        %v2210 = vld [vmem:[%s2185 + $0xc0] sm:$0xff]
        %v2211 = vld [vmem:[%s2185 + $0xc8] sm:$0xff]
        %v2212 = vld [vmem:[%s2185 + $0xd0] sm:$0xff]
        %v2213 = vld [vmem:[%s2185 + $0xd8] sm:$0xff]
        %v2214 = vld [vmem:[%s2185 + $0xe0] sm:$0xff]
        %v2215 = vld [vmem:[%s2185 + $0xe8] sm:$0xff]
        %v2216 = vld [vmem:[%s2185 + $0xf0] sm:$0xff]
        %v2217 = vld [vmem:[%s2185 + $0xf8] sm:$0xff]
        %v2218 = vld [vmem:[%s2185 + $0x100] sm:$0xff]
        %v2219 = vld [vmem:[%s2185 + $0x108] sm:$0xff]
        %v2220 = vld [vmem:[%s2185 + $0x110] sm:$0xff]
        %v2221 = vld [vmem:[%s2185 + $0x118] sm:$0xff]
        %v2222 = vld [vmem:[%s2185 + $0x120] sm:$0xff]
        %v2223 = vld [vmem:[%s2185 + $0x128] sm:$0xff]
        %v2224 = vld [vmem:[%s2185 + $0x130] sm:$0xff]
        %v2225 = vld [vmem:[%s2185 + $0x138] sm:$0xff]
        %v2226 = vld [vmem:[%s2185 + $0x140] sm:$0xff]
        %v2227 = vld [vmem:[%s2185 + $0x148] sm:$0xff]
        %v2228 = vld [vmem:[%s2185 + $0x150] sm:$0xff]
        %v2229 = vld [vmem:[%s2185 + $0x158] sm:$0xff]
        %v2230 = vld [vmem:[%s2185 + $0x160] sm:$0xff]
        %v2231 = vld [vmem:[%s2185 + $0x168] sm:$0xff]
        %v2232 = vld [vmem:[%s2185 + $0x170] sm:$0xff]
        %v2233 = vld [vmem:[%s2185 + $0x178] sm:$0xff]
        %v2234 = vld [vmem:[%s2185 + $0x180] sm:$0xff]
        %v2235 = vld [vmem:[%s2185 + $0x188] sm:$0xff]
        %v2236 = vld [vmem:[%s2185 + $0x190] sm:$0xff]
        %v2237 = vld [vmem:[%s2185 + $0x198] sm:$0xff]
        %v2238 = vld [vmem:[%s2185 + $0x1a0] sm:$0xff]
        %v2239 = vld [vmem:[%s2185 + $0x1a8] sm:$0xff]
        %v2240 = vld [vmem:[%s2185 + $0x1b0] sm:$0xff]
        %v2241 = vld [vmem:[%s2185 + $0x1b8] sm:$0xff]
        %v2242 = vld [vmem:[%s2185 + $0x1c0] sm:$0xff]
        %v2243 = vld [vmem:[%s2185 + $0x1c8] sm:$0xff]
        %v2244 = vld [vmem:[%s2185 + $0x1d0] sm:$0xff]
        %v2245 = vld [vmem:[%s2185 + $0x1d8] sm:$0xff]
        %v2246 = vld [vmem:[%s2185 + $0x1e0] sm:$0xff]
        %v2247 = vld [vmem:[%s2185 + $0x1e8] sm:$0xff]
        %v2248 = vld [vmem:[%s2185 + $0x1f0] sm:$0xff]
        %v2249 = vld [vmem:[%s2185 + $0x1f8] sm:$0xff]
        %v2250 = vld [vmem:[%s2185 + $0x200] sm:$0xff]
        %v2251 = vld [vmem:[%s2185 + $0x208] sm:$0xff]
        %v2252 = vld [vmem:[%s2185 + $0x210] sm:$0xff]
        %v2253 = vld [vmem:[%s2185 + $0x218] sm:$0xff]
        %v2254 = vld [vmem:[%s2185 + $0x220] sm:$0xff]
        %v2255 = vld [vmem:[%s2185 + $0x228] sm:$0xff]
        %v2256 = vld [vmem:[%s2185 + $0x230] sm:$0xff]
        %v2257 = vld [vmem:[%s2185 + $0x238] sm:$0xff]
        %v2258 = vld [vmem:[%s2185 + $0x240] sm:$0xff]
        %v2259 = vld [vmem:[%s2185 + $0x248] sm:$0xff]
        %v2260 = vld [vmem:[%s2185 + $0x250] sm:$0xff]
        %v2261 = vld [vmem:[%s2185 + $0x258] sm:$0xff]
        %v2262 = vld [vmem:[%s2185 + $0x260] sm:$0xff]
        %v2263 = vld [vmem:[%s2185 + $0x268] sm:$0xff]
        %v2264 = vld [vmem:[%s2185 + $0x270] sm:$0xff]
        %v2265 = vld [vmem:[%s2185 + $0x278] sm:$0xff]
        %v2266 = vld [vmem:[%s2185 + $0x280] sm:$0xff]
        %v2267 = vld [vmem:[%s2185 + $0x288] sm:$0xff]
        %v2268 = vld [vmem:[%s2185 + $0x290] sm:$0xff]
        %v2269 = vld [vmem:[%s2185 + $0x298] sm:$0xff]
        %v2270 = vld [vmem:[%s2185 + $0x2a0] sm:$0xff]
        %v2271 = vld [vmem:[%s2185 + $0x2a8] sm:$0xff]
        %v2272 = vld [vmem:[%s2185 + $0x2b0] sm:$0xff]
        %v2273 = vld [vmem:[%s2185 + $0x2b8] sm:$0xff]
        %v2274 = vld [vmem:[%s2185 + $0x2c0] sm:$0xff]
        %v2275 = vld [vmem:[%s2185 + $0x2c8] sm:$0xff]
        %v2276 = vld [vmem:[%s2185 + $0x2d0] sm:$0xff]
        %v2277 = vld [vmem:[%s2185 + $0x2d8] sm:$0xff]
        %v2278 = vld [vmem:[%s2185 + $0x2e0] sm:$0xff]
        %v2279 = vld [vmem:[%s2185 + $0x2e8] sm:$0xff]
        %v2280 = vld [vmem:[%s2185 + $0x2f0] sm:$0xff]
        %v2281 = vld [vmem:[%s2185 + $0x2f8] sm:$0xff]
        %v2282 = vld [vmem:[%s2185 + $0x300] sm:$0xff]
        %v2283 = vld [vmem:[%s2185 + $0x308] sm:$0xff]
        %v2284 = vld [vmem:[%s2185 + $0x310] sm:$0xff]
        %v2285 = vld [vmem:[%s2185 + $0x318] sm:$0xff]
        %v2286 = vld [vmem:[%s2185 + $0x320] sm:$0xff]
        %v2287 = vld [vmem:[%s2185 + $0x328] sm:$0xff]
        %v2288 = vld [vmem:[%s2185 + $0x330] sm:$0xff]
        %v2289 = vld [vmem:[%s2185 + $0x338] sm:$0xff]
        %v2290 = vld [vmem:[%s2185 + $0x340] sm:$0xff]
        %v2291 = vld [vmem:[%s2185 + $0x348] sm:$0xff]
        %v2292 = vld [vmem:[%s2185 + $0x350] sm:$0xff]
        %v2293 = vld [vmem:[%s2185 + $0x358] sm:$0xff]
        %v2294 = vld [vmem:[%s2185 + $0x360] sm:$0xff]
        %v2295 = vld [vmem:[%s2185 + $0x368] sm:$0xff]
        %v2296 = vld [vmem:[%s2185 + $0x370] sm:$0xff]
        %v2297 = vld [vmem:[%s2185 + $0x378] sm:$0xff]
        %v2298 = vld [vmem:[%s2185 + $0x380] sm:$0xff]
        %v2299 = vld [vmem:[%s2185 + $0x388] sm:$0xff]
        %v2300 = vld [vmem:[%s2185 + $0x390] sm:$0xff]
        %v2301 = vld [vmem:[%s2185 + $0x398] sm:$0xff]
        %v2302 = vld [vmem:[%s2185 + $0x3a0] sm:$0xff]
        %v2303 = vld [vmem:[%s2185 + $0x3a8] sm:$0xff]
        %v2304 = vld [vmem:[%s2185 + $0x3b0] sm:$0xff]
        %v2305 = vld [vmem:[%s2185 + $0x3b8] sm:$0xff]
        %v2306 = vld [vmem:[%s2185 + $0x3c0] sm:$0xff]
        %v2307 = vld [vmem:[%s2185 + $0x3c8] sm:$0xff]
        %v2308 = vld [vmem:[%s2185 + $0x3d0] sm:$0xff]
        %v2309 = vld [vmem:[%s2185 + $0x3d8] sm:$0xff]
        %v2310 = vld [vmem:[%s2185 + $0x3e0] sm:$0xff]
        %v2311 = vld [vmem:[%s2185 + $0x3e8] sm:$0xff]
        %v2312 = vld [vmem:[%s2185 + $0x3f0] sm:$0xff]
        %v2313 = vld [vmem:[%s2185 + $0x3f8] sm:$0xff]
        %2314 = vmatprep.subr.mxu0 %v2187
        %2315 = vmatpush1.msra.mxu0 %v2186
        %2316 = vmatprep.subr.mxu0 %v2189
        %2317 = vmatpush1.msra.mxu0 %v2188
        %2318 = vmatprep.subr.mxu0 %v2191
        %2319 = vmatpush1.msra.mxu0 %v2190
        %2320 = vmatprep.subr.mxu0 %v2193
        %2321 = vmatpush1.msra.mxu0 %v2192
        %2322 = vmatprep.subr.mxu0 %v2195
        %2323 = vmatpush1.msra.mxu0 %v2194
        %2324 = vmatprep.subr.mxu0 %v2197
        %2325 = vmatpush1.msra.mxu0 %v2196
        %2326 = vmatprep.subr.mxu0 %v2199
        %2327 = vmatpush1.msra.mxu0 %v2198
        %2328 = vmatprep.subr.mxu0 %v2201
        %2329 = vmatpush1.msra.mxu0 %v2200
        %2330 = vmatprep.subr.mxu0 %v2203
        %2331 = vmatpush1.msra.mxu0 %v2202
        %2332 = vmatprep.subr.mxu0 %v2205
        %2333 = vmatpush1.msra.mxu0 %v2204
        %2334 = vmatprep.subr.mxu0 %v2207
        %2335 = vmatpush1.msra.mxu0 %v2206
        %2336 = vmatprep.subr.mxu0 %v2209
        %2337 = vmatpush1.msra.mxu0 %v2208
        %2338 = vmatprep.subr.mxu0 %v2211
        %2339 = vmatpush1.msra.mxu0 %v2210
        %2340 = vmatprep.subr.mxu0 %v2213
        %2341 = vmatpush1.msra.mxu0 %v2212
        %2342 = vmatprep.subr.mxu0 %v2215
        %2343 = vmatpush1.msra.mxu0 %v2214
        %2344 = vmatprep.subr.mxu0 %v2217
        %2345 = vmatpush1.msra.mxu0 %v2216
        %2346 = vmatprep.subr.mxu0 %v2219
        %2347 = vmatpush1.msra.mxu0 %v2218
        %2348 = vmatprep.subr.mxu0 %v2221
        %2349 = vmatpush1.msra.mxu0 %v2220
        %2350 = vmatprep.subr.mxu0 %v2223
        %2351 = vmatpush1.msra.mxu0 %v2222
        %2352 = vmatprep.subr.mxu0 %v2225
        %2353 = vmatpush1.msra.mxu0 %v2224
        %2354 = vmatprep.subr.mxu0 %v2227
        %2355 = vmatpush1.msra.mxu0 %v2226
        %2356 = vmatprep.subr.mxu0 %v2229
        %2357 = vmatpush1.msra.mxu0 %v2228
        %2358 = vmatprep.subr.mxu0 %v2231
        %2359 = vmatpush1.msra.mxu0 %v2230
        %2360 = vmatprep.subr.mxu0 %v2233
        %2361 = vmatpush1.msra.mxu0 %v2232
        %2362 = vmatprep.subr.mxu0 %v2235
        %2363 = vmatpush1.msra.mxu0 %v2234
        %2364 = vmatprep.subr.mxu0 %v2237
        %2365 = vmatpush1.msra.mxu0 %v2236
        %2366 = vmatprep.subr.mxu0 %v2239
        %2367 = vmatpush1.msra.mxu0 %v2238
        %2368 = vmatprep.subr.mxu0 %v2241
        %2369 = vmatpush1.msra.mxu0 %v2240
        %2370 = vmatprep.subr.mxu0 %v2243
        %2371 = vmatpush1.msra.mxu0 %v2242
        %2372 = vmatprep.subr.mxu0 %v2245
        %2373 = vmatpush1.msra.mxu0 %v2244
        %2374 = vmatprep.subr.mxu0 %v2247
        %2375 = vmatpush1.msra.mxu0 %v2246
        %2376 = vmatprep.subr.mxu0 %v2249
        %2377 = vmatpush1.msra.mxu0 %v2248
        %2378 = vmatprep.mubr.f32.mxu0 %v2062
        %2379 = vmatmul.mubr.f32.gmra.mrb[0].mxu0 %v2059
        %v2380 = vpop.f32.mrb[0].mxu0
        %v2381 = vadd.f32 0.0, %v2380
        %v2382 = vpop.f32.mrb[0].mxu0
        %v2383 = vadd.f32 0.0, %v2382
        %2384 = vmatprep.mubr.f32.mxu0 %v2074
        %2385 = vmatmul.mubr.f32.gmra.mrb[0].mxu0 %v2071
        %v2386 = vpop.f32.mrb[0].mxu0
        %v2387 = vadd.f32 0.0, %v2386
        %v2388 = vpop.f32.mrb[0].mxu0
        %v2389 = vadd.f32 0.0, %v2388
        %2390 = vmatprep.mubr.f32.mxu0 %v2086
        %2391 = vmatmul.mubr.f32.gmra.mrb[0].mxu0 %v2083
        %v2392 = vpop.f32.mrb[0].mxu0
        %v2393 = vadd.f32 0.0, %v2392
        %v2394 = vpop.f32.mrb[0].mxu0
        %v2395 = vadd.f32 0.0, %v2394
        %2396 = vmatprep.mubr.f32.mxu0 %v2098
        %2397 = vmatmul.mubr.f32.gmra.mrb[0].mxu0 %v2095
        %v2398 = vpop.f32.mrb[0].mxu0
        %v2399 = vadd.f32 0.0, %v2398
        %v2400 = vpop.f32.mrb[0].mxu0
        %v2401 = vadd.f32 0.0, %v2400
        %2402 = vmatprep.mubr.f32.mxu0 %v2110
        %2403 = vmatmul.mubr.f32.gmra.mrb[0].mxu0 %v2107
        %v2404 = vpop.f32.mrb[0].mxu0
        %v2405 = vadd.f32 0.0, %v2404
        %v2406 = vpop.f32.mrb[0].mxu0
        %v2407 = vadd.f32 0.0, %v2406
        %2408 = vmatprep.mubr.f32.mxu0 %v2122
        %2409 = vmatmul.mubr.f32.gmra.mrb[0].mxu0 %v2119
        %v2410 = vpop.f32.mrb[0].mxu0
        %v2411 = vadd.f32 0.0, %v2410
        %v2412 = vpop.f32.mrb[0].mxu0
        %v2413 = vadd.f32 0.0, %v2412
        %2414 = vmatprep.mubr.f32.mxu0 %v2134
        %2415 = vmatmul.mubr.f32.gmra.mrb[0].mxu0 %v2131
        %v2416 = vpop.f32.mrb[0].mxu0
        %v2417 = vadd.f32 0.0, %v2416
        %v2418 = vpop.f32.mrb[0].mxu0
        %v2419 = vadd.f32 0.0, %v2418
        %2420 = vmatprep.mubr.f32.mxu0 %v2146
        %2421 = vmatmul.mubr.f32.gmra.mrb[0].mxu0 %v2143
        %v2422 = vpop.f32.mrb[0].mxu0
        %v2423 = vadd.f32 0.0, %v2422
        %v2424 = vpop.f32.mrb[0].mxu0
        %v2425 = vadd.f32 0.0, %v2424
        %2426 = vdwg.mxu0
        %2427 = vmatprep.subr.mxu0 %v2251
        %2428 = vmatpush1.msra.mxu0 %v2250
        %2429 = vmatprep.subr.mxu0 %v2253
        %2430 = vmatpush1.msra.mxu0 %v2252
        %2431 = vmatprep.subr.mxu0 %v2255
        %2432 = vmatpush1.msra.mxu0 %v2254
        %2433 = vmatprep.subr.mxu0 %v2257
        %2434 = vmatpush1.msra.mxu0 %v2256
        %2435 = vmatprep.subr.mxu0 %v2259
        %2436 = vmatpush1.msra.mxu0 %v2258
        %2437 = vmatprep.subr.mxu0 %v2261
        %2438 = vmatpush1.msra.mxu0 %v2260
        %2439 = vmatprep.subr.mxu0 %v2263
        %2440 = vmatpush1.msra.mxu0 %v2262
        %2441 = vmatprep.subr.mxu0 %v2265
        %2442 = vmatpush1.msra.mxu0 %v2264
        %2443 = vmatprep.subr.mxu0 %v2267
        %2444 = vmatpush1.msra.mxu0 %v2266
        %2445 = vmatprep.subr.mxu0 %v2269
        %2446 = vmatpush1.msra.mxu0 %v2268
        %2447 = vmatprep.subr.mxu0 %v2271
        %2448 = vmatpush1.msra.mxu0 %v2270
        %2449 = vmatprep.subr.mxu0 %v2273
        %2450 = vmatpush1.msra.mxu0 %v2272
        %2451 = vmatprep.subr.mxu0 %v2275
        %2452 = vmatpush1.msra.mxu0 %v2274
        %2453 = vmatprep.subr.mxu0 %v2277
        %2454 = vmatpush1.msra.mxu0 %v2276
        %2455 = vmatprep.subr.mxu0 %v2279
        %2456 = vmatpush1.msra.mxu0 %v2278
        %2457 = vmatprep.subr.mxu0 %v2281
        %2458 = vmatpush1.msra.mxu0 %v2280
        %2459 = vmatprep.subr.mxu0 %v2283
        %2460 = vmatpush1.msra.mxu0 %v2282
        %2461 = vmatprep.subr.mxu0 %v2285
        %2462 = vmatpush1.msra.mxu0 %v2284
        %2463 = vmatprep.subr.mxu0 %v2287
        %2464 = vmatpush1.msra.mxu0 %v2286
        %2465 = vmatprep.subr.mxu0 %v2289
        %2466 = vmatpush1.msra.mxu0 %v2288
        %2467 = vmatprep.subr.mxu0 %v2291
        %2468 = vmatpush1.msra.mxu0 %v2290
        %2469 = vmatprep.subr.mxu0 %v2293
        %2470 = vmatpush1.msra.mxu0 %v2292
        %2471 = vmatprep.subr.mxu0 %v2295
        %2472 = vmatpush1.msra.mxu0 %v2294
        %2473 = vmatprep.subr.mxu0 %v2297
        %2474 = vmatpush1.msra.mxu0 %v2296
        %2475 = vmatprep.subr.mxu0 %v2299
        %2476 = vmatpush1.msra.mxu0 %v2298
        %2477 = vmatprep.subr.mxu0 %v2301
        %2478 = vmatpush1.msra.mxu0 %v2300
        %2479 = vmatprep.subr.mxu0 %v2303
        %2480 = vmatpush1.msra.mxu0 %v2302
        %2481 = vmatprep.subr.mxu0 %v2305
        %2482 = vmatpush1.msra.mxu0 %v2304
        %2483 = vmatprep.subr.mxu0 %v2307
        %2484 = vmatpush1.msra.mxu0 %v2306
        %2485 = vmatprep.subr.mxu0 %v2309
        %2486 = vmatpush1.msra.mxu0 %v2308
        %2487 = vmatprep.subr.mxu0 %v2311
        %2488 = vmatpush1.msra.mxu0 %v2310
        %2489 = vmatprep.subr.mxu0 %v2313
        %2490 = vmatpush1.msra.mxu0 %v2312
        %2491 = vmatprep.mubr.f32.mxu0 %v2068
        %2492 = vmatmul.mubr.f32.gmra.mrb[0].mxu0 %v2065
        %v2493 = vpop.f32.mrb[0].mxu0
        %v2494 = vadd.f32 %v2381, %v2493
        %v2495 = vpop.f32.mrb[0].mxu0
        %v2496 = vadd.f32 %v2383, %v2495
        %2497 = vmatprep.mubr.f32.mxu0 %v2080
        %2498 = vmatmul.mubr.f32.gmra.mrb[0].mxu0 %v2077
        %v2499 = vpop.f32.mrb[0].mxu0
        %v2500 = vadd.f32 %v2387, %v2499
        %v2501 = vpop.f32.mrb[0].mxu0
        %v2502 = vadd.f32 %v2389, %v2501
        %2503 = vmatprep.mubr.f32.mxu0 %v2092
        %2504 = vmatmul.mubr.f32.gmra.mrb[0].mxu0 %v2089
        %v2505 = vpop.f32.mrb[0].mxu0
        %v2506 = vadd.f32 %v2393, %v2505
        %v2507 = vpop.f32.mrb[0].mxu0
        %v2508 = vadd.f32 %v2395, %v2507
        %2509 = vmatprep.mubr.f32.mxu0 %v2104
        %2510 = vmatmul.mubr.f32.gmra.mrb[0].mxu0 %v2101
        %v2511 = vpop.f32.mrb[0].mxu0
        %v2512 = vadd.f32 %v2399, %v2511
        %v2513 = vpop.f32.mrb[0].mxu0
        %v2514 = vadd.f32 %v2401, %v2513
        %2515 = vmatprep.mubr.f32.mxu0 %v2116
        %2516 = vmatmul.mubr.f32.gmra.mrb[0].mxu0 %v2113
        %v2517 = vpop.f32.mrb[0].mxu0
        %v2518 = vadd.f32 %v2405, %v2517
        %v2519 = vpop.f32.mrb[0].mxu0
        %v2520 = vadd.f32 %v2407, %v2519
        %2521 = vmatprep.mubr.f32.mxu0 %v2128
        %2522 = vmatmul.mubr.f32.gmra.mrb[0].mxu0 %v2125
        %v2523 = vpop.f32.mrb[0].mxu0
        %v2524 = vadd.f32 %v2411, %v2523
        %v2525 = vpop.f32.mrb[0].mxu0
        %v2526 = vadd.f32 %v2413, %v2525
        %2527 = vmatprep.mubr.f32.mxu0 %v2140
        %2528 = vmatmul.mubr.f32.gmra.mrb[0].mxu0 %v2137
        %v2529 = vpop.f32.mrb[0].mxu0
        %v2530 = vadd.f32 %v2417, %v2529
        %v2531 = vpop.f32.mrb[0].mxu0
        %v2532 = vadd.f32 %v2419, %v2531
        %2533 = vmatprep.mubr.f32.mxu0 %v2152
        %2534 = vmatmul.mubr.f32.gmra.mrb[0].mxu0 %v2149
        %v2535 = vpop.f32.mrb[0].mxu0
        %v2536 = vadd.f32 %v2423, %v2535
        %v2537 = vpop.f32.mrb[0].mxu0
        %v2538 = vadd.f32 %v2425, %v2537
        %2539 = vdwg.mxu0
        %v2540 = vadd.f32 %v1913, %v2494
        %v2541 = vadd.f32 %v1914, %v2496
        %v2542 = vadd.f32 %v1915, %v2500
        %v2543 = vadd.f32 %v1916, %v2502
        %v2544 = vadd.f32 %v1917, %v2506
        %v2545 = vadd.f32 %v1918, %v2508
        %v2546 = vadd.f32 %v1919, %v2512
        %v2547 = vadd.f32 %v1920, %v2514
        %v2548 = vadd.f32 %v1921, %v2518
        %v2549 = vadd.f32 %v1922, %v2520
        %v2550 = vadd.f32 %v1923, %v2524
        %v2551 = vadd.f32 %v1924, %v2526
        %v2552 = vadd.f32 %v1925, %v2530
        %v2553 = vadd.f32 %v1926, %v2532
        %v2554 = vadd.f32 %v1927, %v2536
        %v2555 = vadd.f32 %v1928, %v2538
        %v2556 = vld [vmem:[%s2] sm:$0x3]
        %v2558 = vlaneseq
        %v2559 = vshrl.u32 %v2558, 7
        %v2560 = vsub.s32 0, %v2559
        %v2561 = vrot.slane %v2556, %v2560
        %v2562 = vlaneseq
        %v2563 = vshrl.u32 %v2562, 7
        %v2564 = vsub.s32 1, %v2563
        %v2565 = vrot.slane %v2556, %v2564
        %v2568 = vadd.f32 %v2540, %v2561
        %v2569 = vadd.f32 %v2541, %v2565
        %v2570 = vadd.f32 %v2542, %v2561
        %v2571 = vadd.f32 %v2543, %v2565
        %v2572 = vadd.f32 %v2544, %v2561
        %v2573 = vadd.f32 %v2545, %v2565
        %v2574 = vadd.f32 %v2546, %v2561
        %v2575 = vadd.f32 %v2547, %v2565
        %v2576 = vadd.f32 %v2548, %v2561
        %v2577 = vadd.f32 %v2549, %v2565
        %v2578 = vadd.f32 %v2550, %v2561
        %v2579 = vadd.f32 %v2551, %v2565
        %v2580 = vadd.f32 %v2552, %v2561
        %v2581 = vadd.f32 %v2553, %v2565
        %v2582 = vadd.f32 %v2554, %v2561
        %v2583 = vadd.f32 %v2555, %v2565
        %2584 = vst [vmem:[%s262] sm:$0xff] %v2568
        %2585 = vst [vmem:[%s262 + $0x8] sm:$0xff] %v2569
        %2586 = vst [vmem:[%s262 + $0x10] sm:$0xff] %v2570
        %2587 = vst [vmem:[%s262 + $0x18] sm:$0xff] %v2571
        %2588 = vst [vmem:[%s262 + $0x20] sm:$0xff] %v2572
        %2589 = vst [vmem:[%s262 + $0x28] sm:$0xff] %v2573
        %2590 = vst [vmem:[%s262 + $0x30] sm:$0xff] %v2574
        %2591 = vst [vmem:[%s262 + $0x38] sm:$0xff] %v2575
        %2592 = vst [vmem:[%s262 + $0x40] sm:$0xff] %v2576
        %2593 = vst [vmem:[%s262 + $0x48] sm:$0xff] %v2577
        %2594 = vst [vmem:[%s262 + $0x50] sm:$0xff] %v2578
        %2595 = vst [vmem:[%s262 + $0x58] sm:$0xff] %v2579
        %2596 = vst [vmem:[%s262 + $0x60] sm:$0xff] %v2580
        %2597 = vst [vmem:[%s262 + $0x68] sm:$0xff] %v2581
        %2598 = vst [vmem:[%s262 + $0x70] sm:$0xff] %v2582
        %2599 = vst [vmem:[%s262 + $0x78] sm:$0xff] %v2583
        %2600 = vst [vmem:[#allocation3] sm:$0xff] 0.0
        %2601 = vst [vmem:[#allocation3 + $0x8] sm:$0xff] 0.0
        %2602 = vst [vmem:[#allocation3 + $0x10] sm:$0x1] 0.0
        %2603 = vst [vmem:[#allocation3 + $0x18] sm:$0x1] 0.0
        %2604 = vst [vmem:[#allocation3 + $0x20] sm:$0xff] 0.0
        %2605 = vst [vmem:[#allocation3 + $0x28] sm:$0xff] 0.0
        %2606 = vst [vmem:[#allocation3 + $0x30] sm:$0x1] 0.0
        %2607 = vst [vmem:[#allocation3 + $0x38] sm:$0x1] 0.0
        %2608 = vst [vmem:[#allocation3 + $0x40] sm:$0xff] 0.0
        %2609 = vst [vmem:[#allocation3 + $0x48] sm:$0xff] 0.0
        %2610 = vst [vmem:[#allocation3 + $0x50] sm:$0x1] 0.0
        %2611 = vst [vmem:[#allocation3 + $0x58] sm:$0x1] 0.0
        %2612 = vst [vmem:[#allocation3 + $0x60] sm:$0xff] 0.0
        %2613 = vst [vmem:[#allocation3 + $0x68] sm:$0xff] 0.0
        %2614 = vst [vmem:[#allocation3 + $0x70] sm:$0x1] 0.0
        %2615 = vst [vmem:[#allocation3 + $0x78] sm:$0x1] 0.0
        %2616 = vst [vmem:[#allocation3 + $0x80] sm:$0xff] 0.0
        %2617 = vst [vmem:[#allocation3 + $0x88] sm:$0xff] 0.0
        %2618 = vst [vmem:[#allocation3 + $0x90] sm:$0x1] 0.0
        %2619 = vst [vmem:[#allocation3 + $0x98] sm:$0x1] 0.0
        %2620 = vst [vmem:[#allocation3 + $0xa0] sm:$0xff] 0.0
        %2621 = vst [vmem:[#allocation3 + $0xa8] sm:$0xff] 0.0
        %2622 = vst [vmem:[#allocation3 + $0xb0] sm:$0x1] 0.0
        %2623 = vst [vmem:[#allocation3 + $0xb8] sm:$0x1] 0.0
        %2624 = vst [vmem:[#allocation3 + $0xc0] sm:$0xff] 0.0
        %2625 = vst [vmem:[#allocation3 + $0xc8] sm:$0xff] 0.0
        %2626 = vst [vmem:[#allocation3 + $0xd0] sm:$0x1] 0.0
        %2627 = vst [vmem:[#allocation3 + $0xd8] sm:$0x1] 0.0
        %2628 = vst [vmem:[#allocation3 + $0xe0] sm:$0xff] 0.0
        %2629 = vst [vmem:[#allocation3 + $0xe8] sm:$0xff] 0.0
        %2630 = vst [vmem:[#allocation3 + $0xf0] sm:$0x1] 0.0
        %2631 = vst [vmem:[#allocation3 + $0xf8] sm:$0x1] 0.0
        %2632 = vst [vmem:[#allocation3 + $0x100] sm:$0xff] 0.0
        %2633 = vst [vmem:[#allocation3 + $0x108] sm:$0xff] 0.0
        %2634 = vst [vmem:[#allocation3 + $0x110] sm:$0x1] 0.0
        %2635 = vst [vmem:[#allocation3 + $0x118] sm:$0x1] 0.0
        %v2636 = vmax.f32 %v2568, 0.0
        %v2637 = vmax.f32 %v2569, 0.0
        %v2638 = vmax.f32 %v2570, 0.0
        %v2639 = vmax.f32 %v2571, 0.0
        %v2640 = vmax.f32 %v2572, 0.0
        %v2641 = vmax.f32 %v2573, 0.0
        %v2642 = vmax.f32 %v2574, 0.0
        %v2643 = vmax.f32 %v2575, 0.0
        %v2644 = vmax.f32 %v2576, 0.0
        %v2645 = vmax.f32 %v2577, 0.0
        %v2646 = vmax.f32 %v2578, 0.0
        %v2647 = vmax.f32 %v2579, 0.0
        %v2648 = vmax.f32 %v2580, 0.0
        %v2649 = vmax.f32 %v2581, 0.0
        %v2650 = vmax.f32 %v2582, 0.0
        %v2651 = vmax.f32 %v2583, 0.0
        %v2668 = vrot.slane %v2636, 7
        %v2669 = vrot.slane %v2637, 7
        %v2670 = vrot.slane %v2638, 7
        %v2671 = vrot.slane %v2639, 7
        %v2672 = vrot.slane %v2640, 7
        %v2673 = vrot.slane %v2641, 7
        %v2674 = vrot.slane %v2642, 7
        %v2675 = vrot.slane %v2643, 7
        %v2676 = vrot.slane %v2644, 7
        %v2677 = vrot.slane %v2645, 7
        %v2678 = vrot.slane %v2646, 7
        %v2679 = vrot.slane %v2647, 7
        %v2680 = vrot.slane %v2648, 7
        %v2681 = vrot.slane %v2649, 7
        %v2682 = vrot.slane %v2650, 7
        %v2683 = vrot.slane %v2651, 7
        %s2700 = scalar_lea.vmem [#allocation3], 32
        %2701 = vst [vmem:[%s2700] sm:$0xfe] %v2668
        %2702 = vst [vmem:[%s2700 + $0x8] sm:$0xfe] %v2669
        %2703 = vst [vmem:[%s2700 + $0x10] sm:$0x1] %v2668
        %2704 = vst [vmem:[%s2700 + $0x18] sm:$0x1] %v2669
        %2705 = vst [vmem:[%s2700 + $0x20] sm:$0xfe] %v2670
        %2706 = vst [vmem:[%s2700 + $0x28] sm:$0xfe] %v2671
        %2707 = vst [vmem:[%s2700 + $0x30] sm:$0x1] %v2670
        %2708 = vst [vmem:[%s2700 + $0x38] sm:$0x1] %v2671
        %2709 = vst [vmem:[%s2700 + $0x40] sm:$0xfe] %v2672
        %2710 = vst [vmem:[%s2700 + $0x48] sm:$0xfe] %v2673
        %2711 = vst [vmem:[%s2700 + $0x50] sm:$0x1] %v2672
        %2712 = vst [vmem:[%s2700 + $0x58] sm:$0x1] %v2673
        %2713 = vst [vmem:[%s2700 + $0x60] sm:$0xfe] %v2674
        %2714 = vst [vmem:[%s2700 + $0x68] sm:$0xfe] %v2675
        %2715 = vst [vmem:[%s2700 + $0x70] sm:$0x1] %v2674
        %2716 = vst [vmem:[%s2700 + $0x78] sm:$0x1] %v2675
        %2717 = vst [vmem:[%s2700 + $0x80] sm:$0xfe] %v2676
        %2718 = vst [vmem:[%s2700 + $0x88] sm:$0xfe] %v2677
        %2719 = vst [vmem:[%s2700 + $0x90] sm:$0x1] %v2676
        %2720 = vst [vmem:[%s2700 + $0x98] sm:$0x1] %v2677
        %2721 = vst [vmem:[%s2700 + $0xa0] sm:$0xfe] %v2678
        %2722 = vst [vmem:[%s2700 + $0xa8] sm:$0xfe] %v2679
        %2723 = vst [vmem:[%s2700 + $0xb0] sm:$0x1] %v2678
        %2724 = vst [vmem:[%s2700 + $0xb8] sm:$0x1] %v2679
        %2725 = vst [vmem:[%s2700 + $0xc0] sm:$0xfe] %v2680
        %2726 = vst [vmem:[%s2700 + $0xc8] sm:$0xfe] %v2681
        %2727 = vst [vmem:[%s2700 + $0xd0] sm:$0x1] %v2680
        %2728 = vst [vmem:[%s2700 + $0xd8] sm:$0x1] %v2681
        %2729 = vst [vmem:[%s2700 + $0xe0] sm:$0xfe] %v2682
        %2730 = vst [vmem:[%s2700 + $0xe8] sm:$0xfe] %v2683
        %2731 = vst [vmem:[%s2700 + $0xf0] sm:$0x1] %v2682
        %2732 = vst [vmem:[%s2700 + $0xf8] sm:$0x1] %v2683
        %v2733 = vld [vmem:[#allocation3] sm:$0xff]
        %v2734 = vld [vmem:[#allocation3 + $0x8] sm:$0xff]
        %v2735 = vld [vmem:[#allocation3 + $0x20] sm:$0xff]
        %v2736 = vld [vmem:[#allocation3 + $0x28] sm:$0xff]
        %v2737 = vld [vmem:[#allocation3 + $0x40] sm:$0xff]
        %v2738 = vld [vmem:[#allocation3 + $0x48] sm:$0xff]
        %v2739 = vld [vmem:[#allocation3 + $0x60] sm:$0xff]
        %v2740 = vld [vmem:[#allocation3 + $0x68] sm:$0xff]
        %v2741 = vld [vmem:[#allocation3 + $0x80] sm:$0xff]
        %v2742 = vld [vmem:[#allocation3 + $0x88] sm:$0xff]
        %v2743 = vld [vmem:[#allocation3 + $0xa0] sm:$0xff]
        %v2744 = vld [vmem:[#allocation3 + $0xa8] sm:$0xff]
        %v2745 = vld [vmem:[#allocation3 + $0xc0] sm:$0xff]
        %v2746 = vld [vmem:[#allocation3 + $0xc8] sm:$0xff]
        %v2747 = vld [vmem:[#allocation3 + $0xe0] sm:$0xff]
        %v2748 = vld [vmem:[#allocation3 + $0xe8] sm:$0xff]
        %v2749 = vld [vmem:[%s3] sm:$0xff]
        %v2750 = vld [vmem:[%s3 + $0x8] sm:$0xff]
        %v2751 = vld [vmem:[%s3 + $0x10] sm:$0xff]
        %v2752 = vld [vmem:[%s3 + $0x18] sm:$0xff]
        %v2753 = vld [vmem:[%s3 + $0x20] sm:$0xff]
        %v2754 = vld [vmem:[%s3 + $0x28] sm:$0xff]
        %v2755 = vld [vmem:[%s3 + $0x30] sm:$0xff]
        %v2756 = vld [vmem:[%s3 + $0x38] sm:$0xff]
        %v2757 = vld [vmem:[%s3 + $0x40] sm:$0xff]
        %v2758 = vld [vmem:[%s3 + $0x48] sm:$0xff]
        %v2759 = vld [vmem:[%s3 + $0x50] sm:$0xff]
        %v2760 = vld [vmem:[%s3 + $0x58] sm:$0xff]
        %v2761 = vld [vmem:[%s3 + $0x60] sm:$0xff]
        %v2762 = vld [vmem:[%s3 + $0x68] sm:$0xff]
        %v2763 = vld [vmem:[%s3 + $0x70] sm:$0xff]
        %v2764 = vld [vmem:[%s3 + $0x78] sm:$0xff]
        %v2765 = vld [vmem:[%s3 + $0x80] sm:$0xff]
        %v2766 = vld [vmem:[%s3 + $0x88] sm:$0xff]
        %v2767 = vld [vmem:[%s3 + $0x90] sm:$0xff]
        %v2768 = vld [vmem:[%s3 + $0x98] sm:$0xff]
        %v2769 = vld [vmem:[%s3 + $0xa0] sm:$0xff]
        %v2770 = vld [vmem:[%s3 + $0xa8] sm:$0xff]
        %v2771 = vld [vmem:[%s3 + $0xb0] sm:$0xff]
        %v2772 = vld [vmem:[%s3 + $0xb8] sm:$0xff]
        %v2773 = vld [vmem:[%s3 + $0xc0] sm:$0xff]
        %v2774 = vld [vmem:[%s3 + $0xc8] sm:$0xff]
        %v2775 = vld [vmem:[%s3 + $0xd0] sm:$0xff]
        %v2776 = vld [vmem:[%s3 + $0xd8] sm:$0xff]
        %v2777 = vld [vmem:[%s3 + $0xe0] sm:$0xff]
        %v2778 = vld [vmem:[%s3 + $0xe8] sm:$0xff]
        %v2779 = vld [vmem:[%s3 + $0xf0] sm:$0xff]
        %v2780 = vld [vmem:[%s3 + $0xf8] sm:$0xff]
        %v2781 = vld [vmem:[#allocation3] sm:$0xfe]
        %v2782 = vld [vmem:[#allocation3 + $0x8] sm:$0xfe]
        %v2783 = vld [vmem:[#allocation3 + $0x10] sm:$0x1]
        %v2784 = vld [vmem:[#allocation3 + $0x18] sm:$0x1]
        %v2785 = vld [vmem:[#allocation3 + $0x20] sm:$0xfe]
        %v2786 = vld [vmem:[#allocation3 + $0x28] sm:$0xfe]
        %v2787 = vld [vmem:[#allocation3 + $0x30] sm:$0x1]
        %v2788 = vld [vmem:[#allocation3 + $0x38] sm:$0x1]
        %v2789 = vld [vmem:[#allocation3 + $0x40] sm:$0xfe]
        %v2790 = vld [vmem:[#allocation3 + $0x48] sm:$0xfe]
        %v2791 = vld [vmem:[#allocation3 + $0x50] sm:$0x1]
        %v2792 = vld [vmem:[#allocation3 + $0x58] sm:$0x1]
        %v2793 = vld [vmem:[#allocation3 + $0x60] sm:$0xfe]
        %v2794 = vld [vmem:[#allocation3 + $0x68] sm:$0xfe]
        %v2795 = vld [vmem:[#allocation3 + $0x70] sm:$0x1]
        %v2796 = vld [vmem:[#allocation3 + $0x78] sm:$0x1]
        %v2797 = vld [vmem:[#allocation3 + $0x80] sm:$0xfe]
        %v2798 = vld [vmem:[#allocation3 + $0x88] sm:$0xfe]
        %v2799 = vld [vmem:[#allocation3 + $0x90] sm:$0x1]
        %v2800 = vld [vmem:[#allocation3 + $0x98] sm:$0x1]
        %v2801 = vld [vmem:[#allocation3 + $0xa0] sm:$0xfe]
        %v2802 = vld [vmem:[#allocation3 + $0xa8] sm:$0xfe]
        %v2803 = vld [vmem:[#allocation3 + $0xb0] sm:$0x1]
        %v2804 = vld [vmem:[#allocation3 + $0xb8] sm:$0x1]
        %v2805 = vld [vmem:[#allocation3 + $0xc0] sm:$0xfe]
        %v2806 = vld [vmem:[#allocation3 + $0xc8] sm:$0xfe]
        %v2807 = vld [vmem:[#allocation3 + $0xd0] sm:$0x1]
        %v2808 = vld [vmem:[#allocation3 + $0xd8] sm:$0x1]
        %v2809 = vld [vmem:[#allocation3 + $0xe0] sm:$0xfe]
        %v2810 = vld [vmem:[#allocation3 + $0xe8] sm:$0xfe]
        %v2811 = vld [vmem:[#allocation3 + $0xf0] sm:$0x1]
        %v2812 = vld [vmem:[#allocation3 + $0xf8] sm:$0x1]
        %v2845 = vrot.slane %v2781, 1
        %v2846 = vrot.slane %v2783, 1
        %v2847 = vsel %vm816, %v2845, %v2846
        %v2848 = vrot.slane %v2782, 1
        %v2849 = vrot.slane %v2784, 1
        %v2850 = vsel %vm816, %v2848, %v2849
        %v2851 = vrot.slane %v2785, 1
        %v2852 = vrot.slane %v2787, 1
        %v2853 = vsel %vm816, %v2851, %v2852
        %v2854 = vrot.slane %v2786, 1
        %v2855 = vrot.slane %v2788, 1
        %v2856 = vsel %vm816, %v2854, %v2855
        %v2857 = vrot.slane %v2789, 1
        %v2858 = vrot.slane %v2791, 1
        %v2859 = vsel %vm816, %v2857, %v2858
        %v2860 = vrot.slane %v2790, 1
        %v2861 = vrot.slane %v2792, 1
        %v2862 = vsel %vm816, %v2860, %v2861
        %v2863 = vrot.slane %v2793, 1
        %v2864 = vrot.slane %v2795, 1
        %v2865 = vsel %vm816, %v2863, %v2864
        %v2866 = vrot.slane %v2794, 1
        %v2867 = vrot.slane %v2796, 1
        %v2868 = vsel %vm816, %v2866, %v2867
        %v2869 = vrot.slane %v2797, 1
        %v2870 = vrot.slane %v2799, 1
        %v2871 = vsel %vm816, %v2869, %v2870
        %v2872 = vrot.slane %v2798, 1
        %v2873 = vrot.slane %v2800, 1
        %v2874 = vsel %vm816, %v2872, %v2873
        %v2875 = vrot.slane %v2801, 1
        %v2876 = vrot.slane %v2803, 1
        %v2877 = vsel %vm816, %v2875, %v2876
        %v2878 = vrot.slane %v2802, 1
        %v2879 = vrot.slane %v2804, 1
        %v2880 = vsel %vm816, %v2878, %v2879
        %v2881 = vrot.slane %v2805, 1
        %v2882 = vrot.slane %v2807, 1
        %v2883 = vsel %vm816, %v2881, %v2882
        %v2884 = vrot.slane %v2806, 1
        %v2885 = vrot.slane %v2808, 1
        %v2886 = vsel %vm816, %v2884, %v2885
        %v2887 = vrot.slane %v2809, 1
        %v2888 = vrot.slane %v2811, 1
        %v2889 = vsel %vm816, %v2887, %v2888
        %v2890 = vrot.slane %v2810, 1
        %v2891 = vrot.slane %v2812, 1
        %v2892 = vsel %vm816, %v2890, %v2891
        %s2909 = scalar_lea.vmem %s3, 256
        %v2910 = vld [vmem:[%s2909] sm:$0xff]
        %v2911 = vld [vmem:[%s2909 + $0x8] sm:$0xff]
        %v2912 = vld [vmem:[%s2909 + $0x10] sm:$0xff]
        %v2913 = vld [vmem:[%s2909 + $0x18] sm:$0xff]
        %v2914 = vld [vmem:[%s2909 + $0x20] sm:$0xff]
        %v2915 = vld [vmem:[%s2909 + $0x28] sm:$0xff]
        %v2916 = vld [vmem:[%s2909 + $0x30] sm:$0xff]
        %v2917 = vld [vmem:[%s2909 + $0x38] sm:$0xff]
        %v2918 = vld [vmem:[%s2909 + $0x40] sm:$0xff]
        %v2919 = vld [vmem:[%s2909 + $0x48] sm:$0xff]
        %v2920 = vld [vmem:[%s2909 + $0x50] sm:$0xff]
        %v2921 = vld [vmem:[%s2909 + $0x58] sm:$0xff]
        %v2922 = vld [vmem:[%s2909 + $0x60] sm:$0xff]
        %v2923 = vld [vmem:[%s2909 + $0x68] sm:$0xff]
        %v2924 = vld [vmem:[%s2909 + $0x70] sm:$0xff]
        %v2925 = vld [vmem:[%s2909 + $0x78] sm:$0xff]
        %v2926 = vld [vmem:[%s2909 + $0x80] sm:$0xff]
        %v2927 = vld [vmem:[%s2909 + $0x88] sm:$0xff]
        %v2928 = vld [vmem:[%s2909 + $0x90] sm:$0xff]
        %v2929 = vld [vmem:[%s2909 + $0x98] sm:$0xff]
        %v2930 = vld [vmem:[%s2909 + $0xa0] sm:$0xff]
        %v2931 = vld [vmem:[%s2909 + $0xa8] sm:$0xff]
        %v2932 = vld [vmem:[%s2909 + $0xb0] sm:$0xff]
        %v2933 = vld [vmem:[%s2909 + $0xb8] sm:$0xff]
        %v2934 = vld [vmem:[%s2909 + $0xc0] sm:$0xff]
        %v2935 = vld [vmem:[%s2909 + $0xc8] sm:$0xff]
        %v2936 = vld [vmem:[%s2909 + $0xd0] sm:$0xff]
        %v2937 = vld [vmem:[%s2909 + $0xd8] sm:$0xff]
        %v2938 = vld [vmem:[%s2909 + $0xe0] sm:$0xff]
        %v2939 = vld [vmem:[%s2909 + $0xe8] sm:$0xff]
        %v2940 = vld [vmem:[%s2909 + $0xf0] sm:$0xff]
        %v2941 = vld [vmem:[%s2909 + $0xf8] sm:$0xff]
        %2942 = vmatprep.subr.mxu0 0.0
        %2943 = vmatpush1.msra.mxu0 %v2910
        %2944 = vmatprep.subr.mxu0 0.0
        %2945 = vmatpush1.msra.mxu0 %v2911
        %2946 = vmatprep.subr.mxu0 0.0
        %2947 = vmatpush1.msra.mxu0 %v2912
        %2948 = vmatprep.subr.mxu0 0.0
        %2949 = vmatpush1.msra.mxu0 %v2913
        %2950 = vmatprep.subr.mxu0 0.0
        %2951 = vmatpush1.msra.mxu0 %v2914
        %2952 = vmatprep.subr.mxu0 0.0
        %2953 = vmatpush1.msra.mxu0 %v2915
        %2954 = vmatprep.subr.mxu0 0.0
        %2955 = vmatpush1.msra.mxu0 %v2916
        %2956 = vmatprep.subr.mxu0 0.0
        %2957 = vmatpush1.msra.mxu0 %v2917
        %2958 = vmatprep.subr.mxu0 0.0
        %2959 = vmatpush1.msra.mxu0 %v2918
        %2960 = vmatprep.subr.mxu0 0.0
        %2961 = vmatpush1.msra.mxu0 %v2919
        %2962 = vmatprep.subr.mxu0 0.0
        %2963 = vmatpush1.msra.mxu0 %v2920
        %2964 = vmatprep.subr.mxu0 0.0
        %2965 = vmatpush1.msra.mxu0 %v2921
        %2966 = vmatprep.subr.mxu0 0.0
        %2967 = vmatpush1.msra.mxu0 %v2922
        %2968 = vmatprep.subr.mxu0 0.0
        %2969 = vmatpush1.msra.mxu0 %v2923
        %2970 = vmatprep.subr.mxu0 0.0
        %2971 = vmatpush1.msra.mxu0 %v2924
        %2972 = vmatprep.subr.mxu0 0.0
        %2973 = vmatpush1.msra.mxu0 %v2925
        %2974 = vmatprep.subr.mxu0 0.0
        %2975 = vmatpush1.msra.mxu0 %v2926
        %2976 = vmatprep.subr.mxu0 0.0
        %2977 = vmatpush1.msra.mxu0 %v2927
        %2978 = vmatprep.subr.mxu0 0.0
        %2979 = vmatpush1.msra.mxu0 %v2928
        %2980 = vmatprep.subr.mxu0 0.0
        %2981 = vmatpush1.msra.mxu0 %v2929
        %2982 = vmatprep.subr.mxu0 0.0
        %2983 = vmatpush1.msra.mxu0 %v2930
        %2984 = vmatprep.subr.mxu0 0.0
        %2985 = vmatpush1.msra.mxu0 %v2931
        %2986 = vmatprep.subr.mxu0 0.0
        %2987 = vmatpush1.msra.mxu0 %v2932
        %2988 = vmatprep.subr.mxu0 0.0
        %2989 = vmatpush1.msra.mxu0 %v2933
        %2990 = vmatprep.subr.mxu0 0.0
        %2991 = vmatpush1.msra.mxu0 %v2934
        %2992 = vmatprep.subr.mxu0 0.0
        %2993 = vmatpush1.msra.mxu0 %v2935
        %2994 = vmatprep.subr.mxu0 0.0
        %2995 = vmatpush1.msra.mxu0 %v2936
        %2996 = vmatprep.subr.mxu0 0.0
        %2997 = vmatpush1.msra.mxu0 %v2937
        %2998 = vmatprep.subr.mxu0 0.0
        %2999 = vmatpush1.msra.mxu0 %v2938
        %3000 = vmatprep.subr.mxu0 0.0
        %3001 = vmatpush1.msra.mxu0 %v2939
        %3002 = vmatprep.subr.mxu0 0.0
        %3003 = vmatpush1.msra.mxu0 %v2940
        %3004 = vmatprep.subr.mxu0 0.0
        %3005 = vmatpush1.msra.mxu0 %v2941
        %3006 = vmatprep.mubr.f32.mxu0 %v2850
        %3007 = vmatmul.mubr.f32.gmra.mrb[0].mxu0 %v2847
        %v3008 = vpop.f32.mrb[0].mxu0
        %v3009 = vadd.f32 0.0, %v3008
        %v3010 = vpop.f32.mrb[0].mxu0
        %3011 = vmatprep.mubr.f32.mxu0 %v2856
        %3012 = vmatmul.mubr.f32.gmra.mrb[0].mxu0 %v2853
        %v3013 = vpop.f32.mrb[0].mxu0
        %v3014 = vadd.f32 0.0, %v3013
        %v3015 = vpop.f32.mrb[0].mxu0
        %3016 = vmatprep.mubr.f32.mxu0 %v2862
        %3017 = vmatmul.mubr.f32.gmra.mrb[0].mxu0 %v2859
        %v3018 = vpop.f32.mrb[0].mxu0
        %v3019 = vadd.f32 0.0, %v3018
        %v3020 = vpop.f32.mrb[0].mxu0
        %3021 = vmatprep.mubr.f32.mxu0 %v2868
        %3022 = vmatmul.mubr.f32.gmra.mrb[0].mxu0 %v2865
        %v3023 = vpop.f32.mrb[0].mxu0
        %v3024 = vadd.f32 0.0, %v3023
        %v3025 = vpop.f32.mrb[0].mxu0
        %3026 = vmatprep.mubr.f32.mxu0 %v2874
        %3027 = vmatmul.mubr.f32.gmra.mrb[0].mxu0 %v2871
        %v3028 = vpop.f32.mrb[0].mxu0
        %v3029 = vadd.f32 0.0, %v3028
        %v3030 = vpop.f32.mrb[0].mxu0
        %3031 = vmatprep.mubr.f32.mxu0 %v2880
        %3032 = vmatmul.mubr.f32.gmra.mrb[0].mxu0 %v2877
        %v3033 = vpop.f32.mrb[0].mxu0
        %v3034 = vadd.f32 0.0, %v3033
        %v3035 = vpop.f32.mrb[0].mxu0
        %3036 = vmatprep.mubr.f32.mxu0 %v2886
        %3037 = vmatmul.mubr.f32.gmra.mrb[0].mxu0 %v2883
        %v3038 = vpop.f32.mrb[0].mxu0
        %v3039 = vadd.f32 0.0, %v3038
        %v3040 = vpop.f32.mrb[0].mxu0
        %3041 = vmatprep.mubr.f32.mxu0 %v2892
        %3042 = vmatmul.mubr.f32.gmra.mrb[0].mxu0 %v2889
        %v3043 = vpop.f32.mrb[0].mxu0
        %v3044 = vadd.f32 0.0, %v3043
        %v3045 = vpop.f32.mrb[0].mxu0
        %3046 = vdwg.mxu0
        %3047 = vmatprep.subr.mxu0 0.0
        %3048 = vmatpush1.msra.mxu0 %v2749
        %3049 = vmatprep.subr.mxu0 0.0
        %3050 = vmatpush1.msra.mxu0 %v2750
        %3051 = vmatprep.subr.mxu0 0.0
        %3052 = vmatpush1.msra.mxu0 %v2751
        %3053 = vmatprep.subr.mxu0 0.0
        %3054 = vmatpush1.msra.mxu0 %v2752
        %3055 = vmatprep.subr.mxu0 0.0
        %3056 = vmatpush1.msra.mxu0 %v2753
        %3057 = vmatprep.subr.mxu0 0.0
        %3058 = vmatpush1.msra.mxu0 %v2754
        %3059 = vmatprep.subr.mxu0 0.0
        %3060 = vmatpush1.msra.mxu0 %v2755
        %3061 = vmatprep.subr.mxu0 0.0
        %3062 = vmatpush1.msra.mxu0 %v2756
        %3063 = vmatprep.subr.mxu0 0.0
        %3064 = vmatpush1.msra.mxu0 %v2757
        %3065 = vmatprep.subr.mxu0 0.0
        %3066 = vmatpush1.msra.mxu0 %v2758
        %3067 = vmatprep.subr.mxu0 0.0
        %3068 = vmatpush1.msra.mxu0 %v2759
        %3069 = vmatprep.subr.mxu0 0.0
        %3070 = vmatpush1.msra.mxu0 %v2760
        %3071 = vmatprep.subr.mxu0 0.0
        %3072 = vmatpush1.msra.mxu0 %v2761
        %3073 = vmatprep.subr.mxu0 0.0
        %3074 = vmatpush1.msra.mxu0 %v2762
        %3075 = vmatprep.subr.mxu0 0.0
        %3076 = vmatpush1.msra.mxu0 %v2763
        %3077 = vmatprep.subr.mxu0 0.0
        %3078 = vmatpush1.msra.mxu0 %v2764
        %3079 = vmatprep.subr.mxu0 0.0
        %3080 = vmatpush1.msra.mxu0 %v2765
        %3081 = vmatprep.subr.mxu0 0.0
        %3082 = vmatpush1.msra.mxu0 %v2766
        %3083 = vmatprep.subr.mxu0 0.0
        %3084 = vmatpush1.msra.mxu0 %v2767
        %3085 = vmatprep.subr.mxu0 0.0
        %3086 = vmatpush1.msra.mxu0 %v2768
        %3087 = vmatprep.subr.mxu0 0.0
        %3088 = vmatpush1.msra.mxu0 %v2769
        %3089 = vmatprep.subr.mxu0 0.0
        %3090 = vmatpush1.msra.mxu0 %v2770
        %3091 = vmatprep.subr.mxu0 0.0
        %3092 = vmatpush1.msra.mxu0 %v2771
        %3093 = vmatprep.subr.mxu0 0.0
        %3094 = vmatpush1.msra.mxu0 %v2772
        %3095 = vmatprep.subr.mxu0 0.0
        %3096 = vmatpush1.msra.mxu0 %v2773
        %3097 = vmatprep.subr.mxu0 0.0
        %3098 = vmatpush1.msra.mxu0 %v2774
        %3099 = vmatprep.subr.mxu0 0.0
        %3100 = vmatpush1.msra.mxu0 %v2775
        %3101 = vmatprep.subr.mxu0 0.0
        %3102 = vmatpush1.msra.mxu0 %v2776
        %3103 = vmatprep.subr.mxu0 0.0
        %3104 = vmatpush1.msra.mxu0 %v2777
        %3105 = vmatprep.subr.mxu0 0.0
        %3106 = vmatpush1.msra.mxu0 %v2778
        %3107 = vmatprep.subr.mxu0 0.0
        %3108 = vmatpush1.msra.mxu0 %v2779
        %3109 = vmatprep.subr.mxu0 0.0
        %3110 = vmatpush1.msra.mxu0 %v2780
        %3111 = vmatprep.mubr.f32.mxu0 %v2734
        %3112 = vmatmul.mubr.f32.gmra.mrb[0].mxu0 %v2733
        %v3113 = vpop.f32.mrb[0].mxu0
        %v3114 = vadd.f32 %v3009, %v3113
        %v3115 = vpop.f32.mrb[0].mxu0
        %3116 = vmatprep.mubr.f32.mxu0 %v2736
        %3117 = vmatmul.mubr.f32.gmra.mrb[0].mxu0 %v2735
        %v3118 = vpop.f32.mrb[0].mxu0
        %v3119 = vadd.f32 %v3014, %v3118
        %v3120 = vpop.f32.mrb[0].mxu0
        %3121 = vmatprep.mubr.f32.mxu0 %v2738
        %3122 = vmatmul.mubr.f32.gmra.mrb[0].mxu0 %v2737
        %v3123 = vpop.f32.mrb[0].mxu0
        %v3124 = vadd.f32 %v3019, %v3123
        %v3125 = vpop.f32.mrb[0].mxu0
        %3126 = vmatprep.mubr.f32.mxu0 %v2740
        %3127 = vmatmul.mubr.f32.gmra.mrb[0].mxu0 %v2739
        %v3128 = vpop.f32.mrb[0].mxu0
        %v3129 = vadd.f32 %v3024, %v3128
        %v3130 = vpop.f32.mrb[0].mxu0
        %3131 = vmatprep.mubr.f32.mxu0 %v2742
        %3132 = vmatmul.mubr.f32.gmra.mrb[0].mxu0 %v2741
        %v3133 = vpop.f32.mrb[0].mxu0
        %v3134 = vadd.f32 %v3029, %v3133
        %v3135 = vpop.f32.mrb[0].mxu0
        %3136 = vmatprep.mubr.f32.mxu0 %v2744
        %3137 = vmatmul.mubr.f32.gmra.mrb[0].mxu0 %v2743
        %v3138 = vpop.f32.mrb[0].mxu0
        %v3139 = vadd.f32 %v3034, %v3138
        %v3140 = vpop.f32.mrb[0].mxu0
        %3141 = vmatprep.mubr.f32.mxu0 %v2746
        %3142 = vmatmul.mubr.f32.gmra.mrb[0].mxu0 %v2745
        %v3143 = vpop.f32.mrb[0].mxu0
        %v3144 = vadd.f32 %v3039, %v3143
        %v3145 = vpop.f32.mrb[0].mxu0
        %3146 = vmatprep.mubr.f32.mxu0 %v2748
        %3147 = vmatmul.mubr.f32.gmra.mrb[0].mxu0 %v2747
        %v3148 = vpop.f32.mrb[0].mxu0
        %v3149 = vadd.f32 %v3044, %v3148
        %v3150 = vpop.f32.mrb[0].mxu0
        %3151 = vdwg.mxu0
        %v3152 = vld [vmem:[%s2700] sm:$0xff]
        %v3153 = vld [vmem:[%s2700 + $0x8] sm:$0xff]
        %v3154 = vld [vmem:[%s2700 + $0x20] sm:$0xff]
        %v3155 = vld [vmem:[%s2700 + $0x28] sm:$0xff]
        %v3156 = vld [vmem:[%s2700 + $0x40] sm:$0xff]
        %v3157 = vld [vmem:[%s2700 + $0x48] sm:$0xff]
        %v3158 = vld [vmem:[%s2700 + $0x60] sm:$0xff]
        %v3159 = vld [vmem:[%s2700 + $0x68] sm:$0xff]
        %v3160 = vld [vmem:[%s2700 + $0x80] sm:$0xff]
        %v3161 = vld [vmem:[%s2700 + $0x88] sm:$0xff]
        %v3162 = vld [vmem:[%s2700 + $0xa0] sm:$0xff]
        %v3163 = vld [vmem:[%s2700 + $0xa8] sm:$0xff]
        %v3164 = vld [vmem:[%s2700 + $0xc0] sm:$0xff]
        %v3165 = vld [vmem:[%s2700 + $0xc8] sm:$0xff]
        %v3166 = vld [vmem:[%s2700 + $0xe0] sm:$0xff]
        %v3167 = vld [vmem:[%s2700 + $0xe8] sm:$0xff]
        %s3168 = scalar_lea.vmem %s3, 512
        %v3169 = vld [vmem:[%s3168] sm:$0xff]
        %v3170 = vld [vmem:[%s3168 + $0x8] sm:$0xff]
        %v3171 = vld [vmem:[%s3168 + $0x10] sm:$0xff]
        %v3172 = vld [vmem:[%s3168 + $0x18] sm:$0xff]
        %v3173 = vld [vmem:[%s3168 + $0x20] sm:$0xff]
        %v3174 = vld [vmem:[%s3168 + $0x28] sm:$0xff]
        %v3175 = vld [vmem:[%s3168 + $0x30] sm:$0xff]
        %v3176 = vld [vmem:[%s3168 + $0x38] sm:$0xff]
        %v3177 = vld [vmem:[%s3168 + $0x40] sm:$0xff]
        %v3178 = vld [vmem:[%s3168 + $0x48] sm:$0xff]
        %v3179 = vld [vmem:[%s3168 + $0x50] sm:$0xff]
        %v3180 = vld [vmem:[%s3168 + $0x58] sm:$0xff]
        %v3181 = vld [vmem:[%s3168 + $0x60] sm:$0xff]
        %v3182 = vld [vmem:[%s3168 + $0x68] sm:$0xff]
        %v3183 = vld [vmem:[%s3168 + $0x70] sm:$0xff]
        %v3184 = vld [vmem:[%s3168 + $0x78] sm:$0xff]
        %v3185 = vld [vmem:[%s3168 + $0x80] sm:$0xff]
        %v3186 = vld [vmem:[%s3168 + $0x88] sm:$0xff]
        %v3187 = vld [vmem:[%s3168 + $0x90] sm:$0xff]
        %v3188 = vld [vmem:[%s3168 + $0x98] sm:$0xff]
        %v3189 = vld [vmem:[%s3168 + $0xa0] sm:$0xff]
        %v3190 = vld [vmem:[%s3168 + $0xa8] sm:$0xff]
        %v3191 = vld [vmem:[%s3168 + $0xb0] sm:$0xff]
        %v3192 = vld [vmem:[%s3168 + $0xb8] sm:$0xff]
        %v3193 = vld [vmem:[%s3168 + $0xc0] sm:$0xff]
        %v3194 = vld [vmem:[%s3168 + $0xc8] sm:$0xff]
        %v3195 = vld [vmem:[%s3168 + $0xd0] sm:$0xff]
        %v3196 = vld [vmem:[%s3168 + $0xd8] sm:$0xff]
        %v3197 = vld [vmem:[%s3168 + $0xe0] sm:$0xff]
        %v3198 = vld [vmem:[%s3168 + $0xe8] sm:$0xff]
        %v3199 = vld [vmem:[%s3168 + $0xf0] sm:$0xff]
        %v3200 = vld [vmem:[%s3168 + $0xf8] sm:$0xff]
        %3201 = vmatprep.subr.mxu0 0.0
        %3202 = vmatpush1.msra.mxu0 %v3169
        %3203 = vmatprep.subr.mxu0 0.0
        %3204 = vmatpush1.msra.mxu0 %v3170
        %3205 = vmatprep.subr.mxu0 0.0
        %3206 = vmatpush1.msra.mxu0 %v3171
        %3207 = vmatprep.subr.mxu0 0.0
        %3208 = vmatpush1.msra.mxu0 %v3172
        %3209 = vmatprep.subr.mxu0 0.0
        %3210 = vmatpush1.msra.mxu0 %v3173
        %3211 = vmatprep.subr.mxu0 0.0
        %3212 = vmatpush1.msra.mxu0 %v3174
        %3213 = vmatprep.subr.mxu0 0.0
        %3214 = vmatpush1.msra.mxu0 %v3175
        %3215 = vmatprep.subr.mxu0 0.0
        %3216 = vmatpush1.msra.mxu0 %v3176
        %3217 = vmatprep.subr.mxu0 0.0
        %3218 = vmatpush1.msra.mxu0 %v3177
        %3219 = vmatprep.subr.mxu0 0.0
        %3220 = vmatpush1.msra.mxu0 %v3178
        %3221 = vmatprep.subr.mxu0 0.0
        %3222 = vmatpush1.msra.mxu0 %v3179
        %3223 = vmatprep.subr.mxu0 0.0
        %3224 = vmatpush1.msra.mxu0 %v3180
        %3225 = vmatprep.subr.mxu0 0.0
        %3226 = vmatpush1.msra.mxu0 %v3181
        %3227 = vmatprep.subr.mxu0 0.0
        %3228 = vmatpush1.msra.mxu0 %v3182
        %3229 = vmatprep.subr.mxu0 0.0
        %3230 = vmatpush1.msra.mxu0 %v3183
        %3231 = vmatprep.subr.mxu0 0.0
        %3232 = vmatpush1.msra.mxu0 %v3184
        %3233 = vmatprep.subr.mxu0 0.0
        %3234 = vmatpush1.msra.mxu0 %v3185
        %3235 = vmatprep.subr.mxu0 0.0
        %3236 = vmatpush1.msra.mxu0 %v3186
        %3237 = vmatprep.subr.mxu0 0.0
        %3238 = vmatpush1.msra.mxu0 %v3187
        %3239 = vmatprep.subr.mxu0 0.0
        %3240 = vmatpush1.msra.mxu0 %v3188
        %3241 = vmatprep.subr.mxu0 0.0
        %3242 = vmatpush1.msra.mxu0 %v3189
        %3243 = vmatprep.subr.mxu0 0.0
        %3244 = vmatpush1.msra.mxu0 %v3190
        %3245 = vmatprep.subr.mxu0 0.0
        %3246 = vmatpush1.msra.mxu0 %v3191
        %3247 = vmatprep.subr.mxu0 0.0
        %3248 = vmatpush1.msra.mxu0 %v3192
        %3249 = vmatprep.subr.mxu0 0.0
        %3250 = vmatpush1.msra.mxu0 %v3193
        %3251 = vmatprep.subr.mxu0 0.0
        %3252 = vmatpush1.msra.mxu0 %v3194
        %3253 = vmatprep.subr.mxu0 0.0
        %3254 = vmatpush1.msra.mxu0 %v3195
        %3255 = vmatprep.subr.mxu0 0.0
        %3256 = vmatpush1.msra.mxu0 %v3196
        %3257 = vmatprep.subr.mxu0 0.0
        %3258 = vmatpush1.msra.mxu0 %v3197
        %3259 = vmatprep.subr.mxu0 0.0
        %3260 = vmatpush1.msra.mxu0 %v3198
        %3261 = vmatprep.subr.mxu0 0.0
        %3262 = vmatpush1.msra.mxu0 %v3199
        %3263 = vmatprep.subr.mxu0 0.0
        %3264 = vmatpush1.msra.mxu0 %v3200
        %3265 = vmatprep.mubr.f32.mxu0 %v3153
        %3266 = vmatmul.mubr.f32.gmra.mrb[0].mxu0 %v3152
        %v3267 = vpop.f32.mrb[0].mxu0
        %v3268 = vadd.f32 0.0, %v3267
        %v3269 = vpop.f32.mrb[0].mxu0
        %3270 = vmatprep.mubr.f32.mxu0 %v3155
        %3271 = vmatmul.mubr.f32.gmra.mrb[0].mxu0 %v3154
        %v3272 = vpop.f32.mrb[0].mxu0
        %v3273 = vadd.f32 0.0, %v3272
        %v3274 = vpop.f32.mrb[0].mxu0
        %3275 = vmatprep.mubr.f32.mxu0 %v3157
        %3276 = vmatmul.mubr.f32.gmra.mrb[0].mxu0 %v3156
        %v3277 = vpop.f32.mrb[0].mxu0
        %v3278 = vadd.f32 0.0, %v3277
        %v3279 = vpop.f32.mrb[0].mxu0
        %3280 = vmatprep.mubr.f32.mxu0 %v3159
        %3281 = vmatmul.mubr.f32.gmra.mrb[0].mxu0 %v3158
        %v3282 = vpop.f32.mrb[0].mxu0
        %v3283 = vadd.f32 0.0, %v3282
        %v3284 = vpop.f32.mrb[0].mxu0
        %3285 = vmatprep.mubr.f32.mxu0 %v3161
        %3286 = vmatmul.mubr.f32.gmra.mrb[0].mxu0 %v3160
        %v3287 = vpop.f32.mrb[0].mxu0
        %v3288 = vadd.f32 0.0, %v3287
        %v3289 = vpop.f32.mrb[0].mxu0
        %3290 = vmatprep.mubr.f32.mxu0 %v3163
        %3291 = vmatmul.mubr.f32.gmra.mrb[0].mxu0 %v3162
        %v3292 = vpop.f32.mrb[0].mxu0
        %v3293 = vadd.f32 0.0, %v3292
        %v3294 = vpop.f32.mrb[0].mxu0
        %3295 = vmatprep.mubr.f32.mxu0 %v3165
        %3296 = vmatmul.mubr.f32.gmra.mrb[0].mxu0 %v3164
        %v3297 = vpop.f32.mrb[0].mxu0
        %v3298 = vadd.f32 0.0, %v3297
        %v3299 = vpop.f32.mrb[0].mxu0
        %3300 = vmatprep.mubr.f32.mxu0 %v3167
        %3301 = vmatmul.mubr.f32.gmra.mrb[0].mxu0 %v3166
        %v3302 = vpop.f32.mrb[0].mxu0
        %v3303 = vadd.f32 0.0, %v3302
        %v3304 = vpop.f32.mrb[0].mxu0
        %3305 = vdwg.mxu0
        %v3306 = vadd.f32 %v3114, %v3268
        %v3307 = vadd.f32 %v3119, %v3273
        %v3308 = vadd.f32 %v3124, %v3278
        %v3309 = vadd.f32 %v3129, %v3283
        %v3310 = vadd.f32 %v3134, %v3288
        %v3311 = vadd.f32 %v3139, %v3293
        %v3312 = vadd.f32 %v3144, %v3298
        %v3313 = vadd.f32 %v3149, %v3303
        %v3314 = vld [vmem:[%s2700] sm:$0xfe]
        %v3315 = vld [vmem:[%s2700 + $0x8] sm:$0xfe]
        %v3316 = vld [vmem:[%s2700 + $0x10] sm:$0x1]
        %v3317 = vld [vmem:[%s2700 + $0x18] sm:$0x1]
        %v3318 = vld [vmem:[%s2700 + $0x20] sm:$0xfe]
        %v3319 = vld [vmem:[%s2700 + $0x28] sm:$0xfe]
        %v3320 = vld [vmem:[%s2700 + $0x30] sm:$0x1]
        %v3321 = vld [vmem:[%s2700 + $0x38] sm:$0x1]
        %v3322 = vld [vmem:[%s2700 + $0x40] sm:$0xfe]
        %v3323 = vld [vmem:[%s2700 + $0x48] sm:$0xfe]
        %v3324 = vld [vmem:[%s2700 + $0x50] sm:$0x1]
        %v3325 = vld [vmem:[%s2700 + $0x58] sm:$0x1]
        %v3326 = vld [vmem:[%s2700 + $0x60] sm:$0xfe]
        %v3327 = vld [vmem:[%s2700 + $0x68] sm:$0xfe]
        %v3328 = vld [vmem:[%s2700 + $0x70] sm:$0x1]
        %v3329 = vld [vmem:[%s2700 + $0x78] sm:$0x1]
        %v3330 = vld [vmem:[%s2700 + $0x80] sm:$0xfe]
        %v3331 = vld [vmem:[%s2700 + $0x88] sm:$0xfe]
        %v3332 = vld [vmem:[%s2700 + $0x90] sm:$0x1]
        %v3333 = vld [vmem:[%s2700 + $0x98] sm:$0x1]
        %v3334 = vld [vmem:[%s2700 + $0xa0] sm:$0xfe]
        %v3335 = vld [vmem:[%s2700 + $0xa8] sm:$0xfe]
        %v3336 = vld [vmem:[%s2700 + $0xb0] sm:$0x1]
        %v3337 = vld [vmem:[%s2700 + $0xb8] sm:$0x1]
        %v3338 = vld [vmem:[%s2700 + $0xc0] sm:$0xfe]
        %v3339 = vld [vmem:[%s2700 + $0xc8] sm:$0xfe]
        %v3340 = vld [vmem:[%s2700 + $0xd0] sm:$0x1]
        %v3341 = vld [vmem:[%s2700 + $0xd8] sm:$0x1]
        %v3342 = vld [vmem:[%s2700 + $0xe0] sm:$0xfe]
        %v3343 = vld [vmem:[%s2700 + $0xe8] sm:$0xfe]
        %v3344 = vld [vmem:[%s2700 + $0xf0] sm:$0x1]
        %v3345 = vld [vmem:[%s2700 + $0xf8] sm:$0x1]
        %v3378 = vrot.slane %v3314, 1
        %v3379 = vrot.slane %v3316, 1
        %v3380 = vsel %vm816, %v3378, %v3379
        %v3381 = vrot.slane %v3315, 1
        %v3382 = vrot.slane %v3317, 1
        %v3383 = vsel %vm816, %v3381, %v3382
        %v3384 = vrot.slane %v3318, 1
        %v3385 = vrot.slane %v3320, 1
        %v3386 = vsel %vm816, %v3384, %v3385
        %v3387 = vrot.slane %v3319, 1
        %v3388 = vrot.slane %v3321, 1
        %v3389 = vsel %vm816, %v3387, %v3388
        %v3390 = vrot.slane %v3322, 1
        %v3391 = vrot.slane %v3324, 1
        %v3392 = vsel %vm816, %v3390, %v3391
        %v3393 = vrot.slane %v3323, 1
        %v3394 = vrot.slane %v3325, 1
        %v3395 = vsel %vm816, %v3393, %v3394
        %v3396 = vrot.slane %v3326, 1
        %v3397 = vrot.slane %v3328, 1
        %v3398 = vsel %vm816, %v3396, %v3397
        %v3399 = vrot.slane %v3327, 1
        %v3400 = vrot.slane %v3329, 1
        %v3401 = vsel %vm816, %v3399, %v3400
        %v3402 = vrot.slane %v3330, 1
        %v3403 = vrot.slane %v3332, 1
        %v3404 = vsel %vm816, %v3402, %v3403
        %v3405 = vrot.slane %v3331, 1
        %v3406 = vrot.slane %v3333, 1
        %v3407 = vsel %vm816, %v3405, %v3406
        %v3408 = vrot.slane %v3334, 1
        %v3409 = vrot.slane %v3336, 1
        %v3410 = vsel %vm816, %v3408, %v3409
        %v3411 = vrot.slane %v3335, 1
        %v3412 = vrot.slane %v3337, 1
        %v3413 = vsel %vm816, %v3411, %v3412
        %v3414 = vrot.slane %v3338, 1
        %v3415 = vrot.slane %v3340, 1
        %v3416 = vsel %vm816, %v3414, %v3415
        %v3417 = vrot.slane %v3339, 1
        %v3418 = vrot.slane %v3341, 1
        %v3419 = vsel %vm816, %v3417, %v3418
        %v3420 = vrot.slane %v3342, 1
        %v3421 = vrot.slane %v3344, 1
        %v3422 = vsel %vm816, %v3420, %v3421
        %v3423 = vrot.slane %v3343, 1
        %v3424 = vrot.slane %v3345, 1
        %v3425 = vsel %vm816, %v3423, %v3424
        %s3442 = scalar_lea.vmem %s3, 768
        %v3443 = vld [vmem:[%s3442] sm:$0xff]
        %v3444 = vld [vmem:[%s3442 + $0x8] sm:$0xff]
        %v3445 = vld [vmem:[%s3442 + $0x10] sm:$0xff]
        %v3446 = vld [vmem:[%s3442 + $0x18] sm:$0xff]
        %v3447 = vld [vmem:[%s3442 + $0x20] sm:$0xff]
        %v3448 = vld [vmem:[%s3442 + $0x28] sm:$0xff]
        %v3449 = vld [vmem:[%s3442 + $0x30] sm:$0xff]
        %v3450 = vld [vmem:[%s3442 + $0x38] sm:$0xff]
        %v3451 = vld [vmem:[%s3442 + $0x40] sm:$0xff]
        %v3452 = vld [vmem:[%s3442 + $0x48] sm:$0xff]
        %v3453 = vld [vmem:[%s3442 + $0x50] sm:$0xff]
        %v3454 = vld [vmem:[%s3442 + $0x58] sm:$0xff]
        %v3455 = vld [vmem:[%s3442 + $0x60] sm:$0xff]
        %v3456 = vld [vmem:[%s3442 + $0x68] sm:$0xff]
        %v3457 = vld [vmem:[%s3442 + $0x70] sm:$0xff]
        %v3458 = vld [vmem:[%s3442 + $0x78] sm:$0xff]
        %v3459 = vld [vmem:[%s3442 + $0x80] sm:$0xff]
        %v3460 = vld [vmem:[%s3442 + $0x88] sm:$0xff]
        %v3461 = vld [vmem:[%s3442 + $0x90] sm:$0xff]
        %v3462 = vld [vmem:[%s3442 + $0x98] sm:$0xff]
        %v3463 = vld [vmem:[%s3442 + $0xa0] sm:$0xff]
        %v3464 = vld [vmem:[%s3442 + $0xa8] sm:$0xff]
        %v3465 = vld [vmem:[%s3442 + $0xb0] sm:$0xff]
        %v3466 = vld [vmem:[%s3442 + $0xb8] sm:$0xff]
        %v3467 = vld [vmem:[%s3442 + $0xc0] sm:$0xff]
        %v3468 = vld [vmem:[%s3442 + $0xc8] sm:$0xff]
        %v3469 = vld [vmem:[%s3442 + $0xd0] sm:$0xff]
        %v3470 = vld [vmem:[%s3442 + $0xd8] sm:$0xff]
        %v3471 = vld [vmem:[%s3442 + $0xe0] sm:$0xff]
        %v3472 = vld [vmem:[%s3442 + $0xe8] sm:$0xff]
        %v3473 = vld [vmem:[%s3442 + $0xf0] sm:$0xff]
        %v3474 = vld [vmem:[%s3442 + $0xf8] sm:$0xff]
        %3475 = vmatprep.subr.mxu0 0.0
        %3476 = vmatpush1.msra.mxu0 %v3443
        %3477 = vmatprep.subr.mxu0 0.0
        %3478 = vmatpush1.msra.mxu0 %v3444
        %3479 = vmatprep.subr.mxu0 0.0
        %3480 = vmatpush1.msra.mxu0 %v3445
        %3481 = vmatprep.subr.mxu0 0.0
        %3482 = vmatpush1.msra.mxu0 %v3446
        %3483 = vmatprep.subr.mxu0 0.0
        %3484 = vmatpush1.msra.mxu0 %v3447
        %3485 = vmatprep.subr.mxu0 0.0
        %3486 = vmatpush1.msra.mxu0 %v3448
        %3487 = vmatprep.subr.mxu0 0.0
        %3488 = vmatpush1.msra.mxu0 %v3449
        %3489 = vmatprep.subr.mxu0 0.0
        %3490 = vmatpush1.msra.mxu0 %v3450
        %3491 = vmatprep.subr.mxu0 0.0
        %3492 = vmatpush1.msra.mxu0 %v3451
        %3493 = vmatprep.subr.mxu0 0.0
        %3494 = vmatpush1.msra.mxu0 %v3452
        %3495 = vmatprep.subr.mxu0 0.0
        %3496 = vmatpush1.msra.mxu0 %v3453
        %3497 = vmatprep.subr.mxu0 0.0
        %3498 = vmatpush1.msra.mxu0 %v3454
        %3499 = vmatprep.subr.mxu0 0.0
        %3500 = vmatpush1.msra.mxu0 %v3455
        %3501 = vmatprep.subr.mxu0 0.0
        %3502 = vmatpush1.msra.mxu0 %v3456
        %3503 = vmatprep.subr.mxu0 0.0
        %3504 = vmatpush1.msra.mxu0 %v3457
        %3505 = vmatprep.subr.mxu0 0.0
        %3506 = vmatpush1.msra.mxu0 %v3458
        %3507 = vmatprep.subr.mxu0 0.0
        %3508 = vmatpush1.msra.mxu0 %v3459
        %3509 = vmatprep.subr.mxu0 0.0
        %3510 = vmatpush1.msra.mxu0 %v3460
        %3511 = vmatprep.subr.mxu0 0.0
        %3512 = vmatpush1.msra.mxu0 %v3461
        %3513 = vmatprep.subr.mxu0 0.0
        %3514 = vmatpush1.msra.mxu0 %v3462
        %3515 = vmatprep.subr.mxu0 0.0
        %3516 = vmatpush1.msra.mxu0 %v3463
        %3517 = vmatprep.subr.mxu0 0.0
        %3518 = vmatpush1.msra.mxu0 %v3464
        %3519 = vmatprep.subr.mxu0 0.0
        %3520 = vmatpush1.msra.mxu0 %v3465
        %3521 = vmatprep.subr.mxu0 0.0
        %3522 = vmatpush1.msra.mxu0 %v3466
        %3523 = vmatprep.subr.mxu0 0.0
        %3524 = vmatpush1.msra.mxu0 %v3467
        %3525 = vmatprep.subr.mxu0 0.0
        %3526 = vmatpush1.msra.mxu0 %v3468
        %3527 = vmatprep.subr.mxu0 0.0
        %3528 = vmatpush1.msra.mxu0 %v3469
        %3529 = vmatprep.subr.mxu0 0.0
        %3530 = vmatpush1.msra.mxu0 %v3470
        %3531 = vmatprep.subr.mxu0 0.0
        %3532 = vmatpush1.msra.mxu0 %v3471
        %3533 = vmatprep.subr.mxu0 0.0
        %3534 = vmatpush1.msra.mxu0 %v3472
        %3535 = vmatprep.subr.mxu0 0.0
        %3536 = vmatpush1.msra.mxu0 %v3473
        %3537 = vmatprep.subr.mxu0 0.0
        %3538 = vmatpush1.msra.mxu0 %v3474
        %3539 = vmatprep.mubr.f32.mxu0 %v3383
        %3540 = vmatmul.mubr.f32.gmra.mrb[0].mxu0 %v3380
        %v3541 = vpop.f32.mrb[0].mxu0
        %v3542 = vadd.f32 0.0, %v3541
        %v3543 = vpop.f32.mrb[0].mxu0
        %3544 = vmatprep.mubr.f32.mxu0 %v3389
        %3545 = vmatmul.mubr.f32.gmra.mrb[0].mxu0 %v3386
        %v3546 = vpop.f32.mrb[0].mxu0
        %v3547 = vadd.f32 0.0, %v3546
        %v3548 = vpop.f32.mrb[0].mxu0
        %3549 = vmatprep.mubr.f32.mxu0 %v3395
        %3550 = vmatmul.mubr.f32.gmra.mrb[0].mxu0 %v3392
        %v3551 = vpop.f32.mrb[0].mxu0
        %v3552 = vadd.f32 0.0, %v3551
        %v3553 = vpop.f32.mrb[0].mxu0
        %3554 = vmatprep.mubr.f32.mxu0 %v3401
        %3555 = vmatmul.mubr.f32.gmra.mrb[0].mxu0 %v3398
        %v3556 = vpop.f32.mrb[0].mxu0
        %v3557 = vadd.f32 0.0, %v3556
        %v3558 = vpop.f32.mrb[0].mxu0
        %3559 = vmatprep.mubr.f32.mxu0 %v3407
        %3560 = vmatmul.mubr.f32.gmra.mrb[0].mxu0 %v3404
        %v3561 = vpop.f32.mrb[0].mxu0
        %v3562 = vadd.f32 0.0, %v3561
        %v3563 = vpop.f32.mrb[0].mxu0
        %3564 = vmatprep.mubr.f32.mxu0 %v3413
        %3565 = vmatmul.mubr.f32.gmra.mrb[0].mxu0 %v3410
        %v3566 = vpop.f32.mrb[0].mxu0
        %v3567 = vadd.f32 0.0, %v3566
        %v3568 = vpop.f32.mrb[0].mxu0
        %3569 = vmatprep.mubr.f32.mxu0 %v3419
        %3570 = vmatmul.mubr.f32.gmra.mrb[0].mxu0 %v3416
        %v3571 = vpop.f32.mrb[0].mxu0
        %v3572 = vadd.f32 0.0, %v3571
        %v3573 = vpop.f32.mrb[0].mxu0
        %3574 = vmatprep.mubr.f32.mxu0 %v3425
        %3575 = vmatmul.mubr.f32.gmra.mrb[0].mxu0 %v3422
        %v3576 = vpop.f32.mrb[0].mxu0
        %v3577 = vadd.f32 0.0, %v3576
        %v3578 = vpop.f32.mrb[0].mxu0
        %3579 = vdwg.mxu0
        %v3580 = vadd.f32 %v3306, %v3542
        %v3581 = vadd.f32 %v3307, %v3547
        %v3582 = vadd.f32 %v3308, %v3552
        %v3583 = vadd.f32 %v3309, %v3557
        %v3584 = vadd.f32 %v3310, %v3562
        %v3585 = vadd.f32 %v3311, %v3567
        %v3586 = vadd.f32 %v3312, %v3572
        %v3587 = vadd.f32 %v3313, %v3577
        %v3588 = vld [vmem:[%s4] sm:$0x1]
        %v3590 = vlaneseq
        %v3591 = vshrl.u32 %v3590, 7
        %v3592 = vsub.s32 0, %v3591
        %v3593 = vrot.slane %v3588, %v3592
        %v3595 = vadd.f32 %v3580, %v3593
        %v3596 = vadd.f32 %v3581, %v3593
        %v3597 = vadd.f32 %v3582, %v3593
        %v3598 = vadd.f32 %v3583, %v3593
        %v3599 = vadd.f32 %v3584, %v3593
        %v3600 = vadd.f32 %v3585, %v3593
        %v3601 = vadd.f32 %v3586, %v3593
        %v3602 = vadd.f32 %v3587, %v3593
        %vm3603 = vcmask 523264
        %3604 = vst.msk [vmem:[%s252] sm:$0xff] %vm3603, %v3595
        %3605 = vst.msk [vmem:[%s252 + $0x8] sm:$0xff] %vm3603, %v3596
        %3606 = vst.msk [vmem:[%s252 + $0x10] sm:$0xff] %vm3603, %v3597
        %3607 = vst.msk [vmem:[%s252 + $0x18] sm:$0xff] %vm3603, %v3598
        %3608 = vst.msk [vmem:[%s252 + $0x20] sm:$0xff] %vm3603, %v3599
        %3609 = vst.msk [vmem:[%s252 + $0x28] sm:$0xff] %vm3603, %v3600
        %3610 = vst.msk [vmem:[%s252 + $0x30] sm:$0xff] %vm3603, %v3601
        %3611 = vst.msk [vmem:[%s252 + $0x38] sm:$0xff] %vm3603, %v3602
        %p3612 = scmp.lt.s32.totalorder %s21, 1
        %s3613 = scalar_select %p3612, %s21, 1
        %s3614 = smul.addr %s3613, 16
        %s3615 = smul.addr %s3614, 8
        %s3616 = scalar_lea.vmem %s5, %s3615
        %s3617 = sand.u32 %s165, 1
        %s3618 = scalar_lea.sflag [#allocation5], %s3617
        %s3619 = sand.u32 %s165, 1
        %s3620 = smul.addr %s3619, 64
        %s3621 = scalar_lea.vmem [#allocation4], %s3620
        // Predicated region
        $region41: #{last_level_p6p7_forward.1} parent=39 // pred_check
          %p3622 = pneg %p149
        $region42: #{last_level_p6p7_forward.1} parent=39 // pred_check_branch
          %3624 = sbr.rel (%p3622) target = $region44
        $region43: #{last_level_p6p7_forward.1} parent=39 // pred_region
          _
        $region44: #{last_level_p6p7_forward.1} parent=39 // pred_fallthru
          _
        // Predicated region
        $region45: #{last_level_p6p7_forward.1} parent=39 // pred_check
          %p3625 = pneg %p175
        $region46: #{last_level_p6p7_forward.1} parent=39 // pred_check_branch
          %3627 = sbr.rel (%p3625) target = $region48
        $region47: #{last_level_p6p7_forward.1} parent=39 // pred_region
          %s3629 = ssub.s32 1024, 1024
          %3630 = vsyncadd %s3618, %s3629
          %s3631 = smul.addr %s21, 8
          %s3632 = smul.addr %s3631, 128
          %s3633 = scalar_lea.hbm %s6, %s3632
          %s3634 = sshll.u32 %s3621, 4
          %s3635 = int_to_ptr.vmem [resolvable:$true] %s3634
          %3640 = dma.vmem_to_hbm [thread:$0]  %s3635, 1024, %s3633, %s3618, 128, 128, 8
        $region48: #{last_level_p6p7_forward.1} parent=39 // pred_fallthru
          _
      $region40: #{last_level_p6p7_forward.1} parent=5 // pred_fallthru
        _
      %p3641 = scmp.le.s32.totalorder 2, %s16
      // Predicated region
      $region49: #{last_level_p6p7_forward.1} parent=5 // pred_check
        %p3642 = pneg %p3641
      $region50: #{last_level_p6p7_forward.1} parent=5 // pred_check_branch
        %3644 = sbr.rel (%p3642) target = $region52
      $region51: #{last_level_p6p7_forward.1} parent=5 // pred_region
        %s3645 = ssub.s32 %s16, 2
        // Predicated region
        $region53: #{last_level_p6p7_forward.1} parent=51 // pred_check
          %p3646 = pneg %p155
        $region54: #{last_level_p6p7_forward.1} parent=51 // pred_check_branch
          %3648 = sbr.rel (%p3646) target = $region56
        $region55: #{last_level_p6p7_forward.1} parent=51 // pred_region
          %p3649 = scmp.lt.s32.totalorder %s22, 1
          %s3650 = scalar_select %p3649, %s22, 1
          %s3651 = smul.addr %s3650, 16
          %s3652 = smul.addr %s3651, 8
          %s3653 = scalar_lea.vmem %s5, %s3652
        $region56: #{last_level_p6p7_forward.1} parent=51 // pred_fallthru
          _
        // Predicated region
        $region57: #{last_level_p6p7_forward.1} parent=51 // pred_check
          %p3654 = pneg %p181
        $region58: #{last_level_p6p7_forward.1} parent=51 // pred_check_branch
          %3656 = sbr.rel (%p3654) target = $region60
        $region59: #{last_level_p6p7_forward.1} parent=51 // pred_region
          %s3657 = sand.u32 %s166, 1
          %s3658 = scalar_lea.sflag [#allocation5], %s3657
          %s3659 = sand.u32 %s166, 1
          %s3660 = smul.addr %s3659, 64
          %s3661 = scalar_lea.vmem [#allocation4], %s3660
          %3662 = dma.done %s3658, 1024
        $region60: #{last_level_p6p7_forward.1} parent=51 // pred_fallthru
          _
      $region52: #{last_level_p6p7_forward.1} parent=5 // pred_fallthru
        _
    $region6: #{last_level_p6p7_forward.1} parent=1 // loop_footer
      %s20 = sadd.s32 1, %s16
    $region7: #{last_level_p6p7_forward.1} parent=1 // loop_footer_branch
      %15 = sbr.rel target = $region3
    $region8: #{last_level_p6p7_forward.1} parent=1 // loop_exit
      _
    %3663 = vsyncpa [#allocation5], 1
    %s3664 = scalar_lea.sflag [#allocation5], 1
    %3665 = vsyncpa %s3664, 1

</llo_original>
